<compile_context>
chip_gen: v5e
topology: v5e:2x2
jax: 0.10.0
libtpu: 0.0.40
codegen_flags: <defaults>
</compile_context>

<pallas_src>
import functools
import math

import jax
import jax.numpy as jnp
import numpy as np
from jax.experimental import pallas as pl
from jax.experimental.pallas import tpu as pltpu

_F32 = jnp.float32
_BF16 = jnp.bfloat16


def _layernorm(x, g, b, eps=1e-5):
    mu = jnp.mean(x, axis=-1, keepdims=True)
    var = jnp.mean((x - mu) ** 2, axis=-1, keepdims=True)
    return (x - mu) * jax.lax.rsqrt(var + eps) * g + b


def encoder_kernel(x_ref,
                   ln1g_ref, ln1b_ref,
                   wq_ref, bq_ref, wkv_ref, bkv_ref,
                   wo_ref, bo_ref,
                   ln2g_ref, ln2b_ref,
                   w1_ref, b1_ref, w2_ref, b2_ref,
                   o_ref,
                   xn_scr, kv_scr,
                   *, heads):
    qi = pl.program_id(1)
    S, E = x_ref.shape
    TQ = o_ref.shape[0]
    dh = E // heads
    scale = 1.0 / math.sqrt(dh)

    # ---- once per batch element: LN1 + fused, lane-dense K/V projection -----
    @pl.when(qi == 0)
    def _():
        xf = x_ref[...].astype(_F32)                                # (S, E)
        xn = _layernorm(xf, ln1g_ref[...], ln1b_ref[...])
        xnb = xn.astype(_BF16)
        xn_scr[...] = xnb                                           # LN1 cache
        kv = jnp.dot(xnb, wkv_ref[...],
                     preferred_element_type=_F32) + bkv_ref[...]    # (S, 2E)
        kv_scr[...] = kv.astype(_BF16)                              # K|V cache

    # ---- per Q tile ----------------------------------------------------------
    row0 = qi * TQ
    if TQ % 8 == 0:
        row0 = pl.multiple_of(row0, 8)
    xt = x_ref[pl.ds(row0, TQ), :].astype(_F32)                     # residual src
    xn_t = xn_scr[pl.ds(row0, TQ), :]                               # (TQ, E) bf16

    # Q projection: one lane-dense (TQ,E)@(E,E); fold 1/sqrt(dh) into q.
    q = jnp.dot(xn_t, wq_ref[...], preferred_element_type=_F32) + bq_ref[...]
    q = (q * scale).astype(_BF16)                                   # (TQ, E)

    # Per-head attention: 2-D MXU matmuls on static lane slices; only a single
    # (TQ, S) f32 score slab is needed per head, and softmax normalization is
    # applied AFTER the PV matmul (on (TQ, dh) instead of (TQ, S)).
    head_out = []
    for h in range(heads):
        lo = h * dh
        q_h = q[:, lo:lo + dh]                                      # (TQ, dh) bf16
        k_h = kv_scr[:, lo:lo + dh]                                 # (S, dh)  bf16
        v_h = kv_scr[:, E + lo:E + lo + dh]                         # (S, dh)  bf16
        s = jax.lax.dot_general(q_h, k_h, (((1,), (1,)), ((), ())),
                                preferred_element_type=_F32)        # q k^T (TQ, S)
        s = s - jnp.max(s, axis=-1, keepdims=True)
        p = jnp.exp(s)
        l = jnp.sum(p, axis=-1, keepdims=True)
        o_h = jnp.dot(p.astype(_BF16), v_h,
                      preferred_element_type=_F32)                  # (TQ, dh)
        o_h = o_h * pl.reciprocal(l, approx=True)                   # post-PV norm
        head_out.append(o_h.astype(_BF16))

    attn = jnp.concatenate(head_out, axis=-1)                       # (TQ, E) bf16
    # Output projection: single lane-dense K=E matmul (no per-head proj + sum).
    attn_out = jnp.dot(attn, wo_ref[...],
                       preferred_element_type=_F32) + bo_ref[...]
    x1 = attn_out + xt                                              # residual 1

    # ---- MLP block (pre-LN, Linear -> exact GELU -> Linear) -----------------
    xn2 = _layernorm(x1, ln2g_ref[...], ln2b_ref[...])
    h1 = jnp.dot(xn2.astype(_BF16), w1_ref[...],
                 preferred_element_type=_F32) + b1_ref[...]
    h1 = 0.5 * h1 * (1.0 + jax.lax.erf(h1 * (1.0 / math.sqrt(2.0))))  # exact GELU
    h2 = jnp.dot(h1.astype(_BF16), w2_ref[...],
                 preferred_element_type=_F32) + b2_ref[...]
    o_ref[...] = (h2 + x1).astype(o_ref.dtype)                      # residual 2
    # TODO(synk): attn_dropout / mlp_dropout are eval-mode identity here.


def _vmem_capacity_bytes():
    try:
        cap = getattr(pltpu.get_tpu_info(), "vmem_capacity_bytes", None)
        if cap:
            return int(cap)
    except Exception:
        pass
    return 64 * 1024 * 1024  # conservative (v7x-sized) default


def transformer_encoder(x, params, *, heads, q_tile=None,
                        single_buffer_weights=True):
    B, S, E = x.shape
    assert E % heads == 0
    HM = params["w1"].shape[-1]
    vmem_cap = _vmem_capacity_bytes()

    if q_tile is None:
        if S <= 256:
            q_tile = S
        else:
            # v7x (64 MiB VMEM) -> smaller Q tile; v5e/v6e (128 MiB) -> 256.
            q_tile = 128 if vmem_cap <= 96 * 1024 * 1024 else 256
    assert S % q_tile == 0
    assert q_tile == S or q_tile % 8 == 0, "q_tile must be a multiple of 8"
    nq = S // q_tile

    # Weight prep in plain JAX (outside the kernel): bf16 matmul weights, K/V
    # fused into one lane-dense (E, 2E) projection; biases / LN params stay f32.
    ordered = [
        params["ln1_g"].astype(_F32), params["ln1_b"].astype(_F32),
        params["wq"].astype(_BF16), params["bq"].astype(_F32),
        jnp.concatenate([params["wk"], params["wv"]], axis=1).astype(_BF16),
        jnp.concatenate([params["bk"], params["bv"]], axis=1).astype(_F32),
        params["wo"].astype(_BF16), params["bo"].astype(_F32),
        params["ln2_g"].astype(_F32), params["ln2_b"].astype(_F32),
        params["w1"].astype(_BF16), params["b1"].astype(_F32),
        params["w2"].astype(_BF16), params["b2"].astype(_F32),
    ]

    # VMEM budget: weights (<=2 pipeline buffers) + x/out blocks + bf16 scratch
    # + f32 intermediates, 2x headroom, capped at ~80% of physical VMEM.
    w_bytes = sum(int(np.prod(a.shape)) * a.dtype.itemsize for a in ordered)
    inter = 4 * (3 * S * E + q_tile * (4 * E + 2 * S + 2 * HM))
    est = 2 * w_bytes + 2 * 4 * (S * E + q_tile * E) + 2 * 3 * S * E + inter
    ceiling = max(32 * 1024 * 1024, int(vmem_cap * 0.8))
    vmem_limit = int(min(max(2 * est, 32 * 1024 * 1024), ceiling))

    kernel = functools.partial(encoder_kernel, heads=heads)

    def build(single_buf):
        def weight_spec(a):
            idx = lambda b, qi, _nd=a.ndim: (0,) * _nd
            if single_buf:
                # Grid-invariant: fetched once; single-buffer to halve residency.
                return pl.BlockSpec(a.shape, idx, pipeline_mode=pl.Buffered(1))
            return pl.BlockSpec(a.shape, idx)

        return pl.pallas_call(
            kernel,
            out_shape=jax.ShapeDtypeStruct((B, S, E), x.dtype),
            grid_spec=pltpu.PrefetchScalarGridSpec(
                num_scalar_prefetch=0,
                grid=(B, nq),
                in_specs=[pl.BlockSpec((pl.Squeezed(), S, E),
                                       lambda b, qi: (b, 0, 0))]
                         + [weight_spec(a) for a in ordered],
                out_specs=pl.BlockSpec((pl.Squeezed(), q_tile, E),
                                       lambda b, qi: (b, qi, 0)),
                scratch_shapes=[pltpu.VMEM((S, E), _BF16),        # LN1(x) cache
                                pltpu.VMEM((S, 2 * E), _BF16)],   # fused K|V cache
            ),
            compiler_params=pltpu.CompilerParams(
                # Batch axis parallel (shards across v7x's 2 TCs when B >= 2).
                # The qi axis MUST stay "arbitrary": LN1/KV caches are written
                # only at qi == 0 of each batch element.
                dimension_semantics=("parallel", "arbitrary"),
                vmem_limit_bytes=vmem_limit,
            ),
        )

    if single_buffer_weights:
        try:
            return build(True)(x, *ordered)
        except Exception:
            # pipeline_mode=pl.Buffered(1) not supported on this jax/libtpu;
            # fall back to default double-buffered specs (numerics identical).
            pass
    return build(False)(x, *ordered)


def _reference(x, p, *, heads):
    """Pure-JAX f32 reference mirroring the PyTorch forward (eval mode)."""
    def ln(v, g, b):
        mu = jnp.mean(v, -1, keepdims=True)
        var = jnp.mean((v - mu) ** 2, -1, keepdims=True)
        return (v - mu) / jnp.sqrt(var + 1e-5) * g + b

    B, S, E = x.shape
    dh = E // heads
    xn = ln(x, p["ln1_g"], p["ln1_b"])
    q = xn @ p["wq"] + p["bq"]
    k = xn @ p["wk"] + p["bk"]
    v = xn @ p["wv"] + p["bv"]
    q = q.reshape(B, S, heads, dh).transpose(0, 2, 1, 3)
    k = k.reshape(B, S, heads, dh).transpose(0, 2, 1, 3)
    v = v.reshape(B, S, heads, dh).transpose(0, 2, 1, 3)
    s = jnp.einsum("bhqd,bhkd->bhqk", q, k) / math.sqrt(dh)
    a = jax.nn.softmax(s, axis=-1)
    o = jnp.einsum("bhqk,bhkd->bhqd", a, v).transpose(0, 2, 1, 3).reshape(B, S, E)
    o = o @ p["wo"] + p["bo"]
    x1 = o + x
    xn2 = ln(x1, p["ln2_g"], p["ln2_b"])
    h = xn2 @ p["w1"] + p["b1"]
    h = jax.nn.gelu(h, approximate=False)
    h = h @ p["w2"] + p["b2"]
    return h + x1


if __name__ == "__main__":
    # Small shapes consistent with the module; S=16 with TQ=8 exercises the
    # q-tiling + cached-LN1/KV path (2 tiles per batch element).
    B, S, E, HEADS, HM = 2, 16, 32, 4, 64
    TQ = 8

    key = jax.random.PRNGKey(0)
    ks = jax.random.split(key, 12)
    f32 = jnp.float32

    x = jax.random.normal(ks[0], (B, S, E), dtype=f32)

    params = {
        "ln1_g": jnp.ones((1, E), f32),
        "ln1_b": jnp.zeros((1, E), f32),
        "wq": 0.05 * jax.random.normal(ks[1], (E, E), dtype=f32),
        "bq": 0.05 * jax.random.normal(ks[2], (1, E), dtype=f32),
        "wk": 0.05 * jax.random.normal(ks[3], (E, E), dtype=f32),
        "bk": 0.05 * jax.random.normal(ks[4], (1, E), dtype=f32),
        "wv": 0.05 * jax.random.normal(ks[5], (E, E), dtype=f32),
        "bv": 0.05 * jax.random.normal(ks[6], (1, E), dtype=f32),
        "wo": 0.05 * jax.random.normal(ks[7], (E, E), dtype=f32),
        "bo": 0.05 * jax.random.normal(ks[8], (1, E), dtype=f32),
        "ln2_g": jnp.ones((1, E), f32),
        "ln2_b": jnp.zeros((1, E), f32),
        "w1": 0.05 * jax.random.normal(ks[9], (E, HM), dtype=f32),
        "b1": 0.05 * jax.random.normal(ks[10], (1, HM), dtype=f32),
        "w2": 0.05 * jax.random.normal(ks[11], (HM, E), dtype=f32),
        "b2": jnp.zeros((1, E), f32),
    }

    out = transformer_encoder(x, params, heads=HEADS, q_tile=TQ)
    out = jax.block_until_ready(out)

    ref = jax.block_until_ready(_reference(x, params, heads=HEADS))
    # bf16 MXU matmuls + approx softmax reciprocal -> looser tolerance than the
    # pure-f32 path (well within 2e-2 at these value scales).
    np.testing.assert_allclose(np.asarray(out), np.asarray(ref),
                               rtol=2e-2, atol=2e-2)
    print("KERNEL_OK")
</pallas_src>

<mosaic_0001>
module attributes {stable_mosaic.version = 11 : i64} {
  func.func @encoder_kernel(%arg0: i32, %arg1: i32, %arg2: memref<1x16x32xf32, #tpu.memory_space<vmem>>, %arg3: memref<1x32xf32, #tpu.memory_space<vmem>>, %arg4: memref<1x32xf32, #tpu.memory_space<vmem>>, %arg5: memref<32x32xbf16, #tpu.memory_space<vmem>>, %arg6: memref<1x32xf32, #tpu.memory_space<vmem>>, %arg7: memref<32x64xbf16, #tpu.memory_space<vmem>>, %arg8: memref<1x64xf32, #tpu.memory_space<vmem>>, %arg9: memref<32x32xbf16, #tpu.memory_space<vmem>>, %arg10: memref<1x32xf32, #tpu.memory_space<vmem>>, %arg11: memref<1x32xf32, #tpu.memory_space<vmem>>, %arg12: memref<1x32xf32, #tpu.memory_space<vmem>>, %arg13: memref<32x64xbf16, #tpu.memory_space<vmem>>, %arg14: memref<1x64xf32, #tpu.memory_space<vmem>>, %arg15: memref<64x32xbf16, #tpu.memory_space<vmem>>, %arg16: memref<1x32xf32, #tpu.memory_space<vmem>>, %arg17: memref<1x8x32xf32, #tpu.memory_space<vmem>>, %arg18: memref<16x32xbf16, #tpu.memory_space<vmem>>, %arg19: memref<16x64xbf16, #tpu.memory_space<vmem>>) attributes {dimension_semantics = [#tpu.dimension_semantics<parallel>, #tpu.dimension_semantics<arbitrary>], iteration_bounds = array<i64: 2, 2>, scalar_prefetch = 0 : i64, scratch_operands = 2 : i64, tpu.core_type = #tpu.core_type<tc>, window_params = [{transform_indices = @transform_0, window_bounds = array<i64: 1, 16, 32>}, {pipeline_mode = #tpu.pipeline_mode<synchronous>, transform_indices = @transform_1, window_bounds = array<i64: 1, 32>}, {pipeline_mode = #tpu.pipeline_mode<synchronous>, transform_indices = @transform_2, window_bounds = array<i64: 1, 32>}, {pipeline_mode = #tpu.pipeline_mode<synchronous>, transform_indices = @transform_3, window_bounds = array<i64: 32, 32>}, {pipeline_mode = #tpu.pipeline_mode<synchronous>, transform_indices = @transform_4, window_bounds = array<i64: 1, 32>}, {pipeline_mode = #tpu.pipeline_mode<synchronous>, transform_indices = @transform_5, window_bounds = array<i64: 32, 64>}, {pipeline_mode = #tpu.pipeline_mode<synchronous>, transform_indices = @transform_6, window_bounds = array<i64: 1, 64>}, {pipeline_mode = #tpu.pipeline_mode<synchronous>, transform_indices = @transform_7, window_bounds = array<i64: 32, 32>}, {pipeline_mode = #tpu.pipeline_mode<synchronous>, transform_indices = @transform_8, window_bounds = array<i64: 1, 32>}, {pipeline_mode = #tpu.pipeline_mode<synchronous>, transform_indices = @transform_9, window_bounds = array<i64: 1, 32>}, {pipeline_mode = #tpu.pipeline_mode<synchronous>, transform_indices = @transform_10, window_bounds = array<i64: 1, 32>}, {pipeline_mode = #tpu.pipeline_mode<synchronous>, transform_indices = @transform_11, window_bounds = array<i64: 32, 64>}, {pipeline_mode = #tpu.pipeline_mode<synchronous>, transform_indices = @transform_12, window_bounds = array<i64: 1, 64>}, {pipeline_mode = #tpu.pipeline_mode<synchronous>, transform_indices = @transform_13, window_bounds = array<i64: 64, 32>}, {pipeline_mode = #tpu.pipeline_mode<synchronous>, transform_indices = @transform_14, window_bounds = array<i64: 1, 32>}, {transform_indices = @transform_15, window_bounds = array<i64: 1, 8, 32>}]} {
    %c0_i32 = arith.constant 0 : i32
    %0 = arith.cmpi eq, %arg1, %c0_i32 : i32
    %1 = arith.extui %0 : i1 to i32
    %c0_i32_0 = arith.constant 0 : i32
    %2 = arith.cmpi ne, %1, %c0_i32_0 : i32
    scf.if %2 {
      %c0_63 = arith.constant 0 : index
      %c0_64 = arith.constant 0 : index
      %c0_65 = arith.constant 0 : index
      %141 = vector.load %arg2[%c0_63, %c0_64, %c0_65] : memref<1x16x32xf32, #tpu.memory_space<vmem>>, vector<1x16x32xf32>
      %142 = vector.shape_cast %141 : vector<1x16x32xf32> to vector<16x32xf32>
      %c0_66 = arith.constant 0 : index
      %c0_67 = arith.constant 0 : index
      %143 = vector.load %arg3[%c0_66, %c0_67] : memref<1x32xf32, #tpu.memory_space<vmem>>, vector<1x32xf32>
      %c0_68 = arith.constant 0 : index
      %c0_69 = arith.constant 0 : index
      %144 = vector.load %arg4[%c0_68, %c0_69] : memref<1x32xf32, #tpu.memory_space<vmem>>, vector<1x32xf32>
      %cst_70 = arith.constant dense<0.000000e+00> : vector<16xf32>
      %145 = vector.multi_reduction <add>, %142, %cst_70 [1] : vector<16x32xf32> to vector<16xf32>
      %146 = vector.shape_cast %145 : vector<16xf32> to vector<16x1xf32>
      %cst_71 = arith.constant 3.200000e+01 : f32
      %147 = vector.broadcast %cst_71 : f32 to vector<16x1xf32>
      %148 = arith.divf %146, %147 : vector<16x1xf32>
      %149 = vector.broadcast %148 : vector<16x1xf32> to vector<16x32xf32>
      %150 = arith.subf %142, %149 : vector<16x32xf32>
      %151 = arith.mulf %150, %150 : vector<16x32xf32>
      %cst_72 = arith.constant dense<0.000000e+00> : vector<16xf32>
      %152 = vector.multi_reduction <add>, %151, %cst_72 [1] : vector<16x32xf32> to vector<16xf32>
      %153 = vector.shape_cast %152 : vector<16xf32> to vector<16x1xf32>
      %cst_73 = arith.constant 3.200000e+01 : f32
      %154 = vector.broadcast %cst_73 : f32 to vector<16x1xf32>
      %155 = arith.divf %153, %154 : vector<16x1xf32>
      %156 = vector.broadcast %148 : vector<16x1xf32> to vector<16x32xf32>
      %157 = arith.subf %142, %156 : vector<16x32xf32>
      %cst_74 = arith.constant 9.99999974E-6 : f32
      %158 = vector.broadcast %cst_74 : f32 to vector<16x1xf32>
      %159 = arith.addf %155, %158 : vector<16x1xf32>
      %160 = math.rsqrt %159 : vector<16x1xf32>
      %161 = vector.broadcast %160 : vector<16x1xf32> to vector<16x32xf32>
      %162 = arith.mulf %157, %161 : vector<16x32xf32>
      %163 = vector.broadcast %143 : vector<1x32xf32> to vector<16x32xf32>
      %164 = arith.mulf %162, %163 : vector<16x32xf32>
      %165 = vector.broadcast %144 : vector<1x32xf32> to vector<16x32xf32>
      %166 = arith.addf %164, %165 : vector<16x32xf32>
      %167 = arith.truncf %166 : vector<16x32xf32> to vector<16x32xbf16>
      %c0_75 = arith.constant 0 : index
      %c0_76 = arith.constant 0 : index
      %168 = vector.load %arg18[%c0_75, %c0_76] : memref<16x32xbf16, #tpu.memory_space<vmem>>, vector<16x32xbf16>
      tpu.vector_store %arg18[%c0_75, %c0_76], %167 {strides = array<i32>} : memref<16x32xbf16, #tpu.memory_space<vmem>>, vector<16x32xbf16>,
      %c0_77 = arith.constant 0 : index
      %c0_78 = arith.constant 0 : index
      %169 = vector.load %arg7[%c0_77, %c0_78] : memref<32x64xbf16, #tpu.memory_space<vmem>>, vector<32x64xbf16>
      %cst_79 = arith.constant dense<0.000000e+00> : vector<16x64xf32>
      %170 = tpu.matmul %167, %169, %cst_79 {dimension_numbers = #tpu.dot_dimension_numbers<[1], [0], [0], [1], [0, 0, 1, 1], [], []>} : vector<16x32xbf16>, vector<32x64xbf16>, vector<16x64xf32> -> vector<16x64xf32>
      %c0_80 = arith.constant 0 : index
      %c0_81 = arith.constant 0 : index
      %171 = vector.load %arg8[%c0_80, %c0_81] : memref<1x64xf32, #tpu.memory_space<vmem>>, vector<1x64xf32>
      %172 = vector.broadcast %171 : vector<1x64xf32> to vector<16x64xf32>
      %173 = arith.addf %170, %172 : vector<16x64xf32>
      %174 = arith.truncf %173 : vector<16x64xf32> to vector<16x64xbf16>
      %c0_82 = arith.constant 0 : index
      %c0_83 = arith.constant 0 : index
      %175 = vector.load %arg19[%c0_82, %c0_83] : memref<16x64xbf16, #tpu.memory_space<vmem>>, vector<16x64xbf16>
      tpu.vector_store %arg19[%c0_82, %c0_83], %174 {strides = array<i32>} : memref<16x64xbf16, #tpu.memory_space<vmem>>, vector<16x64xbf16>,
    } else {
    }
    %c8_i32 = arith.constant 8 : i32
    %3 = arith.muli %arg1, %c8_i32 : i32
    %4 = tpu.assume_multiple %3, 8 : i32
    %c0 = arith.constant 0 : index
    %5 = arith.index_cast %4 : i32 to index
    %c0_1 = arith.constant 0 : index
    %6 = vector.load %arg2[%c0, %5, %c0_1] : memref<1x16x32xf32, #tpu.memory_space<vmem>>, vector<1x8x32xf32>
    %7 = vector.shape_cast %6 : vector<1x8x32xf32> to vector<8x32xf32>
    %8 = arith.index_cast %4 : i32 to index
    %c0_2 = arith.constant 0 : index
    %9 = vector.load %arg18[%8, %c0_2] : memref<16x32xbf16, #tpu.memory_space<vmem>>, vector<8x32xbf16>
    %c0_3 = arith.constant 0 : index
    %c0_4 = arith.constant 0 : index
    %10 = vector.load %arg5[%c0_3, %c0_4] : memref<32x32xbf16, #tpu.memory_space<vmem>>, vector<32x32xbf16>
    %cst = arith.constant dense<0.000000e+00> : vector<8x32xf32>
    %11 = tpu.matmul %9, %10, %cst {dimension_numbers = #tpu.dot_dimension_numbers<[1], [0], [0], [1], [0, 0, 1, 1], [], []>} : vector<8x32xbf16>, vector<32x32xbf16>, vector<8x32xf32> -> vector<8x32xf32>
    %c0_5 = arith.constant 0 : index
    %c0_6 = arith.constant 0 : index
    %12 = vector.load %arg6[%c0_5, %c0_6] : memref<1x32xf32, #tpu.memory_space<vmem>>, vector<1x32xf32>
    %13 = vector.broadcast %12 : vector<1x32xf32> to vector<8x32xf32>
    %14 = arith.addf %11, %13 : vector<8x32xf32>
    %cst_7 = arith.constant 0.353553385 : f32
    %15 = vector.broadcast %cst_7 : f32 to vector<8x32xf32>
    %16 = arith.mulf %14, %15 : vector<8x32xf32>
    %17 = arith.truncf %16 : vector<8x32xf32> to vector<8x32xbf16>
    %18 = vector.extract_strided_slice %17 {offsets = [0, 0], sizes = [8, 8], strides = [1, 1]} : vector<8x32xbf16> to vector<8x8xbf16>
    %c0_8 = arith.constant 0 : index
    %c0_9 = arith.constant 0 : index
    %19 = vector.load %arg19[%c0_8, %c0_9] : memref<16x64xbf16, #tpu.memory_space<vmem>>, vector<16x8xbf16>
    %c0_10 = arith.constant 0 : index
    %c32 = arith.constant 32 : index
    %20 = vector.load %arg19[%c0_10, %c32] : memref<16x64xbf16, #tpu.memory_space<vmem>>, vector<16x8xbf16>
    %cst_11 = arith.constant dense<0.000000e+00> : vector<8x16xf32>
    %21 = tpu.matmul %18, %19, %cst_11 {dimension_numbers = #tpu.dot_dimension_numbers<[1], [1], [0], [0], [0, 0, 1, 0], [], []>} : vector<8x8xbf16>, vector<16x8xbf16>, vector<8x16xf32> -> vector<8x16xf32>
    %cst_12 = arith.constant dense<0xFF800000> : vector<8xf32>
    %22 = vector.multi_reduction <maximumf>, %21, %cst_12 [1] : vector<8x16xf32> to vector<8xf32>
    %23 = vector.shape_cast %22 : vector<8xf32> to vector<8x1xf32>
    %24 = vector.broadcast %23 : vector<8x1xf32> to vector<8x16xf32>
    %25 = arith.subf %21, %24 : vector<8x16xf32>
    %26 = math.exp %25 : vector<8x16xf32>
    %cst_13 = arith.constant dense<0.000000e+00> : vector<8xf32>
    %27 = vector.multi_reduction <add>, %26, %cst_13 [1] : vector<8x16xf32> to vector<8xf32>
    %28 = vector.shape_cast %27 : vector<8xf32> to vector<8x1xf32>
    %29 = arith.truncf %26 : vector<8x16xf32> to vector<8x16xbf16>
    %cst_14 = arith.constant dense<0.000000e+00> : vector<8x8xf32>
    %30 = tpu.matmul %29, %20, %cst_14 {dimension_numbers = #tpu.dot_dimension_numbers<[1], [0], [0], [1], [0, 0, 1, 1], [], []>} : vector<8x16xbf16>, vector<16x8xbf16>, vector<8x8xf32> -> vector<8x8xf32>
    %31 = tpu.reciprocal %28 {approx = true} : vector<8x1xf32> -> vector<8x1xf32>
    %32 = vector.broadcast %31 : vector<8x1xf32> to vector<8x8xf32>
    %33 = arith.mulf %30, %32 : vector<8x8xf32>
    %34 = arith.truncf %33 : vector<8x8xf32> to vector<8x8xbf16>
    %35 = vector.extract_strided_slice %17 {offsets = [0, 8], sizes = [8, 8], strides = [1, 1]} : vector<8x32xbf16> to vector<8x8xbf16>
    %c0_15 = arith.constant 0 : index
    %c8 = arith.constant 8 : index
    %36 = vector.load %arg19[%c0_15, %c8] : memref<16x64xbf16, #tpu.memory_space<vmem>>, vector<16x8xbf16>
    %c0_16 = arith.constant 0 : index
    %c40 = arith.constant 40 : index
    %37 = vector.load %arg19[%c0_16, %c40] : memref<16x64xbf16, #tpu.memory_space<vmem>>, vector<16x8xbf16>
    %cst_17 = arith.constant dense<0.000000e+00> : vector<8x16xf32>
    %38 = tpu.matmul %35, %36, %cst_17 {dimension_numbers = #tpu.dot_dimension_numbers<[1], [1], [0], [0], [0, 0, 1, 0], [], []>} : vector<8x8xbf16>, vector<16x8xbf16>, vector<8x16xf32> -> vector<8x16xf32>
    %cst_18 = arith.constant dense<0xFF800000> : vector<8xf32>
    %39 = vector.multi_reduction <maximumf>, %38, %cst_18 [1] : vector<8x16xf32> to vector<8xf32>
    %40 = vector.shape_cast %39 : vector<8xf32> to vector<8x1xf32>
    %41 = vector.broadcast %40 : vector<8x1xf32> to vector<8x16xf32>
    %42 = arith.subf %38, %41 : vector<8x16xf32>
    %43 = math.exp %42 : vector<8x16xf32>
    %cst_19 = arith.constant dense<0.000000e+00> : vector<8xf32>
    %44 = vector.multi_reduction <add>, %43, %cst_19 [1] : vector<8x16xf32> to vector<8xf32>
    %45 = vector.shape_cast %44 : vector<8xf32> to vector<8x1xf32>
    %46 = arith.truncf %43 : vector<8x16xf32> to vector<8x16xbf16>
    %cst_20 = arith.constant dense<0.000000e+00> : vector<8x8xf32>
    %47 = tpu.matmul %46, %37, %cst_20 {dimension_numbers = #tpu.dot_dimension_numbers<[1], [0], [0], [1], [0, 0, 1, 1], [], []>} : vector<8x16xbf16>, vector<16x8xbf16>, vector<8x8xf32> -> vector<8x8xf32>
    %48 = tpu.reciprocal %45 {approx = true} : vector<8x1xf32> -> vector<8x1xf32>
    %49 = vector.broadcast %48 : vector<8x1xf32> to vector<8x8xf32>
    %50 = arith.mulf %47, %49 : vector<8x8xf32>
    %51 = arith.truncf %50 : vector<8x8xf32> to vector<8x8xbf16>
    %52 = vector.extract_strided_slice %17 {offsets = [0, 16], sizes = [8, 8], strides = [1, 1]} : vector<8x32xbf16> to vector<8x8xbf16>
    %c0_21 = arith.constant 0 : index
    %c16 = arith.constant 16 : index
    %53 = vector.load %arg19[%c0_21, %c16] : memref<16x64xbf16, #tpu.memory_space<vmem>>, vector<16x8xbf16>
    %c0_22 = arith.constant 0 : index
    %c48 = arith.constant 48 : index
    %54 = vector.load %arg19[%c0_22, %c48] : memref<16x64xbf16, #tpu.memory_space<vmem>>, vector<16x8xbf16>
    %cst_23 = arith.constant dense<0.000000e+00> : vector<8x16xf32>
    %55 = tpu.matmul %52, %53, %cst_23 {dimension_numbers = #tpu.dot_dimension_numbers<[1], [1], [0], [0], [0, 0, 1, 0], [], []>} : vector<8x8xbf16>, vector<16x8xbf16>, vector<8x16xf32> -> vector<8x16xf32>
    %cst_24 = arith.constant dense<0xFF800000> : vector<8xf32>
    %56 = vector.multi_reduction <maximumf>, %55, %cst_24 [1] : vector<8x16xf32> to vector<8xf32>
    %57 = vector.shape_cast %56 : vector<8xf32> to vector<8x1xf32>
    %58 = vector.broadcast %57 : vector<8x1xf32> to vector<8x16xf32>
    %59 = arith.subf %55, %58 : vector<8x16xf32>
    %60 = math.exp %59 : vector<8x16xf32>
    %cst_25 = arith.constant dense<0.000000e+00> : vector<8xf32>
    %61 = vector.multi_reduction <add>, %60, %cst_25 [1] : vector<8x16xf32> to vector<8xf32>
    %62 = vector.shape_cast %61 : vector<8xf32> to vector<8x1xf32>
    %63 = arith.truncf %60 : vector<8x16xf32> to vector<8x16xbf16>
    %cst_26 = arith.constant dense<0.000000e+00> : vector<8x8xf32>
    %64 = tpu.matmul %63, %54, %cst_26 {dimension_numbers = #tpu.dot_dimension_numbers<[1], [0], [0], [1], [0, 0, 1, 1], [], []>} : vector<8x16xbf16>, vector<16x8xbf16>, vector<8x8xf32> -> vector<8x8xf32>
    %65 = tpu.reciprocal %62 {approx = true} : vector<8x1xf32> -> vector<8x1xf32>
    %66 = vector.broadcast %65 : vector<8x1xf32> to vector<8x8xf32>
    %67 = arith.mulf %64, %66 : vector<8x8xf32>
    %68 = arith.truncf %67 : vector<8x8xf32> to vector<8x8xbf16>
    %69 = vector.extract_strided_slice %17 {offsets = [0, 24], sizes = [8, 8], strides = [1, 1]} : vector<8x32xbf16> to vector<8x8xbf16>
    %c0_27 = arith.constant 0 : index
    %c24 = arith.constant 24 : index
    %70 = vector.load %arg19[%c0_27, %c24] : memref<16x64xbf16, #tpu.memory_space<vmem>>, vector<16x8xbf16>
    %c0_28 = arith.constant 0 : index
    %c56 = arith.constant 56 : index
    %71 = vector.load %arg19[%c0_28, %c56] : memref<16x64xbf16, #tpu.memory_space<vmem>>, vector<16x8xbf16>
    %cst_29 = arith.constant dense<0.000000e+00> : vector<8x16xf32>
    %72 = tpu.matmul %69, %70, %cst_29 {dimension_numbers = #tpu.dot_dimension_numbers<[1], [1], [0], [0], [0, 0, 1, 0], [], []>} : vector<8x8xbf16>, vector<16x8xbf16>, vector<8x16xf32> -> vector<8x16xf32>
    %cst_30 = arith.constant dense<0xFF800000> : vector<8xf32>
    %73 = vector.multi_reduction <maximumf>, %72, %cst_30 [1] : vector<8x16xf32> to vector<8xf32>
    %74 = vector.shape_cast %73 : vector<8xf32> to vector<8x1xf32>
    %75 = vector.broadcast %74 : vector<8x1xf32> to vector<8x16xf32>
    %76 = arith.subf %72, %75 : vector<8x16xf32>
    %77 = math.exp %76 : vector<8x16xf32>
    %cst_31 = arith.constant dense<0.000000e+00> : vector<8xf32>
    %78 = vector.multi_reduction <add>, %77, %cst_31 [1] : vector<8x16xf32> to vector<8xf32>
    %79 = vector.shape_cast %78 : vector<8xf32> to vector<8x1xf32>
    %80 = arith.truncf %77 : vector<8x16xf32> to vector<8x16xbf16>
    %cst_32 = arith.constant dense<0.000000e+00> : vector<8x8xf32>
    %81 = tpu.matmul %80, %71, %cst_32 {dimension_numbers = #tpu.dot_dimension_numbers<[1], [0], [0], [1], [0, 0, 1, 1], [], []>} : vector<8x16xbf16>, vector<16x8xbf16>, vector<8x8xf32> -> vector<8x8xf32>
    %82 = tpu.reciprocal %79 {approx = true} : vector<8x1xf32> -> vector<8x1xf32>
    %83 = vector.broadcast %82 : vector<8x1xf32> to vector<8x8xf32>
    %84 = arith.mulf %81, %83 : vector<8x8xf32>
    %85 = arith.truncf %84 : vector<8x8xf32> to vector<8x8xbf16>
    %86 = tpu.concatenate %34, %51, %68, %85 in 1 : vector<8x8xbf16>, vector<8x8xbf16>, vector<8x8xbf16>, vector<8x8xbf16> -> vector<8x32xbf16>
    %c0_33 = arith.constant 0 : index
    %c0_34 = arith.constant 0 : index
    %87 = vector.load %arg9[%c0_33, %c0_34] : memref<32x32xbf16, #tpu.memory_space<vmem>>, vector<32x32xbf16>
    %cst_35 = arith.constant dense<0.000000e+00> : vector<8x32xf32>
    %88 = tpu.matmul %86, %87, %cst_35 {dimension_numbers = #tpu.dot_dimension_numbers<[1], [0], [0], [1], [0, 0, 1, 1], [], []>} : vector<8x32xbf16>, vector<32x32xbf16>, vector<8x32xf32> -> vector<8x32xf32>
    %c0_36 = arith.constant 0 : index
    %c0_37 = arith.constant 0 : index
    %89 = vector.load %arg10[%c0_36, %c0_37] : memref<1x32xf32, #tpu.memory_space<vmem>>, vector<1x32xf32>
    %90 = vector.broadcast %89 : vector<1x32xf32> to vector<8x32xf32>
    %91 = arith.addf %88, %90 : vector<8x32xf32>
    %92 = arith.addf %91, %7 : vector<8x32xf32>
    %c0_38 = arith.constant 0 : index
    %c0_39 = arith.constant 0 : index
    %93 = vector.load %arg11[%c0_38, %c0_39] : memref<1x32xf32, #tpu.memory_space<vmem>>, vector<1x32xf32>
    %c0_40 = arith.constant 0 : index
    %c0_41 = arith.constant 0 : index
    %94 = vector.load %arg12[%c0_40, %c0_41] : memref<1x32xf32, #tpu.memory_space<vmem>>, vector<1x32xf32>
    %cst_42 = arith.constant dense<0.000000e+00> : vector<8xf32>
    %95 = vector.multi_reduction <add>, %92, %cst_42 [1] : vector<8x32xf32> to vector<8xf32>
    %96 = vector.shape_cast %95 : vector<8xf32> to vector<8x1xf32>
    %cst_43 = arith.constant 3.200000e+01 : f32
    %97 = vector.broadcast %cst_43 : f32 to vector<8x1xf32>
    %98 = arith.divf %96, %97 : vector<8x1xf32>
    %99 = vector.broadcast %98 : vector<8x1xf32> to vector<8x32xf32>
    %100 = arith.subf %92, %99 : vector<8x32xf32>
    %101 = arith.mulf %100, %100 : vector<8x32xf32>
    %cst_44 = arith.constant dense<0.000000e+00> : vector<8xf32>
    %102 = vector.multi_reduction <add>, %101, %cst_44 [1] : vector<8x32xf32> to vector<8xf32>
    %103 = vector.shape_cast %102 : vector<8xf32> to vector<8x1xf32>
    %cst_45 = arith.constant 3.200000e+01 : f32
    %104 = vector.broadcast %cst_45 : f32 to vector<8x1xf32>
    %105 = arith.divf %103, %104 : vector<8x1xf32>
    %106 = vector.broadcast %98 : vector<8x1xf32> to vector<8x32xf32>
    %107 = arith.subf %92, %106 : vector<8x32xf32>
    %cst_46 = arith.constant 9.99999974E-6 : f32
    %108 = vector.broadcast %cst_46 : f32 to vector<8x1xf32>
    %109 = arith.addf %105, %108 : vector<8x1xf32>
    %110 = math.rsqrt %109 : vector<8x1xf32>
    %111 = vector.broadcast %110 : vector<8x1xf32> to vector<8x32xf32>
    %112 = arith.mulf %107, %111 : vector<8x32xf32>
    %113 = vector.broadcast %93 : vector<1x32xf32> to vector<8x32xf32>
    %114 = arith.mulf %112, %113 : vector<8x32xf32>
    %115 = vector.broadcast %94 : vector<1x32xf32> to vector<8x32xf32>
    %116 = arith.addf %114, %115 : vector<8x32xf32>
    %117 = arith.truncf %116 : vector<8x32xf32> to vector<8x32xbf16>
    %c0_47 = arith.constant 0 : index
    %c0_48 = arith.constant 0 : index
    %118 = vector.load %arg13[%c0_47, %c0_48] : memref<32x64xbf16, #tpu.memory_space<vmem>>, vector<32x64xbf16>
    %cst_49 = arith.constant dense<0.000000e+00> : vector<8x64xf32>
    %119 = tpu.matmul %117, %118, %cst_49 {dimension_numbers = #tpu.dot_dimension_numbers<[1], [0], [0], [1], [0, 0, 1, 1], [], []>} : vector<8x32xbf16>, vector<32x64xbf16>, vector<8x64xf32> -> vector<8x64xf32>
    %c0_50 = arith.constant 0 : index
    %c0_51 = arith.constant 0 : index
    %120 = vector.load %arg14[%c0_50, %c0_51] : memref<1x64xf32, #tpu.memory_space<vmem>>, vector<1x64xf32>
    %121 = vector.broadcast %120 : vector<1x64xf32> to vector<8x64xf32>
    %122 = arith.addf %119, %121 : vector<8x64xf32>
    %cst_52 = arith.constant 5.000000e-01 : f32
    %123 = vector.broadcast %cst_52 : f32 to vector<8x64xf32>
    %124 = arith.mulf %123, %122 : vector<8x64xf32>
    %cst_53 = arith.constant 0.707106769 : f32
    %125 = vector.broadcast %cst_53 : f32 to vector<8x64xf32>
    %126 = arith.mulf %122, %125 : vector<8x64xf32>
    %127 = math.erf %126 : vector<8x64xf32>
    %cst_54 = arith.constant 1.000000e+00 : f32
    %128 = vector.broadcast %cst_54 : f32 to vector<8x64xf32>
    %129 = arith.addf %128, %127 : vector<8x64xf32>
    %130 = arith.mulf %124, %129 : vector<8x64xf32>
    %131 = arith.truncf %130 : vector<8x64xf32> to vector<8x64xbf16>
    %c0_55 = arith.constant 0 : index
    %c0_56 = arith.constant 0 : index
    %132 = vector.load %arg15[%c0_55, %c0_56] : memref<64x32xbf16, #tpu.memory_space<vmem>>, vector<64x32xbf16>
    %cst_57 = arith.constant dense<0.000000e+00> : vector<8x32xf32>
    %133 = tpu.matmul %131, %132, %cst_57 {dimension_numbers = #tpu.dot_dimension_numbers<[1], [0], [0], [1], [0, 0, 1, 1], [], []>} : vector<8x64xbf16>, vector<64x32xbf16>, vector<8x32xf32> -> vector<8x32xf32>
    %c0_58 = arith.constant 0 : index
    %c0_59 = arith.constant 0 : index
    %134 = vector.load %arg16[%c0_58, %c0_59] : memref<1x32xf32, #tpu.memory_space<vmem>>, vector<1x32xf32>
    %135 = vector.broadcast %134 : vector<1x32xf32> to vector<8x32xf32>
    %136 = arith.addf %133, %135 : vector<8x32xf32>
    %137 = arith.addf %136, %92 : vector<8x32xf32>
    %c0_60 = arith.constant 0 : index
    %c0_61 = arith.constant 0 : index
    %c0_62 = arith.constant 0 : index
    %138 = vector.load %arg17[%c0_60, %c0_61, %c0_62] : memref<1x8x32xf32, #tpu.memory_space<vmem>>, vector<1x8x32xf32>
    %139 = vector.shape_cast %138 : vector<1x8x32xf32> to vector<8x32xf32>
    %140 = vector.shape_cast %137 : vector<8x32xf32> to vector<1x8x32xf32>
    tpu.vector_store %arg17[%c0_60, %c0_61, %c0_62], %140 {strides = array<i32>} : memref<1x8x32xf32, #tpu.memory_space<vmem>>, vector<1x8x32xf32>,
    return
  }
  func.func @transform_0(%arg0: i32, %arg1: i32) -> (i32, i32, i32) {
    %c0_i32 = arith.constant 0 : i32
    %c0_i32_0 = arith.constant 0 : i32
    %c0_i32_1 = arith.constant 0 : i32
    return %arg0, %c0_i32, %c0_i32_0 : i32, i32, i32
  }
  func.func @transform_1(%arg0: i32, %arg1: i32) -> (i32, i32) {
    %c0_i32 = arith.constant 0 : i32
    %c0_i32_0 = arith.constant 0 : i32
    %c0_i32_1 = arith.constant 0 : i32
    return %c0_i32, %c0_i32_0 : i32, i32
  }
  func.func @transform_2(%arg0: i32, %arg1: i32) -> (i32, i32) {
    %c0_i32 = arith.constant 0 : i32
    %c0_i32_0 = arith.constant 0 : i32
    %c0_i32_1 = arith.constant 0 : i32
    return %c0_i32, %c0_i32_0 : i32, i32
  }
  func.func @transform_3(%arg0: i32, %arg1: i32) -> (i32, i32) {
    %c0_i32 = arith.constant 0 : i32
    %c0_i32_0 = arith.constant 0 : i32
    %c0_i32_1 = arith.constant 0 : i32
    return %c0_i32, %c0_i32_0 : i32, i32
  }
  func.func @transform_4(%arg0: i32, %arg1: i32) -> (i32, i32) {
    %c0_i32 = arith.constant 0 : i32
    %c0_i32_0 = arith.constant 0 : i32
    %c0_i32_1 = arith.constant 0 : i32
    return %c0_i32, %c0_i32_0 : i32, i32
  }
  func.func @transform_5(%arg0: i32, %arg1: i32) -> (i32, i32) {
    %c0_i32 = arith.constant 0 : i32
    %c0_i32_0 = arith.constant 0 : i32
    %c0_i32_1 = arith.constant 0 : i32
    return %c0_i32, %c0_i32_0 : i32, i32
  }
  func.func @transform_6(%arg0: i32, %arg1: i32) -> (i32, i32) {
    %c0_i32 = arith.constant 0 : i32
    %c0_i32_0 = arith.constant 0 : i32
    %c0_i32_1 = arith.constant 0 : i32
    return %c0_i32, %c0_i32_0 : i32, i32
  }
  func.func @transform_7(%arg0: i32, %arg1: i32) -> (i32, i32) {
    %c0_i32 = arith.constant 0 : i32
    %c0_i32_0 = arith.constant 0 : i32
    %c0_i32_1 = arith.constant 0 : i32
    return %c0_i32, %c0_i32_0 : i32, i32
  }
  func.func @transform_8(%arg0: i32, %arg1: i32) -> (i32, i32) {
    %c0_i32 = arith.constant 0 : i32
    %c0_i32_0 = arith.constant 0 : i32
    %c0_i32_1 = arith.constant 0 : i32
    return %c0_i32, %c0_i32_0 : i32, i32
  }
  func.func @transform_9(%arg0: i32, %arg1: i32) -> (i32, i32) {
    %c0_i32 = arith.constant 0 : i32
    %c0_i32_0 = arith.constant 0 : i32
    %c0_i32_1 = arith.constant 0 : i32
    return %c0_i32, %c0_i32_0 : i32, i32
  }
  func.func @transform_10(%arg0: i32, %arg1: i32) -> (i32, i32) {
    %c0_i32 = arith.constant 0 : i32
    %c0_i32_0 = arith.constant 0 : i32
    %c0_i32_1 = arith.constant 0 : i32
    return %c0_i32, %c0_i32_0 : i32, i32
  }
  func.func @transform_11(%arg0: i32, %arg1: i32) -> (i32, i32) {
    %c0_i32 = arith.constant 0 : i32
    %c0_i32_0 = arith.constant 0 : i32
    %c0_i32_1 = arith.constant 0 : i32
    return %c0_i32, %c0_i32_0 : i32, i32
  }
  func.func @transform_12(%arg0: i32, %arg1: i32) -> (i32, i32) {
    %c0_i32 = arith.constant 0 : i32
    %c0_i32_0 = arith.constant 0 : i32
    %c0_i32_1 = arith.constant 0 : i32
    return %c0_i32, %c0_i32_0 : i32, i32
  }
  func.func @transform_13(%arg0: i32, %arg1: i32) -> (i32, i32) {
    %c0_i32 = arith.constant 0 : i32
    %c0_i32_0 = arith.constant 0 : i32
    %c0_i32_1 = arith.constant 0 : i32
    return %c0_i32, %c0_i32_0 : i32, i32
  }
  func.func @transform_14(%arg0: i32, %arg1: i32) -> (i32, i32) {
    %c0_i32 = arith.constant 0 : i32
    %c0_i32_0 = arith.constant 0 : i32
    %c0_i32_1 = arith.constant 0 : i32
    return %c0_i32, %c0_i32_0 : i32, i32
  }
  func.func @transform_15(%arg0: i32, %arg1: i32) -> (i32, i32, i32) {
    %c0_i32 = arith.constant 0 : i32
    %c0_i32_0 = arith.constant 0 : i32
    return %arg0, %arg1, %c0_i32 : i32, i32, i32
  }
}

module attributes {stable_mosaic.version = 11 : i64} {
  func.func @encoder_kernel(%arg0: i32, %arg1: i32, %arg2: memref<1x16x32xf32, #tpu.memory_space<vmem>>, %arg3: memref<1x32xf32, #tpu.memory_space<vmem>>, %arg4: memref<1x32xf32, #tpu.memory_space<vmem>>, %arg5: memref<32x32xbf16, #tpu.memory_space<vmem>>, %arg6: memref<1x32xf32, #tpu.memory_space<vmem>>, %arg7: memref<32x64xbf16, #tpu.memory_space<vmem>>, %arg8: memref<1x64xf32, #tpu.memory_space<vmem>>, %arg9: memref<32x32xbf16, #tpu.memory_space<vmem>>, %arg10: memref<1x32xf32, #tpu.memory_space<vmem>>, %arg11: memref<1x32xf32, #tpu.memory_space<vmem>>, %arg12: memref<1x32xf32, #tpu.memory_space<vmem>>, %arg13: memref<32x64xbf16, #tpu.memory_space<vmem>>, %arg14: memref<1x64xf32, #tpu.memory_space<vmem>>, %arg15: memref<64x32xbf16, #tpu.memory_space<vmem>>, %arg16: memref<1x32xf32, #tpu.memory_space<vmem>>, %arg17: memref<1x8x32xf32, #tpu.memory_space<vmem>>, %arg18: memref<16x32xbf16, #tpu.memory_space<vmem>>, %arg19: memref<16x64xbf16, #tpu.memory_space<vmem>>) attributes {dimension_semantics = [#tpu.dimension_semantics<parallel>, #tpu.dimension_semantics<arbitrary>], iteration_bounds = array<i64: 2, 2>, scalar_prefetch = 0 : i64, scratch_operands = 2 : i64, tpu.core_type = #tpu.core_type<tc>, window_params = [{transform_indices = @transform_0, window_bounds = array<i64: 1, 16, 32>}, {pipeline_mode = #tpu.pipeline_mode<synchronous>, transform_indices = @transform_1, window_bounds = array<i64: 1, 32>}, {pipeline_mode = #tpu.pipeline_mode<synchronous>, transform_indices = @transform_2, window_bounds = array<i64: 1, 32>}, {pipeline_mode = #tpu.pipeline_mode<synchronous>, transform_indices = @transform_3, window_bounds = array<i64: 32, 32>}, {pipeline_mode = #tpu.pipeline_mode<synchronous>, transform_indices = @transform_4, window_bounds = array<i64: 1, 32>}, {pipeline_mode = #tpu.pipeline_mode<synchronous>, transform_indices = @transform_5, window_bounds = array<i64: 32, 64>}, {pipeline_mode = #tpu.pipeline_mode<synchronous>, transform_indices = @transform_6, window_bounds = array<i64: 1, 64>}, {pipeline_mode = #tpu.pipeline_mode<synchronous>, transform_indices = @transform_7, window_bounds = array<i64: 32, 32>}, {pipeline_mode = #tpu.pipeline_mode<synchronous>, transform_indices = @transform_8, window_bounds = array<i64: 1, 32>}, {pipeline_mode = #tpu.pipeline_mode<synchronous>, transform_indices = @transform_9, window_bounds = array<i64: 1, 32>}, {pipeline_mode = #tpu.pipeline_mode<synchronous>, transform_indices = @transform_10, window_bounds = array<i64: 1, 32>}, {pipeline_mode = #tpu.pipeline_mode<synchronous>, transform_indices = @transform_11, window_bounds = array<i64: 32, 64>}, {pipeline_mode = #tpu.pipeline_mode<synchronous>, transform_indices = @transform_12, window_bounds = array<i64: 1, 64>}, {pipeline_mode = #tpu.pipeline_mode<synchronous>, transform_indices = @transform_13, window_bounds = array<i64: 64, 32>}, {pipeline_mode = #tpu.pipeline_mode<synchronous>, transform_indices = @transform_14, window_bounds = array<i64: 1, 32>}, {transform_indices = @transform_15, window_bounds = array<i64: 1, 8, 32>}]} {
    %c0_i32 = arith.constant 0 : i32
    %0 = arith.cmpi eq, %arg1, %c0_i32 : i32
    %1 = arith.extui %0 : i1 to i32
    %c0_i32_0 = arith.constant 0 : i32
    %2 = arith.cmpi ne, %1, %c0_i32_0 : i32
    scf.if %2 {
      %c0_63 = arith.constant 0 : index
      %c0_64 = arith.constant 0 : index
      %c0_65 = arith.constant 0 : index
      %141 = vector.load %arg2[%c0_63, %c0_64, %c0_65] : memref<1x16x32xf32, #tpu.memory_space<vmem>>, vector<1x16x32xf32>
      %142 = vector.shape_cast %141 : vector<1x16x32xf32> to vector<16x32xf32>
      %c0_66 = arith.constant 0 : index
      %c0_67 = arith.constant 0 : index
      %143 = vector.load %arg3[%c0_66, %c0_67] : memref<1x32xf32, #tpu.memory_space<vmem>>, vector<1x32xf32>
      %c0_68 = arith.constant 0 : index
      %c0_69 = arith.constant 0 : index
      %144 = vector.load %arg4[%c0_68, %c0_69] : memref<1x32xf32, #tpu.memory_space<vmem>>, vector<1x32xf32>
      %cst_70 = arith.constant dense<0.000000e+00> : vector<16xf32>
      %145 = vector.multi_reduction <add>, %142, %cst_70 [1] : vector<16x32xf32> to vector<16xf32>
      %146 = vector.shape_cast %145 : vector<16xf32> to vector<16x1xf32>
      %cst_71 = arith.constant 3.200000e+01 : f32
      %147 = vector.broadcast %cst_71 : f32 to vector<16x1xf32>
      %148 = arith.divf %146, %147 : vector<16x1xf32>
      %149 = vector.broadcast %148 : vector<16x1xf32> to vector<16x32xf32>
      %150 = arith.subf %142, %149 : vector<16x32xf32>
      %151 = arith.mulf %150, %150 : vector<16x32xf32>
      %cst_72 = arith.constant dense<0.000000e+00> : vector<16xf32>
      %152 = vector.multi_reduction <add>, %151, %cst_72 [1] : vector<16x32xf32> to vector<16xf32>
      %153 = vector.shape_cast %152 : vector<16xf32> to vector<16x1xf32>
      %cst_73 = arith.constant 3.200000e+01 : f32
      %154 = vector.broadcast %cst_73 : f32 to vector<16x1xf32>
      %155 = arith.divf %153, %154 : vector<16x1xf32>
      %156 = vector.broadcast %148 : vector<16x1xf32> to vector<16x32xf32>
      %157 = arith.subf %142, %156 : vector<16x32xf32>
      %cst_74 = arith.constant 9.99999974E-6 : f32
      %158 = vector.broadcast %cst_74 : f32 to vector<16x1xf32>
      %159 = arith.addf %155, %158 : vector<16x1xf32>
      %160 = math.rsqrt %159 : vector<16x1xf32>
      %161 = vector.broadcast %160 : vector<16x1xf32> to vector<16x32xf32>
      %162 = arith.mulf %157, %161 : vector<16x32xf32>
      %163 = vector.broadcast %143 : vector<1x32xf32> to vector<16x32xf32>
      %164 = arith.mulf %162, %163 : vector<16x32xf32>
      %165 = vector.broadcast %144 : vector<1x32xf32> to vector<16x32xf32>
      %166 = arith.addf %164, %165 : vector<16x32xf32>
      %167 = arith.truncf %166 : vector<16x32xf32> to vector<16x32xbf16>
      %c0_75 = arith.constant 0 : index
      %c0_76 = arith.constant 0 : index
      %168 = vector.load %arg18[%c0_75, %c0_76] : memref<16x32xbf16, #tpu.memory_space<vmem>>, vector<16x32xbf16>
      tpu.vector_store %arg18[%c0_75, %c0_76], %167 {strides = array<i32>} : memref<16x32xbf16, #tpu.memory_space<vmem>>, vector<16x32xbf16>,
      %c0_77 = arith.constant 0 : index
      %c0_78 = arith.constant 0 : index
      %169 = vector.load %arg7[%c0_77, %c0_78] : memref<32x64xbf16, #tpu.memory_space<vmem>>, vector<32x64xbf16>
      %cst_79 = arith.constant dense<0.000000e+00> : vector<16x64xf32>
      %170 = tpu.matmul %167, %169, %cst_79 {dimension_numbers = #tpu.dot_dimension_numbers<[1], [0], [0], [1], [0, 0, 1, 1], [], []>} : vector<16x32xbf16>, vector<32x64xbf16>, vector<16x64xf32> -> vector<16x64xf32>
      %c0_80 = arith.constant 0 : index
      %c0_81 = arith.constant 0 : index
      %171 = vector.load %arg8[%c0_80, %c0_81] : memref<1x64xf32, #tpu.memory_space<vmem>>, vector<1x64xf32>
      %172 = vector.broadcast %171 : vector<1x64xf32> to vector<16x64xf32>
      %173 = arith.addf %170, %172 : vector<16x64xf32>
      %174 = arith.truncf %173 : vector<16x64xf32> to vector<16x64xbf16>
      %c0_82 = arith.constant 0 : index
      %c0_83 = arith.constant 0 : index
      %175 = vector.load %arg19[%c0_82, %c0_83] : memref<16x64xbf16, #tpu.memory_space<vmem>>, vector<16x64xbf16>
      tpu.vector_store %arg19[%c0_82, %c0_83], %174 {strides = array<i32>} : memref<16x64xbf16, #tpu.memory_space<vmem>>, vector<16x64xbf16>,
    } else {
    }
    %c8_i32 = arith.constant 8 : i32
    %3 = arith.muli %arg1, %c8_i32 : i32
    %4 = tpu.assume_multiple %3, 8 : i32
    %c0 = arith.constant 0 : index
    %5 = arith.index_cast %4 : i32 to index
    %c0_1 = arith.constant 0 : index
    %6 = vector.load %arg2[%c0, %5, %c0_1] : memref<1x16x32xf32, #tpu.memory_space<vmem>>, vector<1x8x32xf32>
    %7 = vector.shape_cast %6 : vector<1x8x32xf32> to vector<8x32xf32>
    %8 = arith.index_cast %4 : i32 to index
    %c0_2 = arith.constant 0 : index
    %9 = vector.load %arg18[%8, %c0_2] : memref<16x32xbf16, #tpu.memory_space<vmem>>, vector<8x32xbf16>
    %c0_3 = arith.constant 0 : index
    %c0_4 = arith.constant 0 : index
    %10 = vector.load %arg5[%c0_3, %c0_4] : memref<32x32xbf16, #tpu.memory_space<vmem>>, vector<32x32xbf16>
    %cst = arith.constant dense<0.000000e+00> : vector<8x32xf32>
    %11 = tpu.matmul %9, %10, %cst {dimension_numbers = #tpu.dot_dimension_numbers<[1], [0], [0], [1], [0, 0, 1, 1], [], []>} : vector<8x32xbf16>, vector<32x32xbf16>, vector<8x32xf32> -> vector<8x32xf32>
    %c0_5 = arith.constant 0 : index
    %c0_6 = arith.constant 0 : index
    %12 = vector.load %arg6[%c0_5, %c0_6] : memref<1x32xf32, #tpu.memory_space<vmem>>, vector<1x32xf32>
    %13 = vector.broadcast %12 : vector<1x32xf32> to vector<8x32xf32>
    %14 = arith.addf %11, %13 : vector<8x32xf32>
    %cst_7 = arith.constant 0.353553385 : f32
    %15 = vector.broadcast %cst_7 : f32 to vector<8x32xf32>
    %16 = arith.mulf %14, %15 : vector<8x32xf32>
    %17 = arith.truncf %16 : vector<8x32xf32> to vector<8x32xbf16>
    %18 = vector.extract_strided_slice %17 {offsets = [0, 0], sizes = [8, 8], strides = [1, 1]} : vector<8x32xbf16> to vector<8x8xbf16>
    %c0_8 = arith.constant 0 : index
    %c0_9 = arith.constant 0 : index
    %19 = vector.load %arg19[%c0_8, %c0_9] : memref<16x64xbf16, #tpu.memory_space<vmem>>, vector<16x8xbf16>
    %c0_10 = arith.constant 0 : index
    %c32 = arith.constant 32 : index
    %20 = vector.load %arg19[%c0_10, %c32] : memref<16x64xbf16, #tpu.memory_space<vmem>>, vector<16x8xbf16>
    %cst_11 = arith.constant dense<0.000000e+00> : vector<8x16xf32>
    %21 = tpu.matmul %18, %19, %cst_11 {dimension_numbers = #tpu.dot_dimension_numbers<[1], [1], [0], [0], [0, 0, 1, 0], [], []>} : vector<8x8xbf16>, vector<16x8xbf16>, vector<8x16xf32> -> vector<8x16xf32>
    %cst_12 = arith.constant dense<0xFF800000> : vector<8xf32>
    %22 = vector.multi_reduction <maximumf>, %21, %cst_12 [1] : vector<8x16xf32> to vector<8xf32>
    %23 = vector.shape_cast %22 : vector<8xf32> to vector<8x1xf32>
    %24 = vector.broadcast %23 : vector<8x1xf32> to vector<8x16xf32>
    %25 = arith.subf %21, %24 : vector<8x16xf32>
    %26 = math.exp %25 : vector<8x16xf32>
    %cst_13 = arith.constant dense<0.000000e+00> : vector<8xf32>
    %27 = vector.multi_reduction <add>, %26, %cst_13 [1] : vector<8x16xf32> to vector<8xf32>
    %28 = vector.shape_cast %27 : vector<8xf32> to vector<8x1xf32>
    %29 = arith.truncf %26 : vector<8x16xf32> to vector<8x16xbf16>
    %cst_14 = arith.constant dense<0.000000e+00> : vector<8x8xf32>
    %30 = tpu.matmul %29, %20, %cst_14 {dimension_numbers = #tpu.dot_dimension_numbers<[1], [0], [0], [1], [0, 0, 1, 1], [], []>} : vector<8x16xbf16>, vector<16x8xbf16>, vector<8x8xf32> -> vector<8x8xf32>
    %31 = tpu.reciprocal %28 {approx = true} : vector<8x1xf32> -> vector<8x1xf32>
    %32 = vector.broadcast %31 : vector<8x1xf32> to vector<8x8xf32>
    %33 = arith.mulf %30, %32 : vector<8x8xf32>
    %34 = arith.truncf %33 : vector<8x8xf32> to vector<8x8xbf16>
    %35 = vector.extract_strided_slice %17 {offsets = [0, 8], sizes = [8, 8], strides = [1, 1]} : vector<8x32xbf16> to vector<8x8xbf16>
    %c0_15 = arith.constant 0 : index
    %c8 = arith.constant 8 : index
    %36 = vector.load %arg19[%c0_15, %c8] : memref<16x64xbf16, #tpu.memory_space<vmem>>, vector<16x8xbf16>
    %c0_16 = arith.constant 0 : index
    %c40 = arith.constant 40 : index
    %37 = vector.load %arg19[%c0_16, %c40] : memref<16x64xbf16, #tpu.memory_space<vmem>>, vector<16x8xbf16>
    %cst_17 = arith.constant dense<0.000000e+00> : vector<8x16xf32>
    %38 = tpu.matmul %35, %36, %cst_17 {dimension_numbers = #tpu.dot_dimension_numbers<[1], [1], [0], [0], [0, 0, 1, 0], [], []>} : vector<8x8xbf16>, vector<16x8xbf16>, vector<8x16xf32> -> vector<8x16xf32>
    %cst_18 = arith.constant dense<0xFF800000> : vector<8xf32>
    %39 = vector.multi_reduction <maximumf>, %38, %cst_18 [1] : vector<8x16xf32> to vector<8xf32>
    %40 = vector.shape_cast %39 : vector<8xf32> to vector<8x1xf32>
    %41 = vector.broadcast %40 : vector<8x1xf32> to vector<8x16xf32>
    %42 = arith.subf %38, %41 : vector<8x16xf32>
    %43 = math.exp %42 : vector<8x16xf32>
    %cst_19 = arith.constant dense<0.000000e+00> : vector<8xf32>
    %44 = vector.multi_reduction <add>, %43, %cst_19 [1] : vector<8x16xf32> to vector<8xf32>
    %45 = vector.shape_cast %44 : vector<8xf32> to vector<8x1xf32>
    %46 = arith.truncf %43 : vector<8x16xf32> to vector<8x16xbf16>
    %cst_20 = arith.constant dense<0.000000e+00> : vector<8x8xf32>
    %47 = tpu.matmul %46, %37, %cst_20 {dimension_numbers = #tpu.dot_dimension_numbers<[1], [0], [0], [1], [0, 0, 1, 1], [], []>} : vector<8x16xbf16>, vector<16x8xbf16>, vector<8x8xf32> -> vector<8x8xf32>
    %48 = tpu.reciprocal %45 {approx = true} : vector<8x1xf32> -> vector<8x1xf32>
    %49 = vector.broadcast %48 : vector<8x1xf32> to vector<8x8xf32>
    %50 = arith.mulf %47, %49 : vector<8x8xf32>
    %51 = arith.truncf %50 : vector<8x8xf32> to vector<8x8xbf16>
    %52 = vector.extract_strided_slice %17 {offsets = [0, 16], sizes = [8, 8], strides = [1, 1]} : vector<8x32xbf16> to vector<8x8xbf16>
    %c0_21 = arith.constant 0 : index
    %c16 = arith.constant 16 : index
    %53 = vector.load %arg19[%c0_21, %c16] : memref<16x64xbf16, #tpu.memory_space<vmem>>, vector<16x8xbf16>
    %c0_22 = arith.constant 0 : index
    %c48 = arith.constant 48 : index
    %54 = vector.load %arg19[%c0_22, %c48] : memref<16x64xbf16, #tpu.memory_space<vmem>>, vector<16x8xbf16>
    %cst_23 = arith.constant dense<0.000000e+00> : vector<8x16xf32>
    %55 = tpu.matmul %52, %53, %cst_23 {dimension_numbers = #tpu.dot_dimension_numbers<[1], [1], [0], [0], [0, 0, 1, 0], [], []>} : vector<8x8xbf16>, vector<16x8xbf16>, vector<8x16xf32> -> vector<8x16xf32>
    %cst_24 = arith.constant dense<0xFF800000> : vector<8xf32>
    %56 = vector.multi_reduction <maximumf>, %55, %cst_24 [1] : vector<8x16xf32> to vector<8xf32>
    %57 = vector.shape_cast %56 : vector<8xf32> to vector<8x1xf32>
    %58 = vector.broadcast %57 : vector<8x1xf32> to vector<8x16xf32>
    %59 = arith.subf %55, %58 : vector<8x16xf32>
    %60 = math.exp %59 : vector<8x16xf32>
    %cst_25 = arith.constant dense<0.000000e+00> : vector<8xf32>
    %61 = vector.multi_reduction <add>, %60, %cst_25 [1] : vector<8x16xf32> to vector<8xf32>
    %62 = vector.shape_cast %61 : vector<8xf32> to vector<8x1xf32>
    %63 = arith.truncf %60 : vector<8x16xf32> to vector<8x16xbf16>
    %cst_26 = arith.constant dense<0.000000e+00> : vector<8x8xf32>
    %64 = tpu.matmul %63, %54, %cst_26 {dimension_numbers = #tpu.dot_dimension_numbers<[1], [0], [0], [1], [0, 0, 1, 1], [], []>} : vector<8x16xbf16>, vector<16x8xbf16>, vector<8x8xf32> -> vector<8x8xf32>
    %65 = tpu.reciprocal %62 {approx = true} : vector<8x1xf32> -> vector<8x1xf32>
    %66 = vector.broadcast %65 : vector<8x1xf32> to vector<8x8xf32>
    %67 = arith.mulf %64, %66 : vector<8x8xf32>
    %68 = arith.truncf %67 : vector<8x8xf32> to vector<8x8xbf16>
    %69 = vector.extract_strided_slice %17 {offsets = [0, 24], sizes = [8, 8], strides = [1, 1]} : vector<8x32xbf16> to vector<8x8xbf16>
    %c0_27 = arith.constant 0 : index
    %c24 = arith.constant 24 : index
    %70 = vector.load %arg19[%c0_27, %c24] : memref<16x64xbf16, #tpu.memory_space<vmem>>, vector<16x8xbf16>
    %c0_28 = arith.constant 0 : index
    %c56 = arith.constant 56 : index
    %71 = vector.load %arg19[%c0_28, %c56] : memref<16x64xbf16, #tpu.memory_space<vmem>>, vector<16x8xbf16>
    %cst_29 = arith.constant dense<0.000000e+00> : vector<8x16xf32>
    %72 = tpu.matmul %69, %70, %cst_29 {dimension_numbers = #tpu.dot_dimension_numbers<[1], [1], [0], [0], [0, 0, 1, 0], [], []>} : vector<8x8xbf16>, vector<16x8xbf16>, vector<8x16xf32> -> vector<8x16xf32>
    %cst_30 = arith.constant dense<0xFF800000> : vector<8xf32>
    %73 = vector.multi_reduction <maximumf>, %72, %cst_30 [1] : vector<8x16xf32> to vector<8xf32>
    %74 = vector.shape_cast %73 : vector<8xf32> to vector<8x1xf32>
    %75 = vector.broadcast %74 : vector<8x1xf32> to vector<8x16xf32>
    %76 = arith.subf %72, %75 : vector<8x16xf32>
    %77 = math.exp %76 : vector<8x16xf32>
    %cst_31 = arith.constant dense<0.000000e+00> : vector<8xf32>
    %78 = vector.multi_reduction <add>, %77, %cst_31 [1] : vector<8x16xf32> to vector<8xf32>
    %79 = vector.shape_cast %78 : vector<8xf32> to vector<8x1xf32>
    %80 = arith.truncf %77 : vector<8x16xf32> to vector<8x16xbf16>
    %cst_32 = arith.constant dense<0.000000e+00> : vector<8x8xf32>
    %81 = tpu.matmul %80, %71, %cst_32 {dimension_numbers = #tpu.dot_dimension_numbers<[1], [0], [0], [1], [0, 0, 1, 1], [], []>} : vector<8x16xbf16>, vector<16x8xbf16>, vector<8x8xf32> -> vector<8x8xf32>
    %82 = tpu.reciprocal %79 {approx = true} : vector<8x1xf32> -> vector<8x1xf32>
    %83 = vector.broadcast %82 : vector<8x1xf32> to vector<8x8xf32>
    %84 = arith.mulf %81, %83 : vector<8x8xf32>
    %85 = arith.truncf %84 : vector<8x8xf32> to vector<8x8xbf16>
    %86 = tpu.concatenate %34, %51, %68, %85 in 1 : vector<8x8xbf16>, vector<8x8xbf16>, vector<8x8xbf16>, vector<8x8xbf16> -> vector<8x32xbf16>
    %c0_33 = arith.constant 0 : index
    %c0_34 = arith.constant 0 : index
    %87 = vector.load %arg9[%c0_33, %c0_34] : memref<32x32xbf16, #tpu.memory_space<vmem>>, vector<32x32xbf16>
    %cst_35 = arith.constant dense<0.000000e+00> : vector<8x32xf32>
    %88 = tpu.matmul %86, %87, %cst_35 {dimension_numbers = #tpu.dot_dimension_numbers<[1], [0], [0], [1], [0, 0, 1, 1], [], []>} : vector<8x32xbf16>, vector<32x32xbf16>, vector<8x32xf32> -> vector<8x32xf32>
    %c0_36 = arith.constant 0 : index
    %c0_37 = arith.constant 0 : index
    %89 = vector.load %arg10[%c0_36, %c0_37] : memref<1x32xf32, #tpu.memory_space<vmem>>, vector<1x32xf32>
    %90 = vector.broadcast %89 : vector<1x32xf32> to vector<8x32xf32>
    %91 = arith.addf %88, %90 : vector<8x32xf32>
    %92 = arith.addf %91, %7 : vector<8x32xf32>
    %c0_38 = arith.constant 0 : index
    %c0_39 = arith.constant 0 : index
    %93 = vector.load %arg11[%c0_38, %c0_39] : memref<1x32xf32, #tpu.memory_space<vmem>>, vector<1x32xf32>
    %c0_40 = arith.constant 0 : index
    %c0_41 = arith.constant 0 : index
    %94 = vector.load %arg12[%c0_40, %c0_41] : memref<1x32xf32, #tpu.memory_space<vmem>>, vector<1x32xf32>
    %cst_42 = arith.constant dense<0.000000e+00> : vector<8xf32>
    %95 = vector.multi_reduction <add>, %92, %cst_42 [1] : vector<8x32xf32> to vector<8xf32>
    %96 = vector.shape_cast %95 : vector<8xf32> to vector<8x1xf32>
    %cst_43 = arith.constant 3.200000e+01 : f32
    %97 = vector.broadcast %cst_43 : f32 to vector<8x1xf32>
    %98 = arith.divf %96, %97 : vector<8x1xf32>
    %99 = vector.broadcast %98 : vector<8x1xf32> to vector<8x32xf32>
    %100 = arith.subf %92, %99 : vector<8x32xf32>
    %101 = arith.mulf %100, %100 : vector<8x32xf32>
    %cst_44 = arith.constant dense<0.000000e+00> : vector<8xf32>
    %102 = vector.multi_reduction <add>, %101, %cst_44 [1] : vector<8x32xf32> to vector<8xf32>
    %103 = vector.shape_cast %102 : vector<8xf32> to vector<8x1xf32>
    %cst_45 = arith.constant 3.200000e+01 : f32
    %104 = vector.broadcast %cst_45 : f32 to vector<8x1xf32>
    %105 = arith.divf %103, %104 : vector<8x1xf32>
    %106 = vector.broadcast %98 : vector<8x1xf32> to vector<8x32xf32>
    %107 = arith.subf %92, %106 : vector<8x32xf32>
    %cst_46 = arith.constant 9.99999974E-6 : f32
    %108 = vector.broadcast %cst_46 : f32 to vector<8x1xf32>
    %109 = arith.addf %105, %108 : vector<8x1xf32>
    %110 = math.rsqrt %109 : vector<8x1xf32>
    %111 = vector.broadcast %110 : vector<8x1xf32> to vector<8x32xf32>
    %112 = arith.mulf %107, %111 : vector<8x32xf32>
    %113 = vector.broadcast %93 : vector<1x32xf32> to vector<8x32xf32>
    %114 = arith.mulf %112, %113 : vector<8x32xf32>
    %115 = vector.broadcast %94 : vector<1x32xf32> to vector<8x32xf32>
    %116 = arith.addf %114, %115 : vector<8x32xf32>
    %117 = arith.truncf %116 : vector<8x32xf32> to vector<8x32xbf16>
    %c0_47 = arith.constant 0 : index
    %c0_48 = arith.constant 0 : index
    %118 = vector.load %arg13[%c0_47, %c0_48] : memref<32x64xbf16, #tpu.memory_space<vmem>>, vector<32x64xbf16>
    %cst_49 = arith.constant dense<0.000000e+00> : vector<8x64xf32>
    %119 = tpu.matmul %117, %118, %cst_49 {dimension_numbers = #tpu.dot_dimension_numbers<[1], [0], [0], [1], [0, 0, 1, 1], [], []>} : vector<8x32xbf16>, vector<32x64xbf16>, vector<8x64xf32> -> vector<8x64xf32>
    %c0_50 = arith.constant 0 : index
    %c0_51 = arith.constant 0 : index
    %120 = vector.load %arg14[%c0_50, %c0_51] : memref<1x64xf32, #tpu.memory_space<vmem>>, vector<1x64xf32>
    %121 = vector.broadcast %120 : vector<1x64xf32> to vector<8x64xf32>
    %122 = arith.addf %119, %121 : vector<8x64xf32>
    %cst_52 = arith.constant 5.000000e-01 : f32
    %123 = vector.broadcast %cst_52 : f32 to vector<8x64xf32>
    %124 = arith.mulf %123, %122 : vector<8x64xf32>
    %cst_53 = arith.constant 0.707106769 : f32
    %125 = vector.broadcast %cst_53 : f32 to vector<8x64xf32>
    %126 = arith.mulf %122, %125 : vector<8x64xf32>
    %127 = math.erf %126 : vector<8x64xf32>
    %cst_54 = arith.constant 1.000000e+00 : f32
    %128 = vector.broadcast %cst_54 : f32 to vector<8x64xf32>
    %129 = arith.addf %128, %127 : vector<8x64xf32>
    %130 = arith.mulf %124, %129 : vector<8x64xf32>
    %131 = arith.truncf %130 : vector<8x64xf32> to vector<8x64xbf16>
    %c0_55 = arith.constant 0 : index
    %c0_56 = arith.constant 0 : index
    %132 = vector.load %arg15[%c0_55, %c0_56] : memref<64x32xbf16, #tpu.memory_space<vmem>>, vector<64x32xbf16>
    %cst_57 = arith.constant dense<0.000000e+00> : vector<8x32xf32>
    %133 = tpu.matmul %131, %132, %cst_57 {dimension_numbers = #tpu.dot_dimension_numbers<[1], [0], [0], [1], [0, 0, 1, 1], [], []>} : vector<8x64xbf16>, vector<64x32xbf16>, vector<8x32xf32> -> vector<8x32xf32>
    %c0_58 = arith.constant 0 : index
    %c0_59 = arith.constant 0 : index
    %134 = vector.load %arg16[%c0_58, %c0_59] : memref<1x32xf32, #tpu.memory_space<vmem>>, vector<1x32xf32>
    %135 = vector.broadcast %134 : vector<1x32xf32> to vector<8x32xf32>
    %136 = arith.addf %133, %135 : vector<8x32xf32>
    %137 = arith.addf %136, %92 : vector<8x32xf32>
    %c0_60 = arith.constant 0 : index
    %c0_61 = arith.constant 0 : index
    %c0_62 = arith.constant 0 : index
    %138 = vector.load %arg17[%c0_60, %c0_61, %c0_62] : memref<1x8x32xf32, #tpu.memory_space<vmem>>, vector<1x8x32xf32>
    %139 = vector.shape_cast %138 : vector<1x8x32xf32> to vector<8x32xf32>
    %140 = vector.shape_cast %137 : vector<8x32xf32> to vector<1x8x32xf32>
    tpu.vector_store %arg17[%c0_60, %c0_61, %c0_62], %140 {strides = array<i32>} : memref<1x8x32xf32, #tpu.memory_space<vmem>>, vector<1x8x32xf32>,
    return
  }
  func.func @transform_0(%arg0: i32, %arg1: i32) -> (i32, i32, i32) {
    %c0_i32 = arith.constant 0 : i32
    %c0_i32_0 = arith.constant 0 : i32
    %c0_i32_1 = arith.constant 0 : i32
    return %arg0, %c0_i32, %c0_i32_0 : i32, i32, i32
  }
  func.func @transform_1(%arg0: i32, %arg1: i32) -> (i32, i32) {
    %c0_i32 = arith.constant 0 : i32
    %c0_i32_0 = arith.constant 0 : i32
    %c0_i32_1 = arith.constant 0 : i32
    return %c0_i32, %c0_i32_0 : i32, i32
  }
  func.func @transform_2(%arg0: i32, %arg1: i32) -> (i32, i32) {
    %c0_i32 = arith.constant 0 : i32
    %c0_i32_0 = arith.constant 0 : i32
    %c0_i32_1 = arith.constant 0 : i32
    return %c0_i32, %c0_i32_0 : i32, i32
  }
  func.func @transform_3(%arg0: i32, %arg1: i32) -> (i32, i32) {
    %c0_i32 = arith.constant 0 : i32
    %c0_i32_0 = arith.constant 0 : i32
    %c0_i32_1 = arith.constant 0 : i32
    return %c0_i32, %c0_i32_0 : i32, i32
  }
  func.func @transform_4(%arg0: i32, %arg1: i32) -> (i32, i32) {
    %c0_i32 = arith.constant 0 : i32
    %c0_i32_0 = arith.constant 0 : i32
    %c0_i32_1 = arith.constant 0 : i32
    return %c0_i32, %c0_i32_0 : i32, i32
  }
  func.func @transform_5(%arg0: i32, %arg1: i32) -> (i32, i32) {
    %c0_i32 = arith.constant 0 : i32
    %c0_i32_0 = arith.constant 0 : i32
    %c0_i32_1 = arith.constant 0 : i32
    return %c0_i32, %c0_i32_0 : i32, i32
  }
  func.func @transform_6(%arg0: i32, %arg1: i32) -> (i32, i32) {
    %c0_i32 = arith.constant 0 : i32
    %c0_i32_0 = arith.constant 0 : i32
    %c0_i32_1 = arith.constant 0 : i32
    return %c0_i32, %c0_i32_0 : i32, i32
  }
  func.func @transform_7(%arg0: i32, %arg1: i32) -> (i32, i32) {
    %c0_i32 = arith.constant 0 : i32
    %c0_i32_0 = arith.constant 0 : i32
    %c0_i32_1 = arith.constant 0 : i32
    return %c0_i32, %c0_i32_0 : i32, i32
  }
  func.func @transform_8(%arg0: i32, %arg1: i32) -> (i32, i32) {
    %c0_i32 = arith.constant 0 : i32
    %c0_i32_0 = arith.constant 0 : i32
    %c0_i32_1 = arith.constant 0 : i32
    return %c0_i32, %c0_i32_0 : i32, i32
  }
  func.func @transform_9(%arg0: i32, %arg1: i32) -> (i32, i32) {
    %c0_i32 = arith.constant 0 : i32
    %c0_i32_0 = arith.constant 0 : i32
    %c0_i32_1 = arith.constant 0 : i32
    return %c0_i32, %c0_i32_0 : i32, i32
  }
  func.func @transform_10(%arg0: i32, %arg1: i32) -> (i32, i32) {
    %c0_i32 = arith.constant 0 : i32
    %c0_i32_0 = arith.constant 0 : i32
    %c0_i32_1 = arith.constant 0 : i32
    return %c0_i32, %c0_i32_0 : i32, i32
  }
  func.func @transform_11(%arg0: i32, %arg1: i32) -> (i32, i32) {
    %c0_i32 = arith.constant 0 : i32
    %c0_i32_0 = arith.constant 0 : i32
    %c0_i32_1 = arith.constant 0 : i32
    return %c0_i32, %c0_i32_0 : i32, i32
  }
  func.func @transform_12(%arg0: i32, %arg1: i32) -> (i32, i32) {
    %c0_i32 = arith.constant 0 : i32
    %c0_i32_0 = arith.constant 0 : i32
    %c0_i32_1 = arith.constant 0 : i32
    return %c0_i32, %c0_i32_0 : i32, i32
  }
  func.func @transform_13(%arg0: i32, %arg1: i32) -> (i32, i32) {
    %c0_i32 = arith.constant 0 : i32
    %c0_i32_0 = arith.constant 0 : i32
    %c0_i32_1 = arith.constant 0 : i32
    return %c0_i32, %c0_i32_0 : i32, i32
  }
  func.func @transform_14(%arg0: i32, %arg1: i32) -> (i32, i32) {
    %c0_i32 = arith.constant 0 : i32
    %c0_i32_0 = arith.constant 0 : i32
    %c0_i32_1 = arith.constant 0 : i32
    return %c0_i32, %c0_i32_0 : i32, i32
  }
  func.func @transform_15(%arg0: i32, %arg1: i32) -> (i32, i32, i32) {
    %c0_i32 = arith.constant 0 : i32
    %c0_i32_0 = arith.constant 0 : i32
    return %arg0, %arg1, %c0_i32 : i32, i32, i32
  }
}

</mosaic_0001>

<llo_original>
// kernel: tpu_custom_call.1
$region0: #{tpu_custom_call.1}
  #allocation0 [shape = 'u32[]', space=smem, size = 0x4, offset = 0x4, fixed_abs, tag = 'smem constant byte address 0x4 - core index']
  #allocation1 [shape = 'u32[72,128]{1,0:T(1,128)}', space=vmem, size = 0x9000, scoped, tag = 'internal scratch']
  #allocation2 [shape = 'bf16[16,32]{1,0:T(8,128)(2,1)}', space=vmem, size = 0x1000, scoped, tag = 'scratch operand']
  #allocation3 [shape = 'bf16[16,64]{1,0:T(8,128)(2,1)}', space=vmem, size = 0x1000, scoped, tag = 'scratch operand']
  %s0 = inlined_call_operand.vmem [shape: f32[2,16,32], index: 0, kind: input, shape index: {}]
  %s1 = inlined_call_operand.hbm [shape: f32[1,32], index: 1, kind: input, shape index: {}]
  %s2 = inlined_call_operand.vmem [shape: f32[1,32], index: 2, kind: input, shape index: {}]
  %s3 = inlined_call_operand.vmem [shape: bf16[32,32], index: 3, kind: input, shape index: {}]
  %s4 = inlined_call_operand.vmem [shape: f32[1,32], index: 4, kind: input, shape index: {}]
  %s5 = inlined_call_operand.hbm [shape: bf16[32,64], index: 5, kind: input, shape index: {}]
  %s6 = inlined_call_operand.vmem [shape: f32[1,64], index: 6, kind: input, shape index: {}]
  %s7 = inlined_call_operand.hbm [shape: bf16[32,32], index: 7, kind: input, shape index: {}]
  %s8 = inlined_call_operand.vmem [shape: f32[1,32], index: 8, kind: input, shape index: {}]
  %s9 = inlined_call_operand.vmem [shape: f32[1,32], index: 9, kind: input, shape index: {}]
  %s10 = inlined_call_operand.vmem [shape: f32[1,32], index: 10, kind: input, shape index: {}]
  %s11 = inlined_call_operand.hbm [shape: bf16[32,64], index: 11, kind: input, shape index: {}]
  %s12 = inlined_call_operand.vmem [shape: f32[1,64], index: 12, kind: input, shape index: {}]
  %s13 = inlined_call_operand.vmem [shape: bf16[64,32], index: 13, kind: input, shape index: {}]
  %s14 = inlined_call_operand.vmem [shape: f32[1,32], index: 14, kind: input, shape index: {}]
  %s15 = inlined_call_operand.hbm [shape: f32[2,16,32], index: 15, kind: output, shape index: {}]
  %s16 = sld [smem:[#allocation0]]
  $region113: #{tpu_custom_call.1} parent=0
    _
  %s18 = ssub.s32 1, %s16
  %s19 = scalar_select 0, %s18, %s16
  $region1: #{tpu_custom_call.1} parent=0
    #allocation4 [shape = 'u8[512]{0}', space=vmem, size = 0x400, scoped, tag = 'input window, operand 1, single buffered']
    #allocation5 [shape = 's32[2]{0}', space=sflag, size = 0x8, scoped, tag = 'scoped memory for tpu_custom_call.1']
    #allocation6 [shape = 's32[2]{0}', space=sflag, size = 0x8, scoped, tag = 'scoped memory for tpu_custom_call.1']
    #allocation7 [shape = 'u8[8192]{0}', space=vmem, size = 0x2000, scoped, tag = 'input window, operand 5, single buffered']
    #allocation8 [shape = 's32[1]{0}', space=sflag, size = 0x4, scoped, tag = 'scoped memory for tpu_custom_call.1']
    #allocation9 [shape = 'u8[8192]{0}', space=vmem, size = 0x2000, scoped, tag = 'input window, operand 7, single buffered']
    #allocation10 [shape = 'u8[8192]{0}', space=vmem, size = 0x2000, scoped, tag = 'input window, operand 11, single buffered']
    #allocation11 [shape = 's32[1]{0}', space=sflag, size = 0x4, scoped, tag = 'scoped memory for tpu_custom_call.1']
    #allocation12 [shape = 'u8[8192]{0}', space=vmem, size = 0x2000, scoped, tag = 'output window, operand 0']
    %20 = vsyncpa [#allocation5], 0
    %21 = vsyncpa [#allocation8], 0
    %22 = vsyncpa [#allocation11], 0
    %23 = vsyncpa [#allocation6], 0
    %s24 = scalar_lea.sflag [#allocation6], 1
    %25 = vsyncpa %s24, 0
    loop: start=0, step=1, limit=6
    $region2: #{tpu_custom_call.1} parent=1 // loop_pre_header
      _
    $region3: #{tpu_custom_call.1} parent=1 // loop_header
      %s27 = sphi 0, %s31
      %p28 = scmp.ge.s32.totalorder %s27, 6
      %s34 = sphi 0, %s46
      %s35 = sphi 0, %s42
      %s36 = sphi 0, %s34
      %s37 = sphi 0, %s35
      %s38 = sphi 0, %s36
      %s39 = sphi 0, %s37
      %s49 = sphi 0, %s51
      %s52 = sphi 0, %s49
      %s53 = sphi 0, %s52
      %s69 = sphi 0, %s53
      %s73 = sphi 0, %s73
      %s75 = sphi 0, %s73
      %s76 = sphi 0, %s75
      %s90 = sphi 0, %s76
      %s94 = sphi 0, %s94
      %s96 = sphi 0, %s94
      %s97 = sphi 0, %s96
      %s111 = sphi 0, %s97
      %s115 = sphi 0, %s115
      %s117 = sphi 0, %s115
      %s118 = sphi 0, %s117
      %s132 = sphi 0, %s118
      %s136 = sphi 0, %s136
      %s138 = sphi 0, %s136
      %s139 = sphi 0, %s138
      %s153 = sphi 0, %s139
      %s157 = sphi 0, %s157
      %s159 = sphi 0, %s157
      %s160 = sphi 0, %s159
      %s174 = sphi 0, %s160
      %s178 = sphi 0, %s178
      %s180 = sphi 0, %s178
      %s181 = sphi 0, %s180
      %s195 = sphi 0, %s181
      %s199 = sphi 0, %s199
      %s201 = sphi 0, %s199
      %s202 = sphi 0, %s201
      %s216 = sphi 0, %s202
      %s220 = sphi 0, %s220
      %s222 = sphi 0, %s220
      %s223 = sphi 0, %s222
      %s237 = sphi 0, %s223
      %s241 = sphi 0, %s241
      %s243 = sphi 0, %s241
      %s244 = sphi 0, %s243
      %s258 = sphi 0, %s244
      %s262 = sphi 0, %s262
      %s264 = sphi 0, %s262
      %s265 = sphi 0, %s264
      %s279 = sphi 0, %s265
      %s283 = sphi 0, %s283
      %s285 = sphi 0, %s283
      %s286 = sphi 0, %s285
      %s300 = sphi 0, %s286
      %s304 = sphi 0, %s304
      %s306 = sphi 0, %s304
      %s307 = sphi 0, %s306
      %s321 = sphi 0, %s307
      %s325 = sphi 0, %s325
      %s327 = sphi 0, %s325
      %s328 = sphi 0, %s327
      %s342 = sphi 0, %s328
      %s346 = sphi 0, %s346
      %s348 = sphi 0, %s346
      %s349 = sphi 0, %s348
      %s363 = sphi 0, %s349
      %s371 = sphi 0, %s373
      %s374 = sphi 0, %s371
      %s375 = sphi 0, %s374
      %s391 = sphi 0, %s375
    $region4: #{tpu_custom_call.1} parent=1 // loop_header_branch
      %30 = sbr.rel (%p28) target = $region8
    $region5: #{tpu_custom_call.1} parent=1 // loop_body
      %s32 = ssub.s32 %s27, 1
      %s33 = ssub.s32 %s27, 2
      %s40 = sadd.s32 1, %s35
      %p41 = scmp.ge.s32.totalorder %s40, 2
      %s42 = scalar_select %p41, 0, %s40
      %s43 = sadd.s32 1, %s34
      %s44 = scalar_select %p41, %s43, %s34
      %p45 = scmp.ge.s32.totalorder %s44, 2
      %s46 = scalar_select %p45, 0, %s44
      %s47 = ssub.s32 %s34, %s46
      %p48 = scmp.eq.s32.totalorder %s47, 0
      %s50 = sadd.s32 %s49, 1
      %s51 = scalar_select %p48, %s49, %s50
      %p54 = pneg %p48
      %p55 = scmp.eq.s32.totalorder %s27, 3
      %p56 = por %p54, %p55
      %p57 = scmp.ne.s32.totalorder %s49, %s52
      %p58 = scmp.eq.s32.totalorder %s27, 0
      %p59 = por %p57, %p58
      %p60 = scmp.ne.s32.totalorder %s49, %s52
      %p61 = scmp.eq.s32.totalorder %s32, 3
      %p62 = por %p60, %p61
      %p63 = scmp.ne.s32.totalorder %s52, %s53
      %p64 = scmp.eq.s32.totalorder %s32, 0
      %p65 = por %p63, %p64
      %p66 = scmp.ne.s32.totalorder %s52, %s53
      %p67 = scmp.eq.s32.totalorder %s33, 3
      %p68 = por %p66, %p67
      %p70 = scmp.ne.s32.totalorder %s53, %s69
      %p71 = scmp.eq.s32.totalorder %s33, 0
      %p72 = por %p70, %p71
      %s74 = sadd.s32 %s73, 1
      %p77 = scmp.eq.s32.totalorder %s27, 3
      %p78 = scmp.ne.s32.totalorder %s73, %s75
      %p79 = scmp.eq.s32.totalorder %s27, 0
      %p80 = por %p78, %p79
      %p81 = scmp.ne.s32.totalorder %s73, %s75
      %p82 = scmp.eq.s32.totalorder %s32, 3
      %p83 = por %p81, %p82
      %p84 = scmp.ne.s32.totalorder %s75, %s76
      %p85 = scmp.eq.s32.totalorder %s32, 0
      %p86 = por %p84, %p85
      %p87 = scmp.ne.s32.totalorder %s75, %s76
      %p88 = scmp.eq.s32.totalorder %s33, 3
      %p89 = por %p87, %p88
      %p91 = scmp.ne.s32.totalorder %s76, %s90
      %p92 = scmp.eq.s32.totalorder %s33, 0
      %p93 = por %p91, %p92
      %s95 = sadd.s32 %s94, 1
      %p98 = scmp.eq.s32.totalorder %s27, 3
      %p99 = scmp.ne.s32.totalorder %s94, %s96
      %p100 = scmp.eq.s32.totalorder %s27, 0
      %p101 = por %p99, %p100
      %p102 = scmp.ne.s32.totalorder %s94, %s96
      %p103 = scmp.eq.s32.totalorder %s32, 3
      %p104 = por %p102, %p103
      %p105 = scmp.ne.s32.totalorder %s96, %s97
      %p106 = scmp.eq.s32.totalorder %s32, 0
      %p107 = por %p105, %p106
      %p108 = scmp.ne.s32.totalorder %s96, %s97
      %p109 = scmp.eq.s32.totalorder %s33, 3
      %p110 = por %p108, %p109
      %p112 = scmp.ne.s32.totalorder %s97, %s111
      %p113 = scmp.eq.s32.totalorder %s33, 0
      %p114 = por %p112, %p113
      %s116 = sadd.s32 %s115, 1
      %p119 = scmp.eq.s32.totalorder %s27, 3
      %p120 = scmp.ne.s32.totalorder %s115, %s117
      %p121 = scmp.eq.s32.totalorder %s27, 0
      %p122 = por %p120, %p121
      %p123 = scmp.ne.s32.totalorder %s115, %s117
      %p124 = scmp.eq.s32.totalorder %s32, 3
      %p125 = por %p123, %p124
      %p126 = scmp.ne.s32.totalorder %s117, %s118
      %p127 = scmp.eq.s32.totalorder %s32, 0
      %p128 = por %p126, %p127
      %p129 = scmp.ne.s32.totalorder %s117, %s118
      %p130 = scmp.eq.s32.totalorder %s33, 3
      %p131 = por %p129, %p130
      %p133 = scmp.ne.s32.totalorder %s118, %s132
      %p134 = scmp.eq.s32.totalorder %s33, 0
      %p135 = por %p133, %p134
      %s137 = sadd.s32 %s136, 1
      %p140 = scmp.eq.s32.totalorder %s27, 3
      %p141 = scmp.ne.s32.totalorder %s136, %s138
      %p142 = scmp.eq.s32.totalorder %s27, 0
      %p143 = por %p141, %p142
      %p144 = scmp.ne.s32.totalorder %s136, %s138
      %p145 = scmp.eq.s32.totalorder %s32, 3
      %p146 = por %p144, %p145
      %p147 = scmp.ne.s32.totalorder %s138, %s139
      %p148 = scmp.eq.s32.totalorder %s32, 0
      %p149 = por %p147, %p148
      %p150 = scmp.ne.s32.totalorder %s138, %s139
      %p151 = scmp.eq.s32.totalorder %s33, 3
      %p152 = por %p150, %p151
      %p154 = scmp.ne.s32.totalorder %s139, %s153
      %p155 = scmp.eq.s32.totalorder %s33, 0
      %p156 = por %p154, %p155
      %s158 = sadd.s32 %s157, 1
      %p161 = scmp.eq.s32.totalorder %s27, 3
      %p162 = scmp.ne.s32.totalorder %s157, %s159
      %p163 = scmp.eq.s32.totalorder %s27, 0
      %p164 = por %p162, %p163
      %p165 = scmp.ne.s32.totalorder %s157, %s159
      %p166 = scmp.eq.s32.totalorder %s32, 3
      %p167 = por %p165, %p166
      %p168 = scmp.ne.s32.totalorder %s159, %s160
      %p169 = scmp.eq.s32.totalorder %s32, 0
      %p170 = por %p168, %p169
      %p171 = scmp.ne.s32.totalorder %s159, %s160
      %p172 = scmp.eq.s32.totalorder %s33, 3
      %p173 = por %p171, %p172
      %p175 = scmp.ne.s32.totalorder %s160, %s174
      %p176 = scmp.eq.s32.totalorder %s33, 0
      %p177 = por %p175, %p176
      %s179 = sadd.s32 %s178, 1
      %p182 = scmp.eq.s32.totalorder %s27, 3
      %p183 = scmp.ne.s32.totalorder %s178, %s180
      %p184 = scmp.eq.s32.totalorder %s27, 0
      %p185 = por %p183, %p184
      %p186 = scmp.ne.s32.totalorder %s178, %s180
      %p187 = scmp.eq.s32.totalorder %s32, 3
      %p188 = por %p186, %p187
      %p189 = scmp.ne.s32.totalorder %s180, %s181
      %p190 = scmp.eq.s32.totalorder %s32, 0
      %p191 = por %p189, %p190
      %p192 = scmp.ne.s32.totalorder %s180, %s181
      %p193 = scmp.eq.s32.totalorder %s33, 3
      %p194 = por %p192, %p193
      %p196 = scmp.ne.s32.totalorder %s181, %s195
      %p197 = scmp.eq.s32.totalorder %s33, 0
      %p198 = por %p196, %p197
      %s200 = sadd.s32 %s199, 1
      %p203 = scmp.eq.s32.totalorder %s27, 3
      %p204 = scmp.ne.s32.totalorder %s199, %s201
      %p205 = scmp.eq.s32.totalorder %s27, 0
      %p206 = por %p204, %p205
      %p207 = scmp.ne.s32.totalorder %s199, %s201
      %p208 = scmp.eq.s32.totalorder %s32, 3
      %p209 = por %p207, %p208
      %p210 = scmp.ne.s32.totalorder %s201, %s202
      %p211 = scmp.eq.s32.totalorder %s32, 0
      %p212 = por %p210, %p211
      %p213 = scmp.ne.s32.totalorder %s201, %s202
      %p214 = scmp.eq.s32.totalorder %s33, 3
      %p215 = por %p213, %p214
      %p217 = scmp.ne.s32.totalorder %s202, %s216
      %p218 = scmp.eq.s32.totalorder %s33, 0
      %p219 = por %p217, %p218
      %s221 = sadd.s32 %s220, 1
      %p224 = scmp.eq.s32.totalorder %s27, 3
      %p225 = scmp.ne.s32.totalorder %s220, %s222
      %p226 = scmp.eq.s32.totalorder %s27, 0
      %p227 = por %p225, %p226
      %p228 = scmp.ne.s32.totalorder %s220, %s222
      %p229 = scmp.eq.s32.totalorder %s32, 3
      %p230 = por %p228, %p229
      %p231 = scmp.ne.s32.totalorder %s222, %s223
      %p232 = scmp.eq.s32.totalorder %s32, 0
      %p233 = por %p231, %p232
      %p234 = scmp.ne.s32.totalorder %s222, %s223
      %p235 = scmp.eq.s32.totalorder %s33, 3
      %p236 = por %p234, %p235
      %p238 = scmp.ne.s32.totalorder %s223, %s237
      %p239 = scmp.eq.s32.totalorder %s33, 0
      %p240 = por %p238, %p239
      %s242 = sadd.s32 %s241, 1
      %p245 = scmp.eq.s32.totalorder %s27, 3
      %p246 = scmp.ne.s32.totalorder %s241, %s243
      %p247 = scmp.eq.s32.totalorder %s27, 0
      %p248 = por %p246, %p247
      %p249 = scmp.ne.s32.totalorder %s241, %s243
      %p250 = scmp.eq.s32.totalorder %s32, 3
      %p251 = por %p249, %p250
      %p252 = scmp.ne.s32.totalorder %s243, %s244
      %p253 = scmp.eq.s32.totalorder %s32, 0
      %p254 = por %p252, %p253
      %p255 = scmp.ne.s32.totalorder %s243, %s244
      %p256 = scmp.eq.s32.totalorder %s33, 3
      %p257 = por %p255, %p256
      %p259 = scmp.ne.s32.totalorder %s244, %s258
      %p260 = scmp.eq.s32.totalorder %s33, 0
      %p261 = por %p259, %p260
      %s263 = sadd.s32 %s262, 1
      %p266 = scmp.eq.s32.totalorder %s27, 3
      %p267 = scmp.ne.s32.totalorder %s262, %s264
      %p268 = scmp.eq.s32.totalorder %s27, 0
      %p269 = por %p267, %p268
      %p270 = scmp.ne.s32.totalorder %s262, %s264
      %p271 = scmp.eq.s32.totalorder %s32, 3
      %p272 = por %p270, %p271
      %p273 = scmp.ne.s32.totalorder %s264, %s265
      %p274 = scmp.eq.s32.totalorder %s32, 0
      %p275 = por %p273, %p274
      %p276 = scmp.ne.s32.totalorder %s264, %s265
      %p277 = scmp.eq.s32.totalorder %s33, 3
      %p278 = por %p276, %p277
      %p280 = scmp.ne.s32.totalorder %s265, %s279
      %p281 = scmp.eq.s32.totalorder %s33, 0
      %p282 = por %p280, %p281
      %s284 = sadd.s32 %s283, 1
      %p287 = scmp.eq.s32.totalorder %s27, 3
      %p288 = scmp.ne.s32.totalorder %s283, %s285
      %p289 = scmp.eq.s32.totalorder %s27, 0
      %p290 = por %p288, %p289
      %p291 = scmp.ne.s32.totalorder %s283, %s285
      %p292 = scmp.eq.s32.totalorder %s32, 3
      %p293 = por %p291, %p292
      %p294 = scmp.ne.s32.totalorder %s285, %s286
      %p295 = scmp.eq.s32.totalorder %s32, 0
      %p296 = por %p294, %p295
      %p297 = scmp.ne.s32.totalorder %s285, %s286
      %p298 = scmp.eq.s32.totalorder %s33, 3
      %p299 = por %p297, %p298
      %p301 = scmp.ne.s32.totalorder %s286, %s300
      %p302 = scmp.eq.s32.totalorder %s33, 0
      %p303 = por %p301, %p302
      %s305 = sadd.s32 %s304, 1
      %p308 = scmp.eq.s32.totalorder %s27, 3
      %p309 = scmp.ne.s32.totalorder %s304, %s306
      %p310 = scmp.eq.s32.totalorder %s27, 0
      %p311 = por %p309, %p310
      %p312 = scmp.ne.s32.totalorder %s304, %s306
      %p313 = scmp.eq.s32.totalorder %s32, 3
      %p314 = por %p312, %p313
      %p315 = scmp.ne.s32.totalorder %s306, %s307
      %p316 = scmp.eq.s32.totalorder %s32, 0
      %p317 = por %p315, %p316
      %p318 = scmp.ne.s32.totalorder %s306, %s307
      %p319 = scmp.eq.s32.totalorder %s33, 3
      %p320 = por %p318, %p319
      %p322 = scmp.ne.s32.totalorder %s307, %s321
      %p323 = scmp.eq.s32.totalorder %s33, 0
      %p324 = por %p322, %p323
      %s326 = sadd.s32 %s325, 1
      %p329 = scmp.eq.s32.totalorder %s27, 3
      %p330 = scmp.ne.s32.totalorder %s325, %s327
      %p331 = scmp.eq.s32.totalorder %s27, 0
      %p332 = por %p330, %p331
      %p333 = scmp.ne.s32.totalorder %s325, %s327
      %p334 = scmp.eq.s32.totalorder %s32, 3
      %p335 = por %p333, %p334
      %p336 = scmp.ne.s32.totalorder %s327, %s328
      %p337 = scmp.eq.s32.totalorder %s32, 0
      %p338 = por %p336, %p337
      %p339 = scmp.ne.s32.totalorder %s327, %s328
      %p340 = scmp.eq.s32.totalorder %s33, 3
      %p341 = por %p339, %p340
      %p343 = scmp.ne.s32.totalorder %s328, %s342
      %p344 = scmp.eq.s32.totalorder %s33, 0
      %p345 = por %p343, %p344
      %s347 = sadd.s32 %s346, 1
      %p350 = scmp.eq.s32.totalorder %s27, 3
      %p351 = scmp.ne.s32.totalorder %s346, %s348
      %p352 = scmp.eq.s32.totalorder %s27, 0
      %p353 = por %p351, %p352
      %p354 = scmp.ne.s32.totalorder %s346, %s348
      %p355 = scmp.eq.s32.totalorder %s32, 3
      %p356 = por %p354, %p355
      %p357 = scmp.ne.s32.totalorder %s348, %s349
      %p358 = scmp.eq.s32.totalorder %s32, 0
      %p359 = por %p357, %p358
      %p360 = scmp.ne.s32.totalorder %s348, %s349
      %p361 = scmp.eq.s32.totalorder %s33, 3
      %p362 = por %p360, %p361
      %p364 = scmp.ne.s32.totalorder %s349, %s363
      %p365 = scmp.eq.s32.totalorder %s33, 0
      %p366 = por %p364, %p365
      %s367 = ssub.s32 %s34, %s46
      %s368 = ssub.s32 %s35, %s42
      %s369 = sor.u32 %s367, %s368
      %p370 = scmp.eq.s32.totalorder %s369, 0
      %s372 = sadd.s32 %s371, 1
      %s373 = scalar_select %p370, %s371, %s372
      %p376 = pneg %p370
      %p377 = scmp.eq.s32.totalorder %s27, 3
      %p378 = por %p376, %p377
      %p379 = scmp.ne.s32.totalorder %s371, %s374
      %p380 = scmp.eq.s32.totalorder %s27, 0
      %p381 = por %p379, %p380
      %p382 = scmp.ne.s32.totalorder %s371, %s374
      %p383 = scmp.eq.s32.totalorder %s32, 3
      %p384 = por %p382, %p383
      %p385 = scmp.ne.s32.totalorder %s374, %s375
      %p386 = scmp.eq.s32.totalorder %s32, 0
      %p387 = por %p385, %p386
      %p388 = scmp.ne.s32.totalorder %s374, %s375
      %p389 = scmp.eq.s32.totalorder %s33, 3
      %p390 = por %p388, %p389
      %p392 = scmp.ne.s32.totalorder %s375, %s391
      %p393 = scmp.eq.s32.totalorder %s33, 0
      %p394 = por %p392, %p393
      %p395 = scmp.le.s32.totalorder 1, %s27
      %p396 = scmp.lt.s32.totalorder %s27, 5
      %p397 = pnand %p395, %p396
      %p398 = pneg %p397
      // Predicated region
      $region9: #{tpu_custom_call.1} parent=5 // pred_check
        _
      $region10: #{tpu_custom_call.1} parent=5 // pred_check_branch
        %400 = sbr.rel (%p397) target = $region12
      $region11: #{tpu_custom_call.1} parent=5 // pred_region
        %s401 = ssub.s32 %s27, 1
        // Predicated region
        $region13: #{tpu_custom_call.1} parent=11 // pred_check
          %p402 = pneg %p86
        $region14: #{tpu_custom_call.1} parent=11 // pred_check_branch
          %404 = sbr.rel (%p402) target = $region16
        $region15: #{tpu_custom_call.1} parent=11 // pred_region
          %406 = vsyncadd [#allocation5], 0
          %s408 = sshll.u32 %s1, 4
          %s409 = int_to_ptr.hbm [resolvable:$true] %s408
          %s410 = sshll.u32 [#allocation4], 4
          %s411 = int_to_ptr.vmem [resolvable:$true] %s410
          %413 = dma.hbm_to_vmem [thread:$0]  %s409, 16, %s411, [#allocation5]
        $region16: #{tpu_custom_call.1} parent=11 // pred_fallthru
          _
        // Predicated region
        $region17: #{tpu_custom_call.1} parent=11 // pred_check
          %p414 = pneg %p107
        $region18: #{tpu_custom_call.1} parent=11 // pred_check_branch
          %416 = sbr.rel (%p414) target = $region20
        $region19: #{tpu_custom_call.1} parent=11 // pred_region
          _
        $region20: #{tpu_custom_call.1} parent=11 // pred_fallthru
          _
        // Predicated region
        $region21: #{tpu_custom_call.1} parent=11 // pred_check
          %p417 = pneg %p128
        $region22: #{tpu_custom_call.1} parent=11 // pred_check_branch
          %419 = sbr.rel (%p417) target = $region24
        $region23: #{tpu_custom_call.1} parent=11 // pred_region
          _
        $region24: #{tpu_custom_call.1} parent=11 // pred_fallthru
          _
        // Predicated region
        $region25: #{tpu_custom_call.1} parent=11 // pred_check
          %p420 = pneg %p149
        $region26: #{tpu_custom_call.1} parent=11 // pred_check_branch
          %422 = sbr.rel (%p420) target = $region28
        $region27: #{tpu_custom_call.1} parent=11 // pred_region
          _
        $region28: #{tpu_custom_call.1} parent=11 // pred_fallthru
          _
        // Predicated region
        $region29: #{tpu_custom_call.1} parent=11 // pred_check
          %p423 = pneg %p170
        $region30: #{tpu_custom_call.1} parent=11 // pred_check_branch
          %425 = sbr.rel (%p423) target = $region32
        $region31: #{tpu_custom_call.1} parent=11 // pred_region
          %427 = vsyncadd [#allocation8], 0
          %s428 = sshll.u32 %s5, 4
          %s429 = int_to_ptr.hbm [resolvable:$true] %s428
          %s430 = sshll.u32 [#allocation7], 4
          %s431 = int_to_ptr.vmem [resolvable:$true] %s430
          %436 = dma.hbm_to_vmem [thread:$0]  %s429, 256, %s431, [#allocation8], 64, 64, 4
        $region32: #{tpu_custom_call.1} parent=11 // pred_fallthru
          _
        // Predicated region
        $region33: #{tpu_custom_call.1} parent=11 // pred_check
          %p437 = pneg %p191
        $region34: #{tpu_custom_call.1} parent=11 // pred_check_branch
          %439 = sbr.rel (%p437) target = $region36
        $region35: #{tpu_custom_call.1} parent=11 // pred_region
          _
        $region36: #{tpu_custom_call.1} parent=11 // pred_fallthru
          _
        // Predicated region
        $region37: #{tpu_custom_call.1} parent=11 // pred_check
          %p440 = pneg %p212
        $region38: #{tpu_custom_call.1} parent=11 // pred_check_branch
          %442 = sbr.rel (%p440) target = $region40
        $region39: #{tpu_custom_call.1} parent=11 // pred_region
          %444 = vsyncadd [#allocation8], 0
          %s445 = sshll.u32 %s7, 4
          %s446 = int_to_ptr.hbm [resolvable:$true] %s445
          %s447 = sshll.u32 [#allocation9], 4
          %s448 = int_to_ptr.vmem [resolvable:$true] %s447
          %453 = dma.hbm_to_vmem [thread:$0]  %s446, 256, %s448, [#allocation8], 64, 64, 4
        $region40: #{tpu_custom_call.1} parent=11 // pred_fallthru
          _
        // Predicated region
        $region41: #{tpu_custom_call.1} parent=11 // pred_check
          %p454 = pneg %p233
        $region42: #{tpu_custom_call.1} parent=11 // pred_check_branch
          %456 = sbr.rel (%p454) target = $region44
        $region43: #{tpu_custom_call.1} parent=11 // pred_region
          _
        $region44: #{tpu_custom_call.1} parent=11 // pred_fallthru
          _
        // Predicated region
        $region45: #{tpu_custom_call.1} parent=11 // pred_check
          %p457 = pneg %p254
        $region46: #{tpu_custom_call.1} parent=11 // pred_check_branch
          %459 = sbr.rel (%p457) target = $region48
        $region47: #{tpu_custom_call.1} parent=11 // pred_region
          _
        $region48: #{tpu_custom_call.1} parent=11 // pred_fallthru
          _
        // Predicated region
        $region49: #{tpu_custom_call.1} parent=11 // pred_check
          %p460 = pneg %p275
        $region50: #{tpu_custom_call.1} parent=11 // pred_check_branch
          %462 = sbr.rel (%p460) target = $region52
        $region51: #{tpu_custom_call.1} parent=11 // pred_region
          _
        $region52: #{tpu_custom_call.1} parent=11 // pred_fallthru
          _
        // Predicated region
        $region53: #{tpu_custom_call.1} parent=11 // pred_check
          %p463 = pneg %p296
        $region54: #{tpu_custom_call.1} parent=11 // pred_check_branch
          %465 = sbr.rel (%p463) target = $region56
        $region55: #{tpu_custom_call.1} parent=11 // pred_region
          %467 = vsyncadd [#allocation11], 0
          %s468 = sshll.u32 %s11, 4
          %s469 = int_to_ptr.hbm [resolvable:$true] %s468
          %s470 = sshll.u32 [#allocation10], 4
          %s471 = int_to_ptr.vmem [resolvable:$true] %s470
          %476 = dma.hbm_to_vmem [thread:$0]  %s469, 256, %s471, [#allocation11], 64, 64, 4
        $region56: #{tpu_custom_call.1} parent=11 // pred_fallthru
          _
        // Predicated region
        $region57: #{tpu_custom_call.1} parent=11 // pred_check
          %p477 = pneg %p317
        $region58: #{tpu_custom_call.1} parent=11 // pred_check_branch
          %479 = sbr.rel (%p477) target = $region60
        $region59: #{tpu_custom_call.1} parent=11 // pred_region
          _
        $region60: #{tpu_custom_call.1} parent=11 // pred_fallthru
          _
        // Predicated region
        $region61: #{tpu_custom_call.1} parent=11 // pred_check
          %p480 = pneg %p338
        $region62: #{tpu_custom_call.1} parent=11 // pred_check_branch
          %482 = sbr.rel (%p480) target = $region64
        $region63: #{tpu_custom_call.1} parent=11 // pred_region
          _
        $region64: #{tpu_custom_call.1} parent=11 // pred_fallthru
          _
        // Predicated region
        $region65: #{tpu_custom_call.1} parent=11 // pred_check
          %p483 = pneg %p359
        $region66: #{tpu_custom_call.1} parent=11 // pred_check_branch
          %485 = sbr.rel (%p483) target = $region68
        $region67: #{tpu_custom_call.1} parent=11 // pred_region
          _
        $region68: #{tpu_custom_call.1} parent=11 // pred_fallthru
          _
      $region12: #{tpu_custom_call.1} parent=5 // pred_fallthru
        _
      %p486 = scmp.lt.s32.totalorder %s27, 4
      // Predicated region
      $region69: #{tpu_custom_call.1} parent=5 // pred_check
        %p487 = pneg %p486
      $region70: #{tpu_custom_call.1} parent=5 // pred_check_branch
        %489 = sbr.rel (%p487) target = $region72
      $region71: #{tpu_custom_call.1} parent=5 // pred_region
        // Predicated region
        $region73: #{tpu_custom_call.1} parent=71 // pred_check
          %p490 = pneg %p59
        $region74: #{tpu_custom_call.1} parent=71 // pred_check_branch
          %492 = sbr.rel (%p490) target = $region76
        $region75: #{tpu_custom_call.1} parent=71 // pred_region
          %p493 = scmp.lt.s32.totalorder %s34, 1
          %s494 = scalar_select %p493, %s34, 1
          %s495 = smul.addr %s494, 2
          %s496 = smul.addr %s495, 8
          %s497 = scalar_lea.vmem %s0, %s496
        $region76: #{tpu_custom_call.1} parent=71 // pred_fallthru
          _
      $region72: #{tpu_custom_call.1} parent=5 // pred_fallthru
        _
      %p498 = scmp.le.s32.totalorder 1, %s27
      %p499 = scmp.lt.s32.totalorder %s27, 5
      %p500 = pnand %p498, %p499
      %p501 = pneg %p500
      // Predicated region
      $region77: #{tpu_custom_call.1} parent=5 // pred_check
        _
      $region78: #{tpu_custom_call.1} parent=5 // pred_check_branch
        %503 = sbr.rel (%p500) target = $region80
      $region79: #{tpu_custom_call.1} parent=5 // pred_region
        %s504 = ssub.s32 %s27, 1
        // Predicated region
        $region81: #{tpu_custom_call.1} parent=79 // pred_check
          %p505 = pneg %p86
        $region82: #{tpu_custom_call.1} parent=79 // pred_check_branch
          %507 = sbr.rel (%p505) target = $region84
        $region83: #{tpu_custom_call.1} parent=79 // pred_region
          %509 = dma.done [#allocation5], 16
        $region84: #{tpu_custom_call.1} parent=79 // pred_fallthru
          _
        // Predicated region
        $region85: #{tpu_custom_call.1} parent=79 // pred_check
          %p510 = pneg %p170
        $region86: #{tpu_custom_call.1} parent=79 // pred_check_branch
          %512 = sbr.rel (%p510) target = $region88
        $region87: #{tpu_custom_call.1} parent=79 // pred_region
          %514 = dma.done [#allocation8], 256
        $region88: #{tpu_custom_call.1} parent=79 // pred_fallthru
          _
        // Predicated region
        $region89: #{tpu_custom_call.1} parent=79 // pred_check
          %p515 = pneg %p212
        $region90: #{tpu_custom_call.1} parent=79 // pred_check_branch
          %517 = sbr.rel (%p515) target = $region92
        $region91: #{tpu_custom_call.1} parent=79 // pred_region
          %519 = dma.done [#allocation8], 256
        $region92: #{tpu_custom_call.1} parent=79 // pred_fallthru
          _
        // Predicated region
        $region93: #{tpu_custom_call.1} parent=79 // pred_check
          %p520 = pneg %p296
        $region94: #{tpu_custom_call.1} parent=79 // pred_check_branch
          %522 = sbr.rel (%p520) target = $region96
        $region95: #{tpu_custom_call.1} parent=79 // pred_region
          %524 = dma.done [#allocation11], 256
        $region96: #{tpu_custom_call.1} parent=79 // pred_fallthru
          _
        %p525 = scmp.lt.s32.totalorder %s36, 1
        %s526 = scalar_select %p525, %s36, 1
        %s527 = smul.addr %s526, 2
        %s528 = smul.addr %s527, 8
        %s529 = scalar_lea.vmem %s0, %s528
        %p530 = pneg %p65
        %p531 = pneg %p62
        %p532 = pneg %p86
        %p533 = pneg %p83
        %p534 = pneg %p107
        %p535 = pneg %p104
        %p536 = pneg %p128
        %p537 = pneg %p125
        %p538 = pneg %p149
        %p539 = pneg %p146
        %p540 = pneg %p170
        %p541 = pneg %p167
        %p542 = pneg %p191
        %p543 = pneg %p188
        %p544 = pneg %p212
        %p545 = pneg %p209
        %p546 = pneg %p233
        %p547 = pneg %p230
        %p548 = pneg %p254
        %p549 = pneg %p251
        %p550 = pneg %p275
        %p551 = pneg %p272
        %p552 = pneg %p296
        %p553 = pneg %p293
        %p554 = pneg %p317
        %p555 = pneg %p314
        %p556 = pneg %p338
        %p557 = pneg %p335
        %p558 = pneg %p359
        %p559 = pneg %p356
        %p560 = pneg %p387
        %p561 = pneg %p384
        %s562 = sand.u32 %s374, 1
        %s563 = scalar_lea.sflag [#allocation6], %s562
        %s564 = sand.u32 %s374, 1
        %s565 = smul.addr %s564, 8
        %s566 = scalar_lea.vmem [#allocation12], %s565
        %p567 = scmp.lt.s32.totalorder %s36, 1
        %s568 = scalar_select %p567, %s36, 1
        %s569 = smul.addr %s568, 2
        %s570 = smul.addr %s569, 8
        %s571 = scalar_lea.vmem %s0, %s570
        %p573 = scmp.eq.s32.totalorder %s37, 0
        // Predicated region
        $region97: #{tpu_custom_call.1} parent=79 // pred_check
          %p574 = pneg %p573
        $region98: #{tpu_custom_call.1} parent=79 // pred_check_branch
          %576 = sbr.rel (%p574) target = $region100
        $region99: #{tpu_custom_call.1} parent=79 // pred_region
          %v577 = vld [vmem:[%s571] sm:$0xff]
          %v578 = vld [vmem:[%s571 + $0x8] sm:$0xff]
          %v579 = vld [vmem:[#allocation4] sm:$0x1]
          %v580 = vld [vmem:[%s2] sm:$0x1]
          %vm581 = vcmask 261120
          %v582 = vsel %vm581, %v577, 0.0
          %583 = vadd.xlane.f32.xlu0 %v582
          %v584 = vpop.xlane.xlu0 %583
          %v585 = vsel %vm581, %v578, 0.0
          %586 = vadd.xlane.f32.xlu0 %v585
          %v587 = vpop.xlane.xlu0 %586
          %v588 = vrcp.pop 32.0
          %v589 = vmul.f32 32.0, %v588
          %v590 = vsub.f32 1.0, %v589
          %v591 = vmul.f32 %v588, %v590
          %v592 = vadd.f32 %v588, %v591
          %vm593 = vweird.f32 %v588
          %v594 = vsel %vm593, %v588, %v592
          %v595 = vmul.f32 %v584, %v594
          %v596 = vmul.f32 %v587, %v594
          %v597 = vsub.f32 %v577, %v595
          %v598 = vsub.f32 %v578, %v596
          %v599 = vmul.f32 %v597, %v597
          %v600 = vmul.f32 %v598, %v598
          %v601 = vsel %vm581, %v599, 0.0
          %602 = vadd.xlane.f32.xlu0 %v601
          %v603 = vpop.xlane.xlu0 %602
          %v604 = vsel %vm581, %v600, 0.0
          %605 = vadd.xlane.f32.xlu0 %v604
          %v606 = vpop.xlane.xlu0 %605
          %v607 = vmul.f32 %v603, %v594
          %v608 = vmul.f32 %v606, %v594
          %v609 = vadd.f32 %v607, 1e-05
          %v610 = vadd.f32 %v608, 1e-05
          %v611 = vrsqrt.pop %v609
          %v612 = vmul.f32 %v611, %v609
          %v613 = vmul.f32 %v612, %v611
          %v614 = vmul.f32 0.5, %v613
          %v615 = vsub.f32 1.5, %v614
          %v616 = vmul.f32 %v611, %v615
          %vm617 = vweird.f32 %v609
          %vm618 = vweird.f32 %v611
          %vm619 = vmor %vm617, %vm618
          %v620 = vsel %vm619, %v611, %v616
          %v621 = vrsqrt.pop %v610
          %v622 = vmul.f32 %v621, %v610
          %v623 = vmul.f32 %v622, %v621
          %v624 = vmul.f32 0.5, %v623
          %v625 = vsub.f32 1.5, %v624
          %v626 = vmul.f32 %v621, %v625
          %vm627 = vweird.f32 %v610
          %vm628 = vweird.f32 %v621
          %vm629 = vmor %vm627, %vm628
          %v630 = vsel %vm629, %v621, %v626
          %v631 = vmul.f32 %v597, %v620
          %v632 = vmul.f32 %v598, %v630
          %v634 = vperm.slane %v579, 0
          %v636 = vmul.f32 %v631, %v634
          %v637 = vmul.f32 %v632, %v634
          %v639 = vperm.slane %v580, 0
          %v641 = vadd.f32 %v636, %v639
          %v642 = vadd.f32 %v637, %v639
          %v643 = vpack.c.bf16 %v641, %v641
          %v644 = vpack.c.bf16 %v642, %v642
          %vm645 = vcmask 257024
          %646 = vst.msk [vmem:[#allocation2] sm:$0xf] %vm645, %v643
          %647 = vst.msk [vmem:[#allocation2 + $0x4] sm:$0xf] %vm645, %v644
          %v648 = vld [vmem:[#allocation7] sm:$0xf]
          %v649 = vld [vmem:[#allocation7 + $0x4] sm:$0xf]
          %v650 = vld [vmem:[#allocation7 + $0x8] sm:$0xf]
          %v651 = vld [vmem:[#allocation7 + $0xc] sm:$0xf]
          %v652 = vld [vmem:[%s6] sm:$0x1]
          %v654 = vperm.slane %v652, 0
          %v658 = vunpack.c.l.b16 %v643
          %v659 = vunpack.c.l.b16 %v644
          %v660 = vpack.c.b16 %v659, %v658
          %v665 = vunpack.c.l.b16 %v648
          %v666 = vunpack.c.l.b16 %v649
          %v667 = vunpack.c.l.b16 %v650
          %v668 = vunpack.c.l.b16 %v651
          %v669 = vpack.c.b16 %v666, %v665
          %v670 = vpack.c.b16 %v668, %v667
          %v674 = vsel %vm581, %v660, 0
          %676 = vmatpush.bf16.msra.mxu0 0
          %677 = vmatpush.bf16.msra.mxu0 0
          %678 = vmatpush.bf16.msra.mxu0 0
          %679 = vmatpush.bf16.msra.mxu0 0
          %680 = vmatpush.bf16.msra.mxu0 0
          %681 = vmatpush.bf16.msra.mxu0 0
          %682 = vmatpush.bf16.msra.mxu0 %v670
          %683 = vmatpush.bf16.msra.mxu0 %v669
          %684 = vmatmul.bf16.gmra.mxu0 %v674
          %v685 = vpop.f32.mrf.mxu0
          %v686 = vadd.f32 %v654, %v685
          %v687 = vpop.f32.mrf.mxu0
          %v688 = vadd.f32 %v654, %v687
          %689 = vdwg.mxu0
          %v690 = vpack.c.bf16 %v686, %v686
          %v691 = vpack.c.bf16 %v688, %v688
          %vm692 = vcmask 519168
          %693 = vst.msk [vmem:[#allocation3] sm:$0xf] %vm692, %v690
          %694 = vst.msk [vmem:[#allocation3 + $0x4] sm:$0xf] %vm692, %v691
        $region100: #{tpu_custom_call.1} parent=79 // pred_fallthru
          _
        %s695 = smul.u32 %s37, 8
        %s696 = scalar_lea.vmem %s571, %s695
        %v697 = vld [vmem:[%s696] sm:$0xff]
        %s698 = sshra.s32 %s695, 3
        %s699 = sand.u32 %s695, 7
        %s700 = smul.addr %s698, 4
        %s701 = scalar_lea.vmem [#allocation2], %s700
        %v702 = vld [vmem:[%s701] sm:$0xf]
        %v703 = vld [vmem:[%s3] sm:$0xf]
        %v704 = vld [vmem:[%s3 + $0x4] sm:$0xf]
        %v705 = vld [vmem:[%s3 + $0x8] sm:$0xf]
        %v706 = vld [vmem:[%s3 + $0xc] sm:$0xf]
        %v707 = vld [vmem:[%s4] sm:$0x1]
        %v709 = vperm.slane %v707, 0
        %v715 = vunpack.c.l.b16 %v703
        %v716 = vunpack.c.l.b16 %v704
        %v717 = vunpack.c.l.b16 %v705
        %v718 = vunpack.c.l.b16 %v706
        %v719 = vpack.c.b16 %v716, %v715
        %v720 = vpack.c.b16 %v718, %v717
        %vm723 = vcmask 261120
        %v725 = vsel %vm723, %v702, 0
        %727 = vmatpush.bf16.msra.mxu0 0
        %728 = vmatpush.bf16.msra.mxu0 0
        %729 = vmatpush.bf16.msra.mxu0 0
        %730 = vmatpush.bf16.msra.mxu0 0
        %731 = vmatpush.bf16.msra.mxu0 0
        %732 = vmatpush.bf16.msra.mxu0 0
        %733 = vmatpush.bf16.msra.mxu0 %v720
        %734 = vmatpush.bf16.msra.mxu0 %v719
        %735 = vmatmul.bf16.gmra.mxu0 %v725
        %v736 = vpop.f32.mrf.mxu0
        %v737 = vadd.f32 %v709, %v736
        %v738 = vpop.f32.mrf.mxu0
        %739 = vdwg.mxu0
        %v740 = vmul.f32 %v737, 0.35355338
        %v741 = vpack.c.bf16 %v740, %v740
        %v742 = vld [vmem:[#allocation3] sm:$0xf]
        %v743 = vld [vmem:[#allocation3 + $0x4] sm:$0xf]
        %v746 = vunpack.c.l.b16 %v742
        %v747 = vunpack.c.l.b16 %v743
        %v748 = vpack.c.b16 %v747, %v746
        %vm749 = vcmask 64512
        %v751 = vsel %vm749, %v741, 0
        %v754 = vsel %vm749, %v748, 0
        %756 = vmatpush.bf16.xpose.msra.mxu0 0
        %757 = vmatpush.bf16.xpose.msra.mxu0 0
        %758 = vmatpush.bf16.xpose.msra.mxu0 0
        %759 = vmatpush.bf16.xpose.msra.mxu0 0
        %760 = vmatpush.bf16.xpose.msra.mxu0 0
        %761 = vmatpush.bf16.xpose.msra.mxu0 0
        %762 = vmatpush.bf16.xpose.msra.mxu0 0
        %763 = vmatpush.bf16.xpose.msra.mxu0 %v754
        %764 = vmatmul.bf16.gmra.mxu0 %v751
        %v765 = vpop.f32.mrf.mxu0
        %v766 = vadd.f32 0.0, %v765
        %v767 = vpop.f32.mrf.mxu0
        %768 = vdwg.mxu0
        %vm769 = vcmask 130048
        %v770 = vsel %vm769, %v766, -inf
        %771 = vmax.xlane.f32.xlu0 %v770
        %v772 = vpop.xlane.xlu0 %771
        %v773 = vsub.f32 %v766, %v772
        %v774 = vmul.f32 %v773, 1.442695
        %v775 = vpow.pop %v774
        %v776 = vsel %vm769, %v775, 0.0
        %777 = vadd.xlane.f32.xlu0 %v776
        %v778 = vpop.xlane.xlu0 %777
        %v779 = vpack.c.bf16 %v775, %v775
        %780 = vrot.lane.b32.xlu0 %v748, 96
        %v781 = vpop.permute.xlu0 %780
        %v784 = vsel %vm769, %v779, 0
        %786 = vmatpush.bf16.msra.mxu0 0
        %787 = vmatpush.bf16.msra.mxu0 0
        %788 = vmatpush.bf16.msra.mxu0 0
        %789 = vmatpush.bf16.msra.mxu0 0
        %790 = vmatpush.bf16.msra.mxu0 0
        %791 = vmatpush.bf16.msra.mxu0 0
        %792 = vmatpush.bf16.msra.mxu0 0
        %793 = vmatpush.bf16.msra.mxu0 %v781
        %794 = vmatmul.bf16.gmra.mxu0 %v784
        %v795 = vpop.f32.mrf.mxu0
        %v796 = vadd.f32 0.0, %v795
        %v797 = vpop.f32.mrf.mxu0
        %798 = vdwg.mxu0
        %v799 = vrcp.pop %v778
        %v800 = vmul.f32 %v796, %v799
        %v801 = vpack.c.bf16 %v800, %v800
        %v803 = vunpack.c.l.b16 %v741
        %v804 = vpack.c.b16 %v803, %v803
        %805 = vrot.lane.b32.xlu0 %v804, 120
        %v806 = vpop.permute.xlu0 %805
        %807 = vrot.lane.b32.xlu0 %v748, 120
        %v808 = vpop.permute.xlu0 %807
        %v810 = vsel %vm749, %v806, 0
        %v813 = vsel %vm749, %v808, 0
        %815 = vmatpush.bf16.xpose.msra.mxu0 0
        %816 = vmatpush.bf16.xpose.msra.mxu0 0
        %817 = vmatpush.bf16.xpose.msra.mxu0 0
        %818 = vmatpush.bf16.xpose.msra.mxu0 0
        %819 = vmatpush.bf16.xpose.msra.mxu0 0
        %820 = vmatpush.bf16.xpose.msra.mxu0 0
        %821 = vmatpush.bf16.xpose.msra.mxu0 0
        %822 = vmatpush.bf16.xpose.msra.mxu0 %v813
        %823 = vmatmul.bf16.gmra.mxu0 %v810
        %v824 = vpop.f32.mrf.mxu0
        %v825 = vadd.f32 0.0, %v824
        %v826 = vpop.f32.mrf.mxu0
        %827 = vdwg.mxu0
        %v828 = vsel %vm769, %v825, -inf
        %829 = vmax.xlane.f32.xlu0 %v828
        %v830 = vpop.xlane.xlu0 %829
        %v831 = vsub.f32 %v825, %v830
        %v832 = vmul.f32 %v831, 1.442695
        %v833 = vpow.pop %v832
        %v834 = vsel %vm769, %v833, 0.0
        %835 = vadd.xlane.f32.xlu0 %v834
        %v836 = vpop.xlane.xlu0 %835
        %v837 = vpack.c.bf16 %v833, %v833
        %838 = vrot.lane.b32.xlu0 %v748, 88
        %v839 = vpop.permute.xlu0 %838
        %v842 = vsel %vm769, %v837, 0
        %844 = vmatpush.bf16.msra.mxu0 0
        %845 = vmatpush.bf16.msra.mxu0 0
        %846 = vmatpush.bf16.msra.mxu0 0
        %847 = vmatpush.bf16.msra.mxu0 0
        %848 = vmatpush.bf16.msra.mxu0 0
        %849 = vmatpush.bf16.msra.mxu0 0
        %850 = vmatpush.bf16.msra.mxu0 0
        %851 = vmatpush.bf16.msra.mxu0 %v839
        %852 = vmatmul.bf16.gmra.mxu0 %v842
        %v853 = vpop.f32.mrf.mxu0
        %v854 = vadd.f32 0.0, %v853
        %v855 = vpop.f32.mrf.mxu0
        %856 = vdwg.mxu0
        %v857 = vrcp.pop %v836
        %v858 = vmul.f32 %v854, %v857
        %v859 = vpack.c.bf16 %v858, %v858
        %860 = vrot.lane.b32.xlu0 %v804, 112
        %v861 = vpop.permute.xlu0 %860
        %862 = vrot.lane.b32.xlu0 %v748, 112
        %v863 = vpop.permute.xlu0 %862
        %v865 = vsel %vm749, %v861, 0
        %v868 = vsel %vm749, %v863, 0
        %870 = vmatpush.bf16.xpose.msra.mxu0 0
        %871 = vmatpush.bf16.xpose.msra.mxu0 0
        %872 = vmatpush.bf16.xpose.msra.mxu0 0
        %873 = vmatpush.bf16.xpose.msra.mxu0 0
        %874 = vmatpush.bf16.xpose.msra.mxu0 0
        %875 = vmatpush.bf16.xpose.msra.mxu0 0
        %876 = vmatpush.bf16.xpose.msra.mxu0 0
        %877 = vmatpush.bf16.xpose.msra.mxu0 %v868
        %878 = vmatmul.bf16.gmra.mxu0 %v865
        %v879 = vpop.f32.mrf.mxu0
        %v880 = vadd.f32 0.0, %v879
        %v881 = vpop.f32.mrf.mxu0
        %882 = vdwg.mxu0
        %v883 = vsel %vm769, %v880, -inf
        %884 = vmax.xlane.f32.xlu0 %v883
        %v885 = vpop.xlane.xlu0 %884
        %v886 = vsub.f32 %v880, %v885
        %v887 = vmul.f32 %v886, 1.442695
        %v888 = vpow.pop %v887
        %v889 = vsel %vm769, %v888, 0.0
        %890 = vadd.xlane.f32.xlu0 %v889
        %v891 = vpop.xlane.xlu0 %890
        %v892 = vpack.c.bf16 %v888, %v888
        %893 = vrot.lane.b32.xlu0 %v748, 80
        %v894 = vpop.permute.xlu0 %893
        %v897 = vsel %vm769, %v892, 0
        %899 = vmatpush.bf16.msra.mxu0 0
        %900 = vmatpush.bf16.msra.mxu0 0
        %901 = vmatpush.bf16.msra.mxu0 0
        %902 = vmatpush.bf16.msra.mxu0 0
        %903 = vmatpush.bf16.msra.mxu0 0
        %904 = vmatpush.bf16.msra.mxu0 0
        %905 = vmatpush.bf16.msra.mxu0 0
        %906 = vmatpush.bf16.msra.mxu0 %v894
        %907 = vmatmul.bf16.gmra.mxu0 %v897
        %v908 = vpop.f32.mrf.mxu0
        %v909 = vadd.f32 0.0, %v908
        %v910 = vpop.f32.mrf.mxu0
        %911 = vdwg.mxu0
        %v912 = vrcp.pop %v891
        %v913 = vmul.f32 %v909, %v912
        %v914 = vpack.c.bf16 %v913, %v913
        %915 = vrot.lane.b32.xlu0 %v804, 104
        %v916 = vpop.permute.xlu0 %915
        %917 = vrot.lane.b32.xlu0 %v748, 104
        %v918 = vpop.permute.xlu0 %917
        %v920 = vsel %vm749, %v916, 0
        %v923 = vsel %vm749, %v918, 0
        %925 = vmatpush.bf16.xpose.msra.mxu0 0
        %926 = vmatpush.bf16.xpose.msra.mxu0 0
        %927 = vmatpush.bf16.xpose.msra.mxu0 0
        %928 = vmatpush.bf16.xpose.msra.mxu0 0
        %929 = vmatpush.bf16.xpose.msra.mxu0 0
        %930 = vmatpush.bf16.xpose.msra.mxu0 0
        %931 = vmatpush.bf16.xpose.msra.mxu0 0
        %932 = vmatpush.bf16.xpose.msra.mxu0 %v923
        %933 = vmatmul.bf16.gmra.mxu0 %v920
        %v934 = vpop.f32.mrf.mxu0
        %v935 = vadd.f32 0.0, %v934
        %v936 = vpop.f32.mrf.mxu0
        %937 = vdwg.mxu0
        %v938 = vsel %vm769, %v935, -inf
        %939 = vmax.xlane.f32.xlu0 %v938
        %v940 = vpop.xlane.xlu0 %939
        %v941 = vsub.f32 %v935, %v940
        %v942 = vmul.f32 %v941, 1.442695
        %v943 = vpow.pop %v942
        %v944 = vsel %vm769, %v943, 0.0
        %945 = vadd.xlane.f32.xlu0 %v944
        %v946 = vpop.xlane.xlu0 %945
        %v947 = vpack.c.bf16 %v943, %v943
        %948 = vrot.lane.b32.xlu0 %v748, 72
        %v949 = vpop.permute.xlu0 %948
        %v952 = vsel %vm769, %v947, 0
        %954 = vmatpush.bf16.msra.mxu0 0
        %955 = vmatpush.bf16.msra.mxu0 0
        %956 = vmatpush.bf16.msra.mxu0 0
        %957 = vmatpush.bf16.msra.mxu0 0
        %958 = vmatpush.bf16.msra.mxu0 0
        %959 = vmatpush.bf16.msra.mxu0 0
        %960 = vmatpush.bf16.msra.mxu0 0
        %961 = vmatpush.bf16.msra.mxu0 %v949
        %962 = vmatmul.bf16.gmra.mxu0 %v952
        %v963 = vpop.f32.mrf.mxu0
        %v964 = vadd.f32 0.0, %v963
        %v965 = vpop.f32.mrf.mxu0
        %966 = vdwg.mxu0
        %v967 = vrcp.pop %v946
        %v968 = vmul.f32 %v964, %v967
        %v969 = vpack.c.bf16 %v968, %v968
        %v971 = vunpack.c.l.b16 %v859
        %v972 = vpack.c.b16 %v971, %v971
        %973 = vrot.lane.b32.xlu0 %v972, 8
        %v974 = vpop.permute.xlu0 %973
        %v976 = vunpack.c.l.b16 %v914
        %v977 = vpack.c.b16 %v976, %v976
        %978 = vrot.lane.b32.xlu0 %v977, 16
        %v979 = vpop.permute.xlu0 %978
        %v981 = vunpack.c.l.b16 %v969
        %v982 = vpack.c.b16 %v981, %v981
        %983 = vrot.lane.b32.xlu0 %v982, 24
        %v984 = vpop.permute.xlu0 %983
        %v987 = vsel %vm749, %v801, %v974
        %v989 = vsel %vm769, %v987, %v979
        %vm990 = vcmask 195584
        %v992 = vsel %vm990, %v989, %v984
        %v993 = vld [vmem:[#allocation9] sm:$0xf]
        %v994 = vld [vmem:[#allocation9 + $0x4] sm:$0xf]
        %v995 = vld [vmem:[#allocation9 + $0x8] sm:$0xf]
        %v996 = vld [vmem:[#allocation9 + $0xc] sm:$0xf]
        %v997 = vld [vmem:[%s8] sm:$0x1]
        %v999 = vperm.slane %v997, 0
        %v1005 = vunpack.c.l.b16 %v993
        %v1006 = vunpack.c.l.b16 %v994
        %v1007 = vunpack.c.l.b16 %v995
        %v1008 = vunpack.c.l.b16 %v996
        %v1009 = vpack.c.b16 %v1006, %v1005
        %v1010 = vpack.c.b16 %v1008, %v1007
        %v1013 = vsel %vm723, %v992, 0
        %1015 = vmatpush.bf16.msra.mxu0 0
        %1016 = vmatpush.bf16.msra.mxu0 0
        %1017 = vmatpush.bf16.msra.mxu0 0
        %1018 = vmatpush.bf16.msra.mxu0 0
        %1019 = vmatpush.bf16.msra.mxu0 0
        %1020 = vmatpush.bf16.msra.mxu0 0
        %1021 = vmatpush.bf16.msra.mxu0 %v1010
        %1022 = vmatpush.bf16.msra.mxu0 %v1009
        %1023 = vmatmul.bf16.gmra.mxu0 %v1013
        %v1024 = vpop.f32.mrf.mxu0
        %v1025 = vadd.f32 %v999, %v1024
        %v1026 = vpop.f32.mrf.mxu0
        %1027 = vdwg.mxu0
        %v1028 = vadd.f32 %v1025, %v697
        %v1029 = vld [vmem:[%s9] sm:$0x1]
        %v1030 = vld [vmem:[%s10] sm:$0x1]
        %v1031 = vsel %vm723, %v1028, 0.0
        %1032 = vadd.xlane.f32.xlu0 %v1031
        %v1033 = vpop.xlane.xlu0 %1032
        %v1034 = vrcp.pop 32.0
        %v1035 = vmul.f32 32.0, %v1034
        %v1036 = vsub.f32 1.0, %v1035
        %v1037 = vmul.f32 %v1034, %v1036
        %v1038 = vadd.f32 %v1034, %v1037
        %vm1039 = vweird.f32 %v1034
        %v1040 = vsel %vm1039, %v1034, %v1038
        %v1041 = vmul.f32 %v1033, %v1040
        %v1042 = vsub.f32 %v1028, %v1041
        %v1043 = vmul.f32 %v1042, %v1042
        %v1044 = vsel %vm723, %v1043, 0.0
        %1045 = vadd.xlane.f32.xlu0 %v1044
        %v1046 = vpop.xlane.xlu0 %1045
        %v1047 = vmul.f32 %v1046, %v1040
        %v1048 = vadd.f32 %v1047, 1e-05
        %v1049 = vrsqrt.pop %v1048
        %v1050 = vmul.f32 %v1049, %v1048
        %v1051 = vmul.f32 %v1050, %v1049
        %v1052 = vmul.f32 0.5, %v1051
        %v1053 = vsub.f32 1.5, %v1052
        %v1054 = vmul.f32 %v1049, %v1053
        %vm1055 = vweird.f32 %v1048
        %vm1056 = vweird.f32 %v1049
        %vm1057 = vmor %vm1055, %vm1056
        %v1058 = vsel %vm1057, %v1049, %v1054
        %v1059 = vmul.f32 %v1042, %v1058
        %v1061 = vperm.slane %v1029, 0
        %v1063 = vmul.f32 %v1059, %v1061
        %v1065 = vperm.slane %v1030, 0
        %v1067 = vadd.f32 %v1063, %v1065
        %v1068 = vpack.c.bf16 %v1067, %v1067
        %v1069 = vld [vmem:[#allocation10] sm:$0xf]
        %v1070 = vld [vmem:[#allocation10 + $0x4] sm:$0xf]
        %v1071 = vld [vmem:[#allocation10 + $0x8] sm:$0xf]
        %v1072 = vld [vmem:[#allocation10 + $0xc] sm:$0xf]
        %v1073 = vld [vmem:[%s12] sm:$0x1]
        %v1075 = vperm.slane %v1073, 0
        %v1081 = vunpack.c.l.b16 %v1069
        %v1082 = vunpack.c.l.b16 %v1070
        %v1083 = vunpack.c.l.b16 %v1071
        %v1084 = vunpack.c.l.b16 %v1072
        %v1085 = vpack.c.b16 %v1082, %v1081
        %v1086 = vpack.c.b16 %v1084, %v1083
        %v1090 = vsel %vm723, %v1068, 0
        %1092 = vmatpush.bf16.msra.mxu0 0
        %1093 = vmatpush.bf16.msra.mxu0 0
        %1094 = vmatpush.bf16.msra.mxu0 0
        %1095 = vmatpush.bf16.msra.mxu0 0
        %1096 = vmatpush.bf16.msra.mxu0 0
        %1097 = vmatpush.bf16.msra.mxu0 0
        %1098 = vmatpush.bf16.msra.mxu0 %v1086
        %1099 = vmatpush.bf16.msra.mxu0 %v1085
        %1100 = vmatmul.bf16.gmra.mxu0 %v1090
        %v1101 = vpop.f32.mrf.mxu0
        %v1102 = vadd.f32 %v1075, %v1101
        %v1103 = vpop.f32.mrf.mxu0
        %1104 = vdwg.mxu0
        %v1105 = vmul.f32 %v1102, 0.5
        %v1106 = vmul.f32 %v1102, 0.70710677
        %v1107 = vmul.f32 %v1106, %v1106
        %v1108 = vmin.f32 16.0, %v1107
        %v1109 = vmul.f32 %v1108, 2.1237322e-06
        %v1110 = vadd.f32 %v1109, 0.00028619796
        %v1111 = vmul.f32 %v1108, %v1110
        %v1112 = vadd.f32 %v1111, 0.0036580483
        %v1113 = vmul.f32 %v1108, %v1112
        %v1114 = vadd.f32 %v1113, 0.05243302
        %v1115 = vmul.f32 %v1108, %v1114
        %v1116 = vadd.f32 %v1115, 0.18741608
        %v1117 = vmul.f32 %v1108, %v1116
        %v1118 = vadd.f32 %v1117, 1.1283791
        %v1119 = vmul.f32 %v1106, %v1118
        %v1120 = vmul.f32 %v1108, 3.8918573e-05
        %v1121 = vadd.f32 %v1120, 0.001143296
        %v1122 = vmul.f32 %v1108, %v1121
        %v1123 = vadd.f32 %v1122, 0.014752088
        %v1124 = vmul.f32 %v1108, %v1123
        %v1125 = vadd.f32 %v1124, 0.112945676
        %v1126 = vmul.f32 %v1108, %v1125
        %v1127 = vadd.f32 %v1126, 0.4994258
        %v1128 = vmul.f32 %v1108, %v1127
        %v1129 = vadd.f32 %v1128, 1.0
        %v1130 = vrcp.pop %v1129
        %v1131 = vmul.f32 %v1129, %v1130
        %v1132 = vsub.f32 1.0, %v1131
        %v1133 = vmul.f32 %v1130, %v1132
        %v1134 = vadd.f32 %v1130, %v1133
        %vm1135 = vweird.f32 %v1129
        %vm1136 = vweird.f32 %v1130
        %vm1137 = vmor %vm1135, %vm1136
        %v1138 = vsel %vm1137, %v1130, %v1134
        %v1139 = vand.u32 2147483647, %v1129
        %vm1140 = vcmp.eq.f32.partialorder %v1139, 8.507059e+37
        %v1141 = vand.u32 %v1129, 2147483648
        %v1142 = vor.u32 1.1754944e-38, %v1141
        %v1143 = vsel %vm1140, %v1142, %v1138
        %v1144 = vmul.f32 %v1119, %v1143
        %v1145 = vmin.f32 %v1144, 1.0
        %v1146 = vmax.f32 %v1145, -1.0
        %v1147 = vadd.f32 %v1146, 1.0
        %v1148 = vmul.f32 %v1105, %v1147
        %v1149 = vpack.c.bf16 %v1148, %v1148
        %v1150 = vld [vmem:[%s13] sm:$0xf]
        %v1151 = vld [vmem:[%s13 + $0x4] sm:$0xf]
        %v1152 = vld [vmem:[%s13 + $0x8] sm:$0xf]
        %v1153 = vld [vmem:[%s13 + $0xc] sm:$0xf]
        %v1154 = vld [vmem:[%s13 + $0x10] sm:$0xf]
        %v1155 = vld [vmem:[%s13 + $0x14] sm:$0xf]
        %v1156 = vld [vmem:[%s13 + $0x18] sm:$0xf]
        %v1157 = vld [vmem:[%s13 + $0x1c] sm:$0xf]
        %v1158 = vld [vmem:[%s14] sm:$0x1]
        %v1160 = vperm.slane %v1158, 0
        %v1170 = vunpack.c.l.b16 %v1150
        %v1171 = vunpack.c.l.b16 %v1151
        %v1172 = vunpack.c.l.b16 %v1152
        %v1173 = vunpack.c.l.b16 %v1153
        %v1174 = vunpack.c.l.b16 %v1154
        %v1175 = vunpack.c.l.b16 %v1155
        %v1176 = vunpack.c.l.b16 %v1156
        %v1177 = vunpack.c.l.b16 %v1157
        %v1178 = vpack.c.b16 %v1171, %v1170
        %v1179 = vpack.c.b16 %v1173, %v1172
        %v1180 = vpack.c.b16 %v1175, %v1174
        %v1181 = vpack.c.b16 %v1177, %v1176
        %vm1186 = vcmask 523264
        %v1188 = vsel %vm1186, %v1149, 0
        %1190 = vmatpush.bf16.msra.mxu0 0
        %1191 = vmatpush.bf16.msra.mxu0 0
        %1192 = vmatpush.bf16.msra.mxu0 0
        %1193 = vmatpush.bf16.msra.mxu0 0
        %1194 = vmatpush.bf16.msra.mxu0 %v1181
        %1195 = vmatpush.bf16.msra.mxu0 %v1180
        %1196 = vmatpush.bf16.msra.mxu0 %v1179
        %1197 = vmatpush.bf16.msra.mxu0 %v1178
        %1198 = vmatmul.bf16.gmra.mxu0 %v1188
        %v1199 = vpop.f32.mrf.mxu0
        %v1200 = vadd.f32 %v1160, %v1199
        %v1201 = vpop.f32.mrf.mxu0
        %1202 = vdwg.mxu0
        %v1203 = vadd.f32 %v1200, %v1028
        %1204 = vst.msk [vmem:[%s566] sm:$0xff] %vm723, %v1203
        %s1205 = sand.u32 %s374, 1
        %s1206 = scalar_lea.sflag [#allocation6], %s1205
        %s1207 = sand.u32 %s374, 1
        %s1208 = smul.addr %s1207, 8
        %s1209 = scalar_lea.vmem [#allocation12], %s1208
        // Predicated region
        $region101: #{tpu_custom_call.1} parent=79 // pred_check
          %p1210 = pneg %p384
        $region102: #{tpu_custom_call.1} parent=79 // pred_check_branch
          %1212 = sbr.rel (%p1210) target = $region104
        $region103: #{tpu_custom_call.1} parent=79 // pred_region
          %1214 = vsyncadd %s1206, 0
          %s1215 = smul.addr %s36, 2
          %s1216 = sadd.s32 %s37, %s1215
          %s1217 = smul.addr %s1216, 8
          %s1218 = scalar_lea.hbm %s15, %s1217
          %s1220 = sshll.u32 %s1209, 4
          %s1221 = int_to_ptr.vmem [resolvable:$true] %s1220
          %s1222 = sshll.u32 %s1218, 4
          %s1223 = int_to_ptr.hbm [resolvable:$true] %s1222
          %1225 = dma.vmem_to_hbm [thread:$0]  %s1221, 128, %s1223, %s1206
        $region104: #{tpu_custom_call.1} parent=79 // pred_fallthru
          _
      $region80: #{tpu_custom_call.1} parent=5 // pred_fallthru
        _
      %p1226 = scmp.le.s32.totalorder 2, %s27
      // Predicated region
      $region105: #{tpu_custom_call.1} parent=5 // pred_check
        %p1227 = pneg %p1226
      $region106: #{tpu_custom_call.1} parent=5 // pred_check_branch
        %1229 = sbr.rel (%p1227) target = $region108
      $region107: #{tpu_custom_call.1} parent=5 // pred_region
        %s1230 = ssub.s32 %s27, 2
        // Predicated region
        $region109: #{tpu_custom_call.1} parent=107 // pred_check
          %p1231 = pneg %p390
        $region110: #{tpu_custom_call.1} parent=107 // pred_check_branch
          %1233 = sbr.rel (%p1231) target = $region112
        $region111: #{tpu_custom_call.1} parent=107 // pred_region
          %s1234 = sand.u32 %s375, 1
          %s1235 = scalar_lea.sflag [#allocation6], %s1234
          %s1236 = sand.u32 %s375, 1
          %s1237 = smul.addr %s1236, 8
          %s1238 = scalar_lea.vmem [#allocation12], %s1237
          %1240 = dma.done %s1235, 128
        $region112: #{tpu_custom_call.1} parent=107 // pred_fallthru
          _
      $region108: #{tpu_custom_call.1} parent=5 // pred_fallthru
        _
    $region6: #{tpu_custom_call.1} parent=1 // loop_footer
      %s31 = sadd.s32 1, %s27
    $region7: #{tpu_custom_call.1} parent=1 // loop_footer_branch
      %26 = sbr.rel target = $region3
    $region8: #{tpu_custom_call.1} parent=1 // loop_exit
      _
    %1241 = vsyncpa [#allocation5], 1
    %s1242 = scalar_lea.sflag [#allocation5], 1
    %1243 = vsyncpa %s1242, 1
    %1244 = vsyncpa [#allocation8], 1
    %1245 = vsyncpa [#allocation11], 1
    %1246 = vsyncpa [#allocation6], 1
    %s1247 = scalar_lea.sflag [#allocation6], 1
    %1248 = vsyncpa %s1247, 1

// kernel: tpu_custom_call.1
$region0: #{tpu_custom_call.1}
  #allocation0 [shape = 'u32[]', space=smem, size = 0x4, offset = 0x4, fixed_abs, tag = 'smem constant byte address 0x4 - core index']
  #allocation1 [shape = 'u32[72,128]{1,0:T(1,128)}', space=vmem, size = 0x9000, scoped, tag = 'internal scratch']
  #allocation2 [shape = 'bf16[16,32]{1,0:T(8,128)(2,1)}', space=vmem, size = 0x1000, scoped, tag = 'scratch operand']
  #allocation3 [shape = 'bf16[16,64]{1,0:T(8,128)(2,1)}', space=vmem, size = 0x1000, scoped, tag = 'scratch operand']
  %s0 = inlined_call_operand.vmem [shape: f32[2,16,32], index: 0, kind: input, shape index: {}]
  %s1 = inlined_call_operand.hbm [shape: f32[1,32], index: 1, kind: input, shape index: {}]
  %s2 = inlined_call_operand.vmem [shape: f32[1,32], index: 2, kind: input, shape index: {}]
  %s3 = inlined_call_operand.vmem [shape: bf16[32,32], index: 3, kind: input, shape index: {}]
  %s4 = inlined_call_operand.vmem [shape: f32[1,32], index: 4, kind: input, shape index: {}]
  %s5 = inlined_call_operand.hbm [shape: bf16[32,64], index: 5, kind: input, shape index: {}]
  %s6 = inlined_call_operand.vmem [shape: f32[1,64], index: 6, kind: input, shape index: {}]
  %s7 = inlined_call_operand.hbm [shape: bf16[32,32], index: 7, kind: input, shape index: {}]
  %s8 = inlined_call_operand.vmem [shape: f32[1,32], index: 8, kind: input, shape index: {}]
  %s9 = inlined_call_operand.vmem [shape: f32[1,32], index: 9, kind: input, shape index: {}]
  %s10 = inlined_call_operand.vmem [shape: f32[1,32], index: 10, kind: input, shape index: {}]
  %s11 = inlined_call_operand.hbm [shape: bf16[32,64], index: 11, kind: input, shape index: {}]
  %s12 = inlined_call_operand.vmem [shape: f32[1,64], index: 12, kind: input, shape index: {}]
  %s13 = inlined_call_operand.vmem [shape: bf16[64,32], index: 13, kind: input, shape index: {}]
  %s14 = inlined_call_operand.vmem [shape: f32[1,32], index: 14, kind: input, shape index: {}]
  %s15 = inlined_call_operand.hbm [shape: f32[2,16,32], index: 15, kind: output, shape index: {}]
  %s16 = sld [smem:[#allocation0]]
  $region113: #{tpu_custom_call.1} parent=0
    _
  %s18 = ssub.s32 1, %s16
  %s19 = scalar_select 0, %s18, %s16
  $region1: #{tpu_custom_call.1} parent=0
    #allocation4 [shape = 'u8[512]{0}', space=vmem, size = 0x400, scoped, tag = 'input window, operand 1, single buffered']
    #allocation5 [shape = 's32[2]{0}', space=sflag, size = 0x8, scoped, tag = 'scoped memory for tpu_custom_call.1']
    #allocation6 [shape = 's32[2]{0}', space=sflag, size = 0x8, scoped, tag = 'scoped memory for tpu_custom_call.1']
    #allocation7 [shape = 'u8[8192]{0}', space=vmem, size = 0x2000, scoped, tag = 'input window, operand 5, single buffered']
    #allocation8 [shape = 's32[1]{0}', space=sflag, size = 0x4, scoped, tag = 'scoped memory for tpu_custom_call.1']
    #allocation9 [shape = 'u8[8192]{0}', space=vmem, size = 0x2000, scoped, tag = 'input window, operand 7, single buffered']
    #allocation10 [shape = 'u8[8192]{0}', space=vmem, size = 0x2000, scoped, tag = 'input window, operand 11, single buffered']
    #allocation11 [shape = 's32[1]{0}', space=sflag, size = 0x4, scoped, tag = 'scoped memory for tpu_custom_call.1']
    #allocation12 [shape = 'u8[8192]{0}', space=vmem, size = 0x2000, scoped, tag = 'output window, operand 0']
    %20 = vsyncpa [#allocation5], 0
    %21 = vsyncpa [#allocation8], 0
    %22 = vsyncpa [#allocation11], 0
    %23 = vsyncpa [#allocation6], 0
    %s24 = scalar_lea.sflag [#allocation6], 1
    %25 = vsyncpa %s24, 0
    loop: start=0, step=1, limit=6
    $region2: #{tpu_custom_call.1} parent=1 // loop_pre_header
      _
    $region3: #{tpu_custom_call.1} parent=1 // loop_header
      %s27 = sphi 0, %s31
      %p28 = scmp.ge.s32.totalorder %s27, 6
      %s34 = sphi 0, %s46
      %s35 = sphi 0, %s42
      %s36 = sphi 0, %s34
      %s37 = sphi 0, %s35
      %s38 = sphi 0, %s36
      %s39 = sphi 0, %s37
      %s49 = sphi 0, %s51
      %s52 = sphi 0, %s49
      %s53 = sphi 0, %s52
      %s69 = sphi 0, %s53
      %s73 = sphi 0, %s73
      %s75 = sphi 0, %s73
      %s76 = sphi 0, %s75
      %s90 = sphi 0, %s76
      %s94 = sphi 0, %s94
      %s96 = sphi 0, %s94
      %s97 = sphi 0, %s96
      %s111 = sphi 0, %s97
      %s115 = sphi 0, %s115
      %s117 = sphi 0, %s115
      %s118 = sphi 0, %s117
      %s132 = sphi 0, %s118
      %s136 = sphi 0, %s136
      %s138 = sphi 0, %s136
      %s139 = sphi 0, %s138
      %s153 = sphi 0, %s139
      %s157 = sphi 0, %s157
      %s159 = sphi 0, %s157
      %s160 = sphi 0, %s159
      %s174 = sphi 0, %s160
      %s178 = sphi 0, %s178
      %s180 = sphi 0, %s178
      %s181 = sphi 0, %s180
      %s195 = sphi 0, %s181
      %s199 = sphi 0, %s199
      %s201 = sphi 0, %s199
      %s202 = sphi 0, %s201
      %s216 = sphi 0, %s202
      %s220 = sphi 0, %s220
      %s222 = sphi 0, %s220
      %s223 = sphi 0, %s222
      %s237 = sphi 0, %s223
      %s241 = sphi 0, %s241
      %s243 = sphi 0, %s241
      %s244 = sphi 0, %s243
      %s258 = sphi 0, %s244
      %s262 = sphi 0, %s262
      %s264 = sphi 0, %s262
      %s265 = sphi 0, %s264
      %s279 = sphi 0, %s265
      %s283 = sphi 0, %s283
      %s285 = sphi 0, %s283
      %s286 = sphi 0, %s285
      %s300 = sphi 0, %s286
      %s304 = sphi 0, %s304
      %s306 = sphi 0, %s304
      %s307 = sphi 0, %s306
      %s321 = sphi 0, %s307
      %s325 = sphi 0, %s325
      %s327 = sphi 0, %s325
      %s328 = sphi 0, %s327
      %s342 = sphi 0, %s328
      %s346 = sphi 0, %s346
      %s348 = sphi 0, %s346
      %s349 = sphi 0, %s348
      %s363 = sphi 0, %s349
      %s371 = sphi 0, %s373
      %s374 = sphi 0, %s371
      %s375 = sphi 0, %s374
      %s391 = sphi 0, %s375
    $region4: #{tpu_custom_call.1} parent=1 // loop_header_branch
      %30 = sbr.rel (%p28) target = $region8
    $region5: #{tpu_custom_call.1} parent=1 // loop_body
      %s32 = ssub.s32 %s27, 1
      %s33 = ssub.s32 %s27, 2
      %s40 = sadd.s32 1, %s35
      %p41 = scmp.ge.s32.totalorder %s40, 2
      %s42 = scalar_select %p41, 0, %s40
      %s43 = sadd.s32 1, %s34
      %s44 = scalar_select %p41, %s43, %s34
      %p45 = scmp.ge.s32.totalorder %s44, 2
      %s46 = scalar_select %p45, 0, %s44
      %s47 = ssub.s32 %s34, %s46
      %p48 = scmp.eq.s32.totalorder %s47, 0
      %s50 = sadd.s32 %s49, 1
      %s51 = scalar_select %p48, %s49, %s50
      %p54 = pneg %p48
      %p55 = scmp.eq.s32.totalorder %s27, 3
      %p56 = por %p54, %p55
      %p57 = scmp.ne.s32.totalorder %s49, %s52
      %p58 = scmp.eq.s32.totalorder %s27, 0
      %p59 = por %p57, %p58
      %p60 = scmp.ne.s32.totalorder %s49, %s52
      %p61 = scmp.eq.s32.totalorder %s32, 3
      %p62 = por %p60, %p61
      %p63 = scmp.ne.s32.totalorder %s52, %s53
      %p64 = scmp.eq.s32.totalorder %s32, 0
      %p65 = por %p63, %p64
      %p66 = scmp.ne.s32.totalorder %s52, %s53
      %p67 = scmp.eq.s32.totalorder %s33, 3
      %p68 = por %p66, %p67
      %p70 = scmp.ne.s32.totalorder %s53, %s69
      %p71 = scmp.eq.s32.totalorder %s33, 0
      %p72 = por %p70, %p71
      %s74 = sadd.s32 %s73, 1
      %p77 = scmp.eq.s32.totalorder %s27, 3
      %p78 = scmp.ne.s32.totalorder %s73, %s75
      %p79 = scmp.eq.s32.totalorder %s27, 0
      %p80 = por %p78, %p79
      %p81 = scmp.ne.s32.totalorder %s73, %s75
      %p82 = scmp.eq.s32.totalorder %s32, 3
      %p83 = por %p81, %p82
      %p84 = scmp.ne.s32.totalorder %s75, %s76
      %p85 = scmp.eq.s32.totalorder %s32, 0
      %p86 = por %p84, %p85
      %p87 = scmp.ne.s32.totalorder %s75, %s76
      %p88 = scmp.eq.s32.totalorder %s33, 3
      %p89 = por %p87, %p88
      %p91 = scmp.ne.s32.totalorder %s76, %s90
      %p92 = scmp.eq.s32.totalorder %s33, 0
      %p93 = por %p91, %p92
      %s95 = sadd.s32 %s94, 1
      %p98 = scmp.eq.s32.totalorder %s27, 3
      %p99 = scmp.ne.s32.totalorder %s94, %s96
      %p100 = scmp.eq.s32.totalorder %s27, 0
      %p101 = por %p99, %p100
      %p102 = scmp.ne.s32.totalorder %s94, %s96
      %p103 = scmp.eq.s32.totalorder %s32, 3
      %p104 = por %p102, %p103
      %p105 = scmp.ne.s32.totalorder %s96, %s97
      %p106 = scmp.eq.s32.totalorder %s32, 0
      %p107 = por %p105, %p106
      %p108 = scmp.ne.s32.totalorder %s96, %s97
      %p109 = scmp.eq.s32.totalorder %s33, 3
      %p110 = por %p108, %p109
      %p112 = scmp.ne.s32.totalorder %s97, %s111
      %p113 = scmp.eq.s32.totalorder %s33, 0
      %p114 = por %p112, %p113
      %s116 = sadd.s32 %s115, 1
      %p119 = scmp.eq.s32.totalorder %s27, 3
      %p120 = scmp.ne.s32.totalorder %s115, %s117
      %p121 = scmp.eq.s32.totalorder %s27, 0
      %p122 = por %p120, %p121
      %p123 = scmp.ne.s32.totalorder %s115, %s117
      %p124 = scmp.eq.s32.totalorder %s32, 3
      %p125 = por %p123, %p124
      %p126 = scmp.ne.s32.totalorder %s117, %s118
      %p127 = scmp.eq.s32.totalorder %s32, 0
      %p128 = por %p126, %p127
      %p129 = scmp.ne.s32.totalorder %s117, %s118
      %p130 = scmp.eq.s32.totalorder %s33, 3
      %p131 = por %p129, %p130
      %p133 = scmp.ne.s32.totalorder %s118, %s132
      %p134 = scmp.eq.s32.totalorder %s33, 0
      %p135 = por %p133, %p134
      %s137 = sadd.s32 %s136, 1
      %p140 = scmp.eq.s32.totalorder %s27, 3
      %p141 = scmp.ne.s32.totalorder %s136, %s138
      %p142 = scmp.eq.s32.totalorder %s27, 0
      %p143 = por %p141, %p142
      %p144 = scmp.ne.s32.totalorder %s136, %s138
      %p145 = scmp.eq.s32.totalorder %s32, 3
      %p146 = por %p144, %p145
      %p147 = scmp.ne.s32.totalorder %s138, %s139
      %p148 = scmp.eq.s32.totalorder %s32, 0
      %p149 = por %p147, %p148
      %p150 = scmp.ne.s32.totalorder %s138, %s139
      %p151 = scmp.eq.s32.totalorder %s33, 3
      %p152 = por %p150, %p151
      %p154 = scmp.ne.s32.totalorder %s139, %s153
      %p155 = scmp.eq.s32.totalorder %s33, 0
      %p156 = por %p154, %p155
      %s158 = sadd.s32 %s157, 1
      %p161 = scmp.eq.s32.totalorder %s27, 3
      %p162 = scmp.ne.s32.totalorder %s157, %s159
      %p163 = scmp.eq.s32.totalorder %s27, 0
      %p164 = por %p162, %p163
      %p165 = scmp.ne.s32.totalorder %s157, %s159
      %p166 = scmp.eq.s32.totalorder %s32, 3
      %p167 = por %p165, %p166
      %p168 = scmp.ne.s32.totalorder %s159, %s160
      %p169 = scmp.eq.s32.totalorder %s32, 0
      %p170 = por %p168, %p169
      %p171 = scmp.ne.s32.totalorder %s159, %s160
      %p172 = scmp.eq.s32.totalorder %s33, 3
      %p173 = por %p171, %p172
      %p175 = scmp.ne.s32.totalorder %s160, %s174
      %p176 = scmp.eq.s32.totalorder %s33, 0
      %p177 = por %p175, %p176
      %s179 = sadd.s32 %s178, 1
      %p182 = scmp.eq.s32.totalorder %s27, 3
      %p183 = scmp.ne.s32.totalorder %s178, %s180
      %p184 = scmp.eq.s32.totalorder %s27, 0
      %p185 = por %p183, %p184
      %p186 = scmp.ne.s32.totalorder %s178, %s180
      %p187 = scmp.eq.s32.totalorder %s32, 3
      %p188 = por %p186, %p187
      %p189 = scmp.ne.s32.totalorder %s180, %s181
      %p190 = scmp.eq.s32.totalorder %s32, 0
      %p191 = por %p189, %p190
      %p192 = scmp.ne.s32.totalorder %s180, %s181
      %p193 = scmp.eq.s32.totalorder %s33, 3
      %p194 = por %p192, %p193
      %p196 = scmp.ne.s32.totalorder %s181, %s195
      %p197 = scmp.eq.s32.totalorder %s33, 0
      %p198 = por %p196, %p197
      %s200 = sadd.s32 %s199, 1
      %p203 = scmp.eq.s32.totalorder %s27, 3
      %p204 = scmp.ne.s32.totalorder %s199, %s201
      %p205 = scmp.eq.s32.totalorder %s27, 0
      %p206 = por %p204, %p205
      %p207 = scmp.ne.s32.totalorder %s199, %s201
      %p208 = scmp.eq.s32.totalorder %s32, 3
      %p209 = por %p207, %p208
      %p210 = scmp.ne.s32.totalorder %s201, %s202
      %p211 = scmp.eq.s32.totalorder %s32, 0
      %p212 = por %p210, %p211
      %p213 = scmp.ne.s32.totalorder %s201, %s202
      %p214 = scmp.eq.s32.totalorder %s33, 3
      %p215 = por %p213, %p214
      %p217 = scmp.ne.s32.totalorder %s202, %s216
      %p218 = scmp.eq.s32.totalorder %s33, 0
      %p219 = por %p217, %p218
      %s221 = sadd.s32 %s220, 1
      %p224 = scmp.eq.s32.totalorder %s27, 3
      %p225 = scmp.ne.s32.totalorder %s220, %s222
      %p226 = scmp.eq.s32.totalorder %s27, 0
      %p227 = por %p225, %p226
      %p228 = scmp.ne.s32.totalorder %s220, %s222
      %p229 = scmp.eq.s32.totalorder %s32, 3
      %p230 = por %p228, %p229
      %p231 = scmp.ne.s32.totalorder %s222, %s223
      %p232 = scmp.eq.s32.totalorder %s32, 0
      %p233 = por %p231, %p232
      %p234 = scmp.ne.s32.totalorder %s222, %s223
      %p235 = scmp.eq.s32.totalorder %s33, 3
      %p236 = por %p234, %p235
      %p238 = scmp.ne.s32.totalorder %s223, %s237
      %p239 = scmp.eq.s32.totalorder %s33, 0
      %p240 = por %p238, %p239
      %s242 = sadd.s32 %s241, 1
      %p245 = scmp.eq.s32.totalorder %s27, 3
      %p246 = scmp.ne.s32.totalorder %s241, %s243
      %p247 = scmp.eq.s32.totalorder %s27, 0
      %p248 = por %p246, %p247
      %p249 = scmp.ne.s32.totalorder %s241, %s243
      %p250 = scmp.eq.s32.totalorder %s32, 3
      %p251 = por %p249, %p250
      %p252 = scmp.ne.s32.totalorder %s243, %s244
      %p253 = scmp.eq.s32.totalorder %s32, 0
      %p254 = por %p252, %p253
      %p255 = scmp.ne.s32.totalorder %s243, %s244
      %p256 = scmp.eq.s32.totalorder %s33, 3
      %p257 = por %p255, %p256
      %p259 = scmp.ne.s32.totalorder %s244, %s258
      %p260 = scmp.eq.s32.totalorder %s33, 0
      %p261 = por %p259, %p260
      %s263 = sadd.s32 %s262, 1
      %p266 = scmp.eq.s32.totalorder %s27, 3
      %p267 = scmp.ne.s32.totalorder %s262, %s264
      %p268 = scmp.eq.s32.totalorder %s27, 0
      %p269 = por %p267, %p268
      %p270 = scmp.ne.s32.totalorder %s262, %s264
      %p271 = scmp.eq.s32.totalorder %s32, 3
      %p272 = por %p270, %p271
      %p273 = scmp.ne.s32.totalorder %s264, %s265
      %p274 = scmp.eq.s32.totalorder %s32, 0
      %p275 = por %p273, %p274
      %p276 = scmp.ne.s32.totalorder %s264, %s265
      %p277 = scmp.eq.s32.totalorder %s33, 3
      %p278 = por %p276, %p277
      %p280 = scmp.ne.s32.totalorder %s265, %s279
      %p281 = scmp.eq.s32.totalorder %s33, 0
      %p282 = por %p280, %p281
      %s284 = sadd.s32 %s283, 1
      %p287 = scmp.eq.s32.totalorder %s27, 3
      %p288 = scmp.ne.s32.totalorder %s283, %s285
      %p289 = scmp.eq.s32.totalorder %s27, 0
      %p290 = por %p288, %p289
      %p291 = scmp.ne.s32.totalorder %s283, %s285
      %p292 = scmp.eq.s32.totalorder %s32, 3
      %p293 = por %p291, %p292
      %p294 = scmp.ne.s32.totalorder %s285, %s286
      %p295 = scmp.eq.s32.totalorder %s32, 0
      %p296 = por %p294, %p295
      %p297 = scmp.ne.s32.totalorder %s285, %s286
      %p298 = scmp.eq.s32.totalorder %s33, 3
      %p299 = por %p297, %p298
      %p301 = scmp.ne.s32.totalorder %s286, %s300
      %p302 = scmp.eq.s32.totalorder %s33, 0
      %p303 = por %p301, %p302
      %s305 = sadd.s32 %s304, 1
      %p308 = scmp.eq.s32.totalorder %s27, 3
      %p309 = scmp.ne.s32.totalorder %s304, %s306
      %p310 = scmp.eq.s32.totalorder %s27, 0
      %p311 = por %p309, %p310
      %p312 = scmp.ne.s32.totalorder %s304, %s306
      %p313 = scmp.eq.s32.totalorder %s32, 3
      %p314 = por %p312, %p313
      %p315 = scmp.ne.s32.totalorder %s306, %s307
      %p316 = scmp.eq.s32.totalorder %s32, 0
      %p317 = por %p315, %p316
      %p318 = scmp.ne.s32.totalorder %s306, %s307
      %p319 = scmp.eq.s32.totalorder %s33, 3
      %p320 = por %p318, %p319
      %p322 = scmp.ne.s32.totalorder %s307, %s321
      %p323 = scmp.eq.s32.totalorder %s33, 0
      %p324 = por %p322, %p323
      %s326 = sadd.s32 %s325, 1
      %p329 = scmp.eq.s32.totalorder %s27, 3
      %p330 = scmp.ne.s32.totalorder %s325, %s327
      %p331 = scmp.eq.s32.totalorder %s27, 0
      %p332 = por %p330, %p331
      %p333 = scmp.ne.s32.totalorder %s325, %s327
      %p334 = scmp.eq.s32.totalorder %s32, 3
      %p335 = por %p333, %p334
      %p336 = scmp.ne.s32.totalorder %s327, %s328
      %p337 = scmp.eq.s32.totalorder %s32, 0
      %p338 = por %p336, %p337
      %p339 = scmp.ne.s32.totalorder %s327, %s328
      %p340 = scmp.eq.s32.totalorder %s33, 3
      %p341 = por %p339, %p340
      %p343 = scmp.ne.s32.totalorder %s328, %s342
      %p344 = scmp.eq.s32.totalorder %s33, 0
      %p345 = por %p343, %p344
      %s347 = sadd.s32 %s346, 1
      %p350 = scmp.eq.s32.totalorder %s27, 3
      %p351 = scmp.ne.s32.totalorder %s346, %s348
      %p352 = scmp.eq.s32.totalorder %s27, 0
      %p353 = por %p351, %p352
      %p354 = scmp.ne.s32.totalorder %s346, %s348
      %p355 = scmp.eq.s32.totalorder %s32, 3
      %p356 = por %p354, %p355
      %p357 = scmp.ne.s32.totalorder %s348, %s349
      %p358 = scmp.eq.s32.totalorder %s32, 0
      %p359 = por %p357, %p358
      %p360 = scmp.ne.s32.totalorder %s348, %s349
      %p361 = scmp.eq.s32.totalorder %s33, 3
      %p362 = por %p360, %p361
      %p364 = scmp.ne.s32.totalorder %s349, %s363
      %p365 = scmp.eq.s32.totalorder %s33, 0
      %p366 = por %p364, %p365
      %s367 = ssub.s32 %s34, %s46
      %s368 = ssub.s32 %s35, %s42
      %s369 = sor.u32 %s367, %s368
      %p370 = scmp.eq.s32.totalorder %s369, 0
      %s372 = sadd.s32 %s371, 1
      %s373 = scalar_select %p370, %s371, %s372
      %p376 = pneg %p370
      %p377 = scmp.eq.s32.totalorder %s27, 3
      %p378 = por %p376, %p377
      %p379 = scmp.ne.s32.totalorder %s371, %s374
      %p380 = scmp.eq.s32.totalorder %s27, 0
      %p381 = por %p379, %p380
      %p382 = scmp.ne.s32.totalorder %s371, %s374
      %p383 = scmp.eq.s32.totalorder %s32, 3
      %p384 = por %p382, %p383
      %p385 = scmp.ne.s32.totalorder %s374, %s375
      %p386 = scmp.eq.s32.totalorder %s32, 0
      %p387 = por %p385, %p386
      %p388 = scmp.ne.s32.totalorder %s374, %s375
      %p389 = scmp.eq.s32.totalorder %s33, 3
      %p390 = por %p388, %p389
      %p392 = scmp.ne.s32.totalorder %s375, %s391
      %p393 = scmp.eq.s32.totalorder %s33, 0
      %p394 = por %p392, %p393
      %p395 = scmp.le.s32.totalorder 1, %s27
      %p396 = scmp.lt.s32.totalorder %s27, 5
      %p397 = pnand %p395, %p396
      %p398 = pneg %p397
      // Predicated region
      $region9: #{tpu_custom_call.1} parent=5 // pred_check
        _
      $region10: #{tpu_custom_call.1} parent=5 // pred_check_branch
        %400 = sbr.rel (%p397) target = $region12
      $region11: #{tpu_custom_call.1} parent=5 // pred_region
        %s401 = ssub.s32 %s27, 1
        // Predicated region
        $region13: #{tpu_custom_call.1} parent=11 // pred_check
          %p402 = pneg %p86
        $region14: #{tpu_custom_call.1} parent=11 // pred_check_branch
          %404 = sbr.rel (%p402) target = $region16
        $region15: #{tpu_custom_call.1} parent=11 // pred_region
          %406 = vsyncadd [#allocation5], 0
          %s408 = sshll.u32 %s1, 4
          %s409 = int_to_ptr.hbm [resolvable:$true] %s408
          %s410 = sshll.u32 [#allocation4], 4
          %s411 = int_to_ptr.vmem [resolvable:$true] %s410
          %413 = dma.hbm_to_vmem [thread:$0]  %s409, 16, %s411, [#allocation5]
        $region16: #{tpu_custom_call.1} parent=11 // pred_fallthru
          _
        // Predicated region
        $region17: #{tpu_custom_call.1} parent=11 // pred_check
          %p414 = pneg %p107
        $region18: #{tpu_custom_call.1} parent=11 // pred_check_branch
          %416 = sbr.rel (%p414) target = $region20
        $region19: #{tpu_custom_call.1} parent=11 // pred_region
          _
        $region20: #{tpu_custom_call.1} parent=11 // pred_fallthru
          _
        // Predicated region
        $region21: #{tpu_custom_call.1} parent=11 // pred_check
          %p417 = pneg %p128
        $region22: #{tpu_custom_call.1} parent=11 // pred_check_branch
          %419 = sbr.rel (%p417) target = $region24
        $region23: #{tpu_custom_call.1} parent=11 // pred_region
          _
        $region24: #{tpu_custom_call.1} parent=11 // pred_fallthru
          _
        // Predicated region
        $region25: #{tpu_custom_call.1} parent=11 // pred_check
          %p420 = pneg %p149
        $region26: #{tpu_custom_call.1} parent=11 // pred_check_branch
          %422 = sbr.rel (%p420) target = $region28
        $region27: #{tpu_custom_call.1} parent=11 // pred_region
          _
        $region28: #{tpu_custom_call.1} parent=11 // pred_fallthru
          _
        // Predicated region
        $region29: #{tpu_custom_call.1} parent=11 // pred_check
          %p423 = pneg %p170
        $region30: #{tpu_custom_call.1} parent=11 // pred_check_branch
          %425 = sbr.rel (%p423) target = $region32
        $region31: #{tpu_custom_call.1} parent=11 // pred_region
          %427 = vsyncadd [#allocation8], 0
          %s428 = sshll.u32 %s5, 4
          %s429 = int_to_ptr.hbm [resolvable:$true] %s428
          %s430 = sshll.u32 [#allocation7], 4
          %s431 = int_to_ptr.vmem [resolvable:$true] %s430
          %436 = dma.hbm_to_vmem [thread:$0]  %s429, 256, %s431, [#allocation8], 64, 64, 4
        $region32: #{tpu_custom_call.1} parent=11 // pred_fallthru
          _
        // Predicated region
        $region33: #{tpu_custom_call.1} parent=11 // pred_check
          %p437 = pneg %p191
        $region34: #{tpu_custom_call.1} parent=11 // pred_check_branch
          %439 = sbr.rel (%p437) target = $region36
        $region35: #{tpu_custom_call.1} parent=11 // pred_region
          _
        $region36: #{tpu_custom_call.1} parent=11 // pred_fallthru
          _
        // Predicated region
        $region37: #{tpu_custom_call.1} parent=11 // pred_check
          %p440 = pneg %p212
        $region38: #{tpu_custom_call.1} parent=11 // pred_check_branch
          %442 = sbr.rel (%p440) target = $region40
        $region39: #{tpu_custom_call.1} parent=11 // pred_region
          %444 = vsyncadd [#allocation8], 0
          %s445 = sshll.u32 %s7, 4
          %s446 = int_to_ptr.hbm [resolvable:$true] %s445
          %s447 = sshll.u32 [#allocation9], 4
          %s448 = int_to_ptr.vmem [resolvable:$true] %s447
          %453 = dma.hbm_to_vmem [thread:$0]  %s446, 256, %s448, [#allocation8], 64, 64, 4
        $region40: #{tpu_custom_call.1} parent=11 // pred_fallthru
          _
        // Predicated region
        $region41: #{tpu_custom_call.1} parent=11 // pred_check
          %p454 = pneg %p233
        $region42: #{tpu_custom_call.1} parent=11 // pred_check_branch
          %456 = sbr.rel (%p454) target = $region44
        $region43: #{tpu_custom_call.1} parent=11 // pred_region
          _
        $region44: #{tpu_custom_call.1} parent=11 // pred_fallthru
          _
        // Predicated region
        $region45: #{tpu_custom_call.1} parent=11 // pred_check
          %p457 = pneg %p254
        $region46: #{tpu_custom_call.1} parent=11 // pred_check_branch
          %459 = sbr.rel (%p457) target = $region48
        $region47: #{tpu_custom_call.1} parent=11 // pred_region
          _
        $region48: #{tpu_custom_call.1} parent=11 // pred_fallthru
          _
        // Predicated region
        $region49: #{tpu_custom_call.1} parent=11 // pred_check
          %p460 = pneg %p275
        $region50: #{tpu_custom_call.1} parent=11 // pred_check_branch
          %462 = sbr.rel (%p460) target = $region52
        $region51: #{tpu_custom_call.1} parent=11 // pred_region
          _
        $region52: #{tpu_custom_call.1} parent=11 // pred_fallthru
          _
        // Predicated region
        $region53: #{tpu_custom_call.1} parent=11 // pred_check
          %p463 = pneg %p296
        $region54: #{tpu_custom_call.1} parent=11 // pred_check_branch
          %465 = sbr.rel (%p463) target = $region56
        $region55: #{tpu_custom_call.1} parent=11 // pred_region
          %467 = vsyncadd [#allocation11], 0
          %s468 = sshll.u32 %s11, 4
          %s469 = int_to_ptr.hbm [resolvable:$true] %s468
          %s470 = sshll.u32 [#allocation10], 4
          %s471 = int_to_ptr.vmem [resolvable:$true] %s470
          %476 = dma.hbm_to_vmem [thread:$0]  %s469, 256, %s471, [#allocation11], 64, 64, 4
        $region56: #{tpu_custom_call.1} parent=11 // pred_fallthru
          _
        // Predicated region
        $region57: #{tpu_custom_call.1} parent=11 // pred_check
          %p477 = pneg %p317
        $region58: #{tpu_custom_call.1} parent=11 // pred_check_branch
          %479 = sbr.rel (%p477) target = $region60
        $region59: #{tpu_custom_call.1} parent=11 // pred_region
          _
        $region60: #{tpu_custom_call.1} parent=11 // pred_fallthru
          _
        // Predicated region
        $region61: #{tpu_custom_call.1} parent=11 // pred_check
          %p480 = pneg %p338
        $region62: #{tpu_custom_call.1} parent=11 // pred_check_branch
          %482 = sbr.rel (%p480) target = $region64
        $region63: #{tpu_custom_call.1} parent=11 // pred_region
          _
        $region64: #{tpu_custom_call.1} parent=11 // pred_fallthru
          _
        // Predicated region
        $region65: #{tpu_custom_call.1} parent=11 // pred_check
          %p483 = pneg %p359
        $region66: #{tpu_custom_call.1} parent=11 // pred_check_branch
          %485 = sbr.rel (%p483) target = $region68
        $region67: #{tpu_custom_call.1} parent=11 // pred_region
          _
        $region68: #{tpu_custom_call.1} parent=11 // pred_fallthru
          _
      $region12: #{tpu_custom_call.1} parent=5 // pred_fallthru
        _
      %p486 = scmp.lt.s32.totalorder %s27, 4
      // Predicated region
      $region69: #{tpu_custom_call.1} parent=5 // pred_check
        %p487 = pneg %p486
      $region70: #{tpu_custom_call.1} parent=5 // pred_check_branch
        %489 = sbr.rel (%p487) target = $region72
      $region71: #{tpu_custom_call.1} parent=5 // pred_region
        // Predicated region
        $region73: #{tpu_custom_call.1} parent=71 // pred_check
          %p490 = pneg %p59
        $region74: #{tpu_custom_call.1} parent=71 // pred_check_branch
          %492 = sbr.rel (%p490) target = $region76
        $region75: #{tpu_custom_call.1} parent=71 // pred_region
          %p493 = scmp.lt.s32.totalorder %s34, 1
          %s494 = scalar_select %p493, %s34, 1
          %s495 = smul.addr %s494, 2
          %s496 = smul.addr %s495, 8
          %s497 = scalar_lea.vmem %s0, %s496
        $region76: #{tpu_custom_call.1} parent=71 // pred_fallthru
          _
      $region72: #{tpu_custom_call.1} parent=5 // pred_fallthru
        _
      %p498 = scmp.le.s32.totalorder 1, %s27
      %p499 = scmp.lt.s32.totalorder %s27, 5
      %p500 = pnand %p498, %p499
      %p501 = pneg %p500
      // Predicated region
      $region77: #{tpu_custom_call.1} parent=5 // pred_check
        _
      $region78: #{tpu_custom_call.1} parent=5 // pred_check_branch
        %503 = sbr.rel (%p500) target = $region80
      $region79: #{tpu_custom_call.1} parent=5 // pred_region
        %s504 = ssub.s32 %s27, 1
        // Predicated region
        $region81: #{tpu_custom_call.1} parent=79 // pred_check
          %p505 = pneg %p86
        $region82: #{tpu_custom_call.1} parent=79 // pred_check_branch
          %507 = sbr.rel (%p505) target = $region84
        $region83: #{tpu_custom_call.1} parent=79 // pred_region
          %509 = dma.done [#allocation5], 16
        $region84: #{tpu_custom_call.1} parent=79 // pred_fallthru
          _
        // Predicated region
        $region85: #{tpu_custom_call.1} parent=79 // pred_check
          %p510 = pneg %p170
        $region86: #{tpu_custom_call.1} parent=79 // pred_check_branch
          %512 = sbr.rel (%p510) target = $region88
        $region87: #{tpu_custom_call.1} parent=79 // pred_region
          %514 = dma.done [#allocation8], 256
        $region88: #{tpu_custom_call.1} parent=79 // pred_fallthru
          _
        // Predicated region
        $region89: #{tpu_custom_call.1} parent=79 // pred_check
          %p515 = pneg %p212
        $region90: #{tpu_custom_call.1} parent=79 // pred_check_branch
          %517 = sbr.rel (%p515) target = $region92
        $region91: #{tpu_custom_call.1} parent=79 // pred_region
          %519 = dma.done [#allocation8], 256
        $region92: #{tpu_custom_call.1} parent=79 // pred_fallthru
          _
        // Predicated region
        $region93: #{tpu_custom_call.1} parent=79 // pred_check
          %p520 = pneg %p296
        $region94: #{tpu_custom_call.1} parent=79 // pred_check_branch
          %522 = sbr.rel (%p520) target = $region96
        $region95: #{tpu_custom_call.1} parent=79 // pred_region
          %524 = dma.done [#allocation11], 256
        $region96: #{tpu_custom_call.1} parent=79 // pred_fallthru
          _
        %p525 = scmp.lt.s32.totalorder %s36, 1
        %s526 = scalar_select %p525, %s36, 1
        %s527 = smul.addr %s526, 2
        %s528 = smul.addr %s527, 8
        %s529 = scalar_lea.vmem %s0, %s528
        %p530 = pneg %p65
        %p531 = pneg %p62
        %p532 = pneg %p86
        %p533 = pneg %p83
        %p534 = pneg %p107
        %p535 = pneg %p104
        %p536 = pneg %p128
        %p537 = pneg %p125
        %p538 = pneg %p149
        %p539 = pneg %p146
        %p540 = pneg %p170
        %p541 = pneg %p167
        %p542 = pneg %p191
        %p543 = pneg %p188
        %p544 = pneg %p212
        %p545 = pneg %p209
        %p546 = pneg %p233
        %p547 = pneg %p230
        %p548 = pneg %p254
        %p549 = pneg %p251
        %p550 = pneg %p275
        %p551 = pneg %p272
        %p552 = pneg %p296
        %p553 = pneg %p293
        %p554 = pneg %p317
        %p555 = pneg %p314
        %p556 = pneg %p338
        %p557 = pneg %p335
        %p558 = pneg %p359
        %p559 = pneg %p356
        %p560 = pneg %p387
        %p561 = pneg %p384
        %s562 = sand.u32 %s374, 1
        %s563 = scalar_lea.sflag [#allocation6], %s562
        %s564 = sand.u32 %s374, 1
        %s565 = smul.addr %s564, 8
        %s566 = scalar_lea.vmem [#allocation12], %s565
        %p567 = scmp.lt.s32.totalorder %s36, 1
        %s568 = scalar_select %p567, %s36, 1
        %s569 = smul.addr %s568, 2
        %s570 = smul.addr %s569, 8
        %s571 = scalar_lea.vmem %s0, %s570
        %p573 = scmp.eq.s32.totalorder %s37, 0
        // Predicated region
        $region97: #{tpu_custom_call.1} parent=79 // pred_check
          %p574 = pneg %p573
        $region98: #{tpu_custom_call.1} parent=79 // pred_check_branch
          %576 = sbr.rel (%p574) target = $region100
        $region99: #{tpu_custom_call.1} parent=79 // pred_region
          %v577 = vld [vmem:[%s571] sm:$0xff]
          %v578 = vld [vmem:[%s571 + $0x8] sm:$0xff]
          %v579 = vld [vmem:[#allocation4] sm:$0x1]
          %v580 = vld [vmem:[%s2] sm:$0x1]
          %vm581 = vcmask 261120
          %v582 = vsel %vm581, %v577, 0.0
          %583 = vadd.xlane.f32.xlu0 %v582
          %v584 = vpop.xlane.xlu0 %583
          %v585 = vsel %vm581, %v578, 0.0
          %586 = vadd.xlane.f32.xlu0 %v585
          %v587 = vpop.xlane.xlu0 %586
          %v588 = vrcp.pop 32.0
          %v589 = vmul.f32 32.0, %v588
          %v590 = vsub.f32 1.0, %v589
          %v591 = vmul.f32 %v588, %v590
          %v592 = vadd.f32 %v588, %v591
          %vm593 = vweird.f32 %v588
          %v594 = vsel %vm593, %v588, %v592
          %v595 = vmul.f32 %v584, %v594
          %v596 = vmul.f32 %v587, %v594
          %v597 = vsub.f32 %v577, %v595
          %v598 = vsub.f32 %v578, %v596
          %v599 = vmul.f32 %v597, %v597
          %v600 = vmul.f32 %v598, %v598
          %v601 = vsel %vm581, %v599, 0.0
          %602 = vadd.xlane.f32.xlu0 %v601
          %v603 = vpop.xlane.xlu0 %602
          %v604 = vsel %vm581, %v600, 0.0
          %605 = vadd.xlane.f32.xlu0 %v604
          %v606 = vpop.xlane.xlu0 %605
          %v607 = vmul.f32 %v603, %v594
          %v608 = vmul.f32 %v606, %v594
          %v609 = vadd.f32 %v607, 1e-05
          %v610 = vadd.f32 %v608, 1e-05
          %v611 = vrsqrt.pop %v609
          %v612 = vmul.f32 %v611, %v609
          %v613 = vmul.f32 %v612, %v611
          %v614 = vmul.f32 0.5, %v613
          %v615 = vsub.f32 1.5, %v614
          %v616 = vmul.f32 %v611, %v615
          %vm617 = vweird.f32 %v609
          %vm618 = vweird.f32 %v611
          %vm619 = vmor %vm617, %vm618
          %v620 = vsel %vm619, %v611, %v616
          %v621 = vrsqrt.pop %v610
          %v622 = vmul.f32 %v621, %v610
          %v623 = vmul.f32 %v622, %v621
          %v624 = vmul.f32 0.5, %v623
          %v625 = vsub.f32 1.5, %v624
          %v626 = vmul.f32 %v621, %v625
          %vm627 = vweird.f32 %v610
          %vm628 = vweird.f32 %v621
          %vm629 = vmor %vm627, %vm628
          %v630 = vsel %vm629, %v621, %v626
          %v631 = vmul.f32 %v597, %v620
          %v632 = vmul.f32 %v598, %v630
          %v634 = vperm.slane %v579, 0
          %v636 = vmul.f32 %v631, %v634
          %v637 = vmul.f32 %v632, %v634
          %v639 = vperm.slane %v580, 0
          %v641 = vadd.f32 %v636, %v639
          %v642 = vadd.f32 %v637, %v639
          %v643 = vpack.c.bf16 %v641, %v641
          %v644 = vpack.c.bf16 %v642, %v642
          %vm645 = vcmask 257024
          %646 = vst.msk [vmem:[#allocation2] sm:$0xf] %vm645, %v643
          %647 = vst.msk [vmem:[#allocation2 + $0x4] sm:$0xf] %vm645, %v644
          %v648 = vld [vmem:[#allocation7] sm:$0xf]
          %v649 = vld [vmem:[#allocation7 + $0x4] sm:$0xf]
          %v650 = vld [vmem:[#allocation7 + $0x8] sm:$0xf]
          %v651 = vld [vmem:[#allocation7 + $0xc] sm:$0xf]
          %v652 = vld [vmem:[%s6] sm:$0x1]
          %v654 = vperm.slane %v652, 0
          %v658 = vunpack.c.l.b16 %v643
          %v659 = vunpack.c.l.b16 %v644
          %v660 = vpack.c.b16 %v659, %v658
          %v665 = vunpack.c.l.b16 %v648
          %v666 = vunpack.c.l.b16 %v649
          %v667 = vunpack.c.l.b16 %v650
          %v668 = vunpack.c.l.b16 %v651
          %v669 = vpack.c.b16 %v666, %v665
          %v670 = vpack.c.b16 %v668, %v667
          %v674 = vsel %vm581, %v660, 0
          %676 = vmatpush.bf16.msra.mxu0 0
          %677 = vmatpush.bf16.msra.mxu0 0
          %678 = vmatpush.bf16.msra.mxu0 0
          %679 = vmatpush.bf16.msra.mxu0 0
          %680 = vmatpush.bf16.msra.mxu0 0
          %681 = vmatpush.bf16.msra.mxu0 0
          %682 = vmatpush.bf16.msra.mxu0 %v670
          %683 = vmatpush.bf16.msra.mxu0 %v669
          %684 = vmatmul.bf16.gmra.mxu0 %v674
          %v685 = vpop.f32.mrf.mxu0
          %v686 = vadd.f32 %v654, %v685
          %v687 = vpop.f32.mrf.mxu0
          %v688 = vadd.f32 %v654, %v687
          %689 = vdwg.mxu0
          %v690 = vpack.c.bf16 %v686, %v686
          %v691 = vpack.c.bf16 %v688, %v688
          %vm692 = vcmask 519168
          %693 = vst.msk [vmem:[#allocation3] sm:$0xf] %vm692, %v690
          %694 = vst.msk [vmem:[#allocation3 + $0x4] sm:$0xf] %vm692, %v691
        $region100: #{tpu_custom_call.1} parent=79 // pred_fallthru
          _
        %s695 = smul.u32 %s37, 8
        %s696 = scalar_lea.vmem %s571, %s695
        %v697 = vld [vmem:[%s696] sm:$0xff]
        %s698 = sshra.s32 %s695, 3
        %s699 = sand.u32 %s695, 7
        %s700 = smul.addr %s698, 4
        %s701 = scalar_lea.vmem [#allocation2], %s700
        %v702 = vld [vmem:[%s701] sm:$0xf]
        %v703 = vld [vmem:[%s3] sm:$0xf]
        %v704 = vld [vmem:[%s3 + $0x4] sm:$0xf]
        %v705 = vld [vmem:[%s3 + $0x8] sm:$0xf]
        %v706 = vld [vmem:[%s3 + $0xc] sm:$0xf]
        %v707 = vld [vmem:[%s4] sm:$0x1]
        %v709 = vperm.slane %v707, 0
        %v715 = vunpack.c.l.b16 %v703
        %v716 = vunpack.c.l.b16 %v704
        %v717 = vunpack.c.l.b16 %v705
        %v718 = vunpack.c.l.b16 %v706
        %v719 = vpack.c.b16 %v716, %v715
        %v720 = vpack.c.b16 %v718, %v717
        %vm723 = vcmask 261120
        %v725 = vsel %vm723, %v702, 0
        %727 = vmatpush.bf16.msra.mxu0 0
        %728 = vmatpush.bf16.msra.mxu0 0
        %729 = vmatpush.bf16.msra.mxu0 0
        %730 = vmatpush.bf16.msra.mxu0 0
        %731 = vmatpush.bf16.msra.mxu0 0
        %732 = vmatpush.bf16.msra.mxu0 0
        %733 = vmatpush.bf16.msra.mxu0 %v720
        %734 = vmatpush.bf16.msra.mxu0 %v719
        %735 = vmatmul.bf16.gmra.mxu0 %v725
        %v736 = vpop.f32.mrf.mxu0
        %v737 = vadd.f32 %v709, %v736
        %v738 = vpop.f32.mrf.mxu0
        %739 = vdwg.mxu0
        %v740 = vmul.f32 %v737, 0.35355338
        %v741 = vpack.c.bf16 %v740, %v740
        %v742 = vld [vmem:[#allocation3] sm:$0xf]
        %v743 = vld [vmem:[#allocation3 + $0x4] sm:$0xf]
        %v746 = vunpack.c.l.b16 %v742
        %v747 = vunpack.c.l.b16 %v743
        %v748 = vpack.c.b16 %v747, %v746
        %vm749 = vcmask 64512
        %v751 = vsel %vm749, %v741, 0
        %v754 = vsel %vm749, %v748, 0
        %756 = vmatpush.bf16.xpose.msra.mxu0 0
        %757 = vmatpush.bf16.xpose.msra.mxu0 0
        %758 = vmatpush.bf16.xpose.msra.mxu0 0
        %759 = vmatpush.bf16.xpose.msra.mxu0 0
        %760 = vmatpush.bf16.xpose.msra.mxu0 0
        %761 = vmatpush.bf16.xpose.msra.mxu0 0
        %762 = vmatpush.bf16.xpose.msra.mxu0 0
        %763 = vmatpush.bf16.xpose.msra.mxu0 %v754
        %764 = vmatmul.bf16.gmra.mxu0 %v751
        %v765 = vpop.f32.mrf.mxu0
        %v766 = vadd.f32 0.0, %v765
        %v767 = vpop.f32.mrf.mxu0
        %768 = vdwg.mxu0
        %vm769 = vcmask 130048
        %v770 = vsel %vm769, %v766, -inf
        %771 = vmax.xlane.f32.xlu0 %v770
        %v772 = vpop.xlane.xlu0 %771
        %v773 = vsub.f32 %v766, %v772
        %v774 = vmul.f32 %v773, 1.442695
        %v775 = vpow.pop %v774
        %v776 = vsel %vm769, %v775, 0.0
        %777 = vadd.xlane.f32.xlu0 %v776
        %v778 = vpop.xlane.xlu0 %777
        %v779 = vpack.c.bf16 %v775, %v775
        %780 = vrot.lane.b32.xlu0 %v748, 96
        %v781 = vpop.permute.xlu0 %780
        %v784 = vsel %vm769, %v779, 0
        %786 = vmatpush.bf16.msra.mxu0 0
        %787 = vmatpush.bf16.msra.mxu0 0
        %788 = vmatpush.bf16.msra.mxu0 0
        %789 = vmatpush.bf16.msra.mxu0 0
        %790 = vmatpush.bf16.msra.mxu0 0
        %791 = vmatpush.bf16.msra.mxu0 0
        %792 = vmatpush.bf16.msra.mxu0 0
        %793 = vmatpush.bf16.msra.mxu0 %v781
        %794 = vmatmul.bf16.gmra.mxu0 %v784
        %v795 = vpop.f32.mrf.mxu0
        %v796 = vadd.f32 0.0, %v795
        %v797 = vpop.f32.mrf.mxu0
        %798 = vdwg.mxu0
        %v799 = vrcp.pop %v778
        %v800 = vmul.f32 %v796, %v799
        %v801 = vpack.c.bf16 %v800, %v800
        %v803 = vunpack.c.l.b16 %v741
        %v804 = vpack.c.b16 %v803, %v803
        %805 = vrot.lane.b32.xlu0 %v804, 120
        %v806 = vpop.permute.xlu0 %805
        %807 = vrot.lane.b32.xlu0 %v748, 120
        %v808 = vpop.permute.xlu0 %807
        %v810 = vsel %vm749, %v806, 0
        %v813 = vsel %vm749, %v808, 0
        %815 = vmatpush.bf16.xpose.msra.mxu0 0
        %816 = vmatpush.bf16.xpose.msra.mxu0 0
        %817 = vmatpush.bf16.xpose.msra.mxu0 0
        %818 = vmatpush.bf16.xpose.msra.mxu0 0
        %819 = vmatpush.bf16.xpose.msra.mxu0 0
        %820 = vmatpush.bf16.xpose.msra.mxu0 0
        %821 = vmatpush.bf16.xpose.msra.mxu0 0
        %822 = vmatpush.bf16.xpose.msra.mxu0 %v813
        %823 = vmatmul.bf16.gmra.mxu0 %v810
        %v824 = vpop.f32.mrf.mxu0
        %v825 = vadd.f32 0.0, %v824
        %v826 = vpop.f32.mrf.mxu0
        %827 = vdwg.mxu0
        %v828 = vsel %vm769, %v825, -inf
        %829 = vmax.xlane.f32.xlu0 %v828
        %v830 = vpop.xlane.xlu0 %829
        %v831 = vsub.f32 %v825, %v830
        %v832 = vmul.f32 %v831, 1.442695
        %v833 = vpow.pop %v832
        %v834 = vsel %vm769, %v833, 0.0
        %835 = vadd.xlane.f32.xlu0 %v834
        %v836 = vpop.xlane.xlu0 %835
        %v837 = vpack.c.bf16 %v833, %v833
        %838 = vrot.lane.b32.xlu0 %v748, 88
        %v839 = vpop.permute.xlu0 %838
        %v842 = vsel %vm769, %v837, 0
        %844 = vmatpush.bf16.msra.mxu0 0
        %845 = vmatpush.bf16.msra.mxu0 0
        %846 = vmatpush.bf16.msra.mxu0 0
        %847 = vmatpush.bf16.msra.mxu0 0
        %848 = vmatpush.bf16.msra.mxu0 0
        %849 = vmatpush.bf16.msra.mxu0 0
        %850 = vmatpush.bf16.msra.mxu0 0
        %851 = vmatpush.bf16.msra.mxu0 %v839
        %852 = vmatmul.bf16.gmra.mxu0 %v842
        %v853 = vpop.f32.mrf.mxu0
        %v854 = vadd.f32 0.0, %v853
        %v855 = vpop.f32.mrf.mxu0
        %856 = vdwg.mxu0
        %v857 = vrcp.pop %v836
        %v858 = vmul.f32 %v854, %v857
        %v859 = vpack.c.bf16 %v858, %v858
        %860 = vrot.lane.b32.xlu0 %v804, 112
        %v861 = vpop.permute.xlu0 %860
        %862 = vrot.lane.b32.xlu0 %v748, 112
        %v863 = vpop.permute.xlu0 %862
        %v865 = vsel %vm749, %v861, 0
        %v868 = vsel %vm749, %v863, 0
        %870 = vmatpush.bf16.xpose.msra.mxu0 0
        %871 = vmatpush.bf16.xpose.msra.mxu0 0
        %872 = vmatpush.bf16.xpose.msra.mxu0 0
        %873 = vmatpush.bf16.xpose.msra.mxu0 0
        %874 = vmatpush.bf16.xpose.msra.mxu0 0
        %875 = vmatpush.bf16.xpose.msra.mxu0 0
        %876 = vmatpush.bf16.xpose.msra.mxu0 0
        %877 = vmatpush.bf16.xpose.msra.mxu0 %v868
        %878 = vmatmul.bf16.gmra.mxu0 %v865
        %v879 = vpop.f32.mrf.mxu0
        %v880 = vadd.f32 0.0, %v879
        %v881 = vpop.f32.mrf.mxu0
        %882 = vdwg.mxu0
        %v883 = vsel %vm769, %v880, -inf
        %884 = vmax.xlane.f32.xlu0 %v883
        %v885 = vpop.xlane.xlu0 %884
        %v886 = vsub.f32 %v880, %v885
        %v887 = vmul.f32 %v886, 1.442695
        %v888 = vpow.pop %v887
        %v889 = vsel %vm769, %v888, 0.0
        %890 = vadd.xlane.f32.xlu0 %v889
        %v891 = vpop.xlane.xlu0 %890
        %v892 = vpack.c.bf16 %v888, %v888
        %893 = vrot.lane.b32.xlu0 %v748, 80
        %v894 = vpop.permute.xlu0 %893
        %v897 = vsel %vm769, %v892, 0
        %899 = vmatpush.bf16.msra.mxu0 0
        %900 = vmatpush.bf16.msra.mxu0 0
        %901 = vmatpush.bf16.msra.mxu0 0
        %902 = vmatpush.bf16.msra.mxu0 0
        %903 = vmatpush.bf16.msra.mxu0 0
        %904 = vmatpush.bf16.msra.mxu0 0
        %905 = vmatpush.bf16.msra.mxu0 0
        %906 = vmatpush.bf16.msra.mxu0 %v894
        %907 = vmatmul.bf16.gmra.mxu0 %v897
        %v908 = vpop.f32.mrf.mxu0
        %v909 = vadd.f32 0.0, %v908
        %v910 = vpop.f32.mrf.mxu0
        %911 = vdwg.mxu0
        %v912 = vrcp.pop %v891
        %v913 = vmul.f32 %v909, %v912
        %v914 = vpack.c.bf16 %v913, %v913
        %915 = vrot.lane.b32.xlu0 %v804, 104
        %v916 = vpop.permute.xlu0 %915
        %917 = vrot.lane.b32.xlu0 %v748, 104
        %v918 = vpop.permute.xlu0 %917
        %v920 = vsel %vm749, %v916, 0
        %v923 = vsel %vm749, %v918, 0
        %925 = vmatpush.bf16.xpose.msra.mxu0 0
        %926 = vmatpush.bf16.xpose.msra.mxu0 0
        %927 = vmatpush.bf16.xpose.msra.mxu0 0
        %928 = vmatpush.bf16.xpose.msra.mxu0 0
        %929 = vmatpush.bf16.xpose.msra.mxu0 0
        %930 = vmatpush.bf16.xpose.msra.mxu0 0
        %931 = vmatpush.bf16.xpose.msra.mxu0 0
        %932 = vmatpush.bf16.xpose.msra.mxu0 %v923
        %933 = vmatmul.bf16.gmra.mxu0 %v920
        %v934 = vpop.f32.mrf.mxu0
        %v935 = vadd.f32 0.0, %v934
        %v936 = vpop.f32.mrf.mxu0
        %937 = vdwg.mxu0
        %v938 = vsel %vm769, %v935, -inf
        %939 = vmax.xlane.f32.xlu0 %v938
        %v940 = vpop.xlane.xlu0 %939
        %v941 = vsub.f32 %v935, %v940
        %v942 = vmul.f32 %v941, 1.442695
        %v943 = vpow.pop %v942
        %v944 = vsel %vm769, %v943, 0.0
        %945 = vadd.xlane.f32.xlu0 %v944
        %v946 = vpop.xlane.xlu0 %945
        %v947 = vpack.c.bf16 %v943, %v943
        %948 = vrot.lane.b32.xlu0 %v748, 72
        %v949 = vpop.permute.xlu0 %948
        %v952 = vsel %vm769, %v947, 0
        %954 = vmatpush.bf16.msra.mxu0 0
        %955 = vmatpush.bf16.msra.mxu0 0
        %956 = vmatpush.bf16.msra.mxu0 0
        %957 = vmatpush.bf16.msra.mxu0 0
        %958 = vmatpush.bf16.msra.mxu0 0
        %959 = vmatpush.bf16.msra.mxu0 0
        %960 = vmatpush.bf16.msra.mxu0 0
        %961 = vmatpush.bf16.msra.mxu0 %v949
        %962 = vmatmul.bf16.gmra.mxu0 %v952
        %v963 = vpop.f32.mrf.mxu0
        %v964 = vadd.f32 0.0, %v963
        %v965 = vpop.f32.mrf.mxu0
        %966 = vdwg.mxu0
        %v967 = vrcp.pop %v946
        %v968 = vmul.f32 %v964, %v967
        %v969 = vpack.c.bf16 %v968, %v968
        %v971 = vunpack.c.l.b16 %v859
        %v972 = vpack.c.b16 %v971, %v971
        %973 = vrot.lane.b32.xlu0 %v972, 8
        %v974 = vpop.permute.xlu0 %973
        %v976 = vunpack.c.l.b16 %v914
        %v977 = vpack.c.b16 %v976, %v976
        %978 = vrot.lane.b32.xlu0 %v977, 16
        %v979 = vpop.permute.xlu0 %978
        %v981 = vunpack.c.l.b16 %v969
        %v982 = vpack.c.b16 %v981, %v981
        %983 = vrot.lane.b32.xlu0 %v982, 24
        %v984 = vpop.permute.xlu0 %983
        %v987 = vsel %vm749, %v801, %v974
        %v989 = vsel %vm769, %v987, %v979
        %vm990 = vcmask 195584
        %v992 = vsel %vm990, %v989, %v984
        %v993 = vld [vmem:[#allocation9] sm:$0xf]
        %v994 = vld [vmem:[#allocation9 + $0x4] sm:$0xf]
        %v995 = vld [vmem:[#allocation9 + $0x8] sm:$0xf]
        %v996 = vld [vmem:[#allocation9 + $0xc] sm:$0xf]
        %v997 = vld [vmem:[%s8] sm:$0x1]
        %v999 = vperm.slane %v997, 0
        %v1005 = vunpack.c.l.b16 %v993
        %v1006 = vunpack.c.l.b16 %v994
        %v1007 = vunpack.c.l.b16 %v995
        %v1008 = vunpack.c.l.b16 %v996
        %v1009 = vpack.c.b16 %v1006, %v1005
        %v1010 = vpack.c.b16 %v1008, %v1007
        %v1013 = vsel %vm723, %v992, 0
        %1015 = vmatpush.bf16.msra.mxu0 0
        %1016 = vmatpush.bf16.msra.mxu0 0
        %1017 = vmatpush.bf16.msra.mxu0 0
        %1018 = vmatpush.bf16.msra.mxu0 0
        %1019 = vmatpush.bf16.msra.mxu0 0
        %1020 = vmatpush.bf16.msra.mxu0 0
        %1021 = vmatpush.bf16.msra.mxu0 %v1010
        %1022 = vmatpush.bf16.msra.mxu0 %v1009
        %1023 = vmatmul.bf16.gmra.mxu0 %v1013
        %v1024 = vpop.f32.mrf.mxu0
        %v1025 = vadd.f32 %v999, %v1024
        %v1026 = vpop.f32.mrf.mxu0
        %1027 = vdwg.mxu0
        %v1028 = vadd.f32 %v1025, %v697
        %v1029 = vld [vmem:[%s9] sm:$0x1]
        %v1030 = vld [vmem:[%s10] sm:$0x1]
        %v1031 = vsel %vm723, %v1028, 0.0
        %1032 = vadd.xlane.f32.xlu0 %v1031
        %v1033 = vpop.xlane.xlu0 %1032
        %v1034 = vrcp.pop 32.0
        %v1035 = vmul.f32 32.0, %v1034
        %v1036 = vsub.f32 1.0, %v1035
        %v1037 = vmul.f32 %v1034, %v1036
        %v1038 = vadd.f32 %v1034, %v1037
        %vm1039 = vweird.f32 %v1034
        %v1040 = vsel %vm1039, %v1034, %v1038
        %v1041 = vmul.f32 %v1033, %v1040
        %v1042 = vsub.f32 %v1028, %v1041
        %v1043 = vmul.f32 %v1042, %v1042
        %v1044 = vsel %vm723, %v1043, 0.0
        %1045 = vadd.xlane.f32.xlu0 %v1044
        %v1046 = vpop.xlane.xlu0 %1045
        %v1047 = vmul.f32 %v1046, %v1040
        %v1048 = vadd.f32 %v1047, 1e-05
        %v1049 = vrsqrt.pop %v1048
        %v1050 = vmul.f32 %v1049, %v1048
        %v1051 = vmul.f32 %v1050, %v1049
        %v1052 = vmul.f32 0.5, %v1051
        %v1053 = vsub.f32 1.5, %v1052
        %v1054 = vmul.f32 %v1049, %v1053
        %vm1055 = vweird.f32 %v1048
        %vm1056 = vweird.f32 %v1049
        %vm1057 = vmor %vm1055, %vm1056
        %v1058 = vsel %vm1057, %v1049, %v1054
        %v1059 = vmul.f32 %v1042, %v1058
        %v1061 = vperm.slane %v1029, 0
        %v1063 = vmul.f32 %v1059, %v1061
        %v1065 = vperm.slane %v1030, 0
        %v1067 = vadd.f32 %v1063, %v1065
        %v1068 = vpack.c.bf16 %v1067, %v1067
        %v1069 = vld [vmem:[#allocation10] sm:$0xf]
        %v1070 = vld [vmem:[#allocation10 + $0x4] sm:$0xf]
        %v1071 = vld [vmem:[#allocation10 + $0x8] sm:$0xf]
        %v1072 = vld [vmem:[#allocation10 + $0xc] sm:$0xf]
        %v1073 = vld [vmem:[%s12] sm:$0x1]
        %v1075 = vperm.slane %v1073, 0
        %v1081 = vunpack.c.l.b16 %v1069
        %v1082 = vunpack.c.l.b16 %v1070
        %v1083 = vunpack.c.l.b16 %v1071
        %v1084 = vunpack.c.l.b16 %v1072
        %v1085 = vpack.c.b16 %v1082, %v1081
        %v1086 = vpack.c.b16 %v1084, %v1083
        %v1090 = vsel %vm723, %v1068, 0
        %1092 = vmatpush.bf16.msra.mxu0 0
        %1093 = vmatpush.bf16.msra.mxu0 0
        %1094 = vmatpush.bf16.msra.mxu0 0
        %1095 = vmatpush.bf16.msra.mxu0 0
        %1096 = vmatpush.bf16.msra.mxu0 0
        %1097 = vmatpush.bf16.msra.mxu0 0
        %1098 = vmatpush.bf16.msra.mxu0 %v1086
        %1099 = vmatpush.bf16.msra.mxu0 %v1085
        %1100 = vmatmul.bf16.gmra.mxu0 %v1090
        %v1101 = vpop.f32.mrf.mxu0
        %v1102 = vadd.f32 %v1075, %v1101
        %v1103 = vpop.f32.mrf.mxu0
        %1104 = vdwg.mxu0
        %v1105 = vmul.f32 %v1102, 0.5
        %v1106 = vmul.f32 %v1102, 0.70710677
        %v1107 = vmul.f32 %v1106, %v1106
        %v1108 = vmin.f32 16.0, %v1107
        %v1109 = vmul.f32 %v1108, 2.1237322e-06
        %v1110 = vadd.f32 %v1109, 0.00028619796
        %v1111 = vmul.f32 %v1108, %v1110
        %v1112 = vadd.f32 %v1111, 0.0036580483
        %v1113 = vmul.f32 %v1108, %v1112
        %v1114 = vadd.f32 %v1113, 0.05243302
        %v1115 = vmul.f32 %v1108, %v1114
        %v1116 = vadd.f32 %v1115, 0.18741608
        %v1117 = vmul.f32 %v1108, %v1116
        %v1118 = vadd.f32 %v1117, 1.1283791
        %v1119 = vmul.f32 %v1106, %v1118
        %v1120 = vmul.f32 %v1108, 3.8918573e-05
        %v1121 = vadd.f32 %v1120, 0.001143296
        %v1122 = vmul.f32 %v1108, %v1121
        %v1123 = vadd.f32 %v1122, 0.014752088
        %v1124 = vmul.f32 %v1108, %v1123
        %v1125 = vadd.f32 %v1124, 0.112945676
        %v1126 = vmul.f32 %v1108, %v1125
        %v1127 = vadd.f32 %v1126, 0.4994258
        %v1128 = vmul.f32 %v1108, %v1127
        %v1129 = vadd.f32 %v1128, 1.0
        %v1130 = vrcp.pop %v1129
        %v1131 = vmul.f32 %v1129, %v1130
        %v1132 = vsub.f32 1.0, %v1131
        %v1133 = vmul.f32 %v1130, %v1132
        %v1134 = vadd.f32 %v1130, %v1133
        %vm1135 = vweird.f32 %v1129
        %vm1136 = vweird.f32 %v1130
        %vm1137 = vmor %vm1135, %vm1136
        %v1138 = vsel %vm1137, %v1130, %v1134
        %v1139 = vand.u32 2147483647, %v1129
        %vm1140 = vcmp.eq.f32.partialorder %v1139, 8.507059e+37
        %v1141 = vand.u32 %v1129, 2147483648
        %v1142 = vor.u32 1.1754944e-38, %v1141
        %v1143 = vsel %vm1140, %v1142, %v1138
        %v1144 = vmul.f32 %v1119, %v1143
        %v1145 = vmin.f32 %v1144, 1.0
        %v1146 = vmax.f32 %v1145, -1.0
        %v1147 = vadd.f32 %v1146, 1.0
        %v1148 = vmul.f32 %v1105, %v1147
        %v1149 = vpack.c.bf16 %v1148, %v1148
        %v1150 = vld [vmem:[%s13] sm:$0xf]
        %v1151 = vld [vmem:[%s13 + $0x4] sm:$0xf]
        %v1152 = vld [vmem:[%s13 + $0x8] sm:$0xf]
        %v1153 = vld [vmem:[%s13 + $0xc] sm:$0xf]
        %v1154 = vld [vmem:[%s13 + $0x10] sm:$0xf]
        %v1155 = vld [vmem:[%s13 + $0x14] sm:$0xf]
        %v1156 = vld [vmem:[%s13 + $0x18] sm:$0xf]
        %v1157 = vld [vmem:[%s13 + $0x1c] sm:$0xf]
        %v1158 = vld [vmem:[%s14] sm:$0x1]
        %v1160 = vperm.slane %v1158, 0
        %v1170 = vunpack.c.l.b16 %v1150
        %v1171 = vunpack.c.l.b16 %v1151
        %v1172 = vunpack.c.l.b16 %v1152
        %v1173 = vunpack.c.l.b16 %v1153
        %v1174 = vunpack.c.l.b16 %v1154
        %v1175 = vunpack.c.l.b16 %v1155
        %v1176 = vunpack.c.l.b16 %v1156
        %v1177 = vunpack.c.l.b16 %v1157
        %v1178 = vpack.c.b16 %v1171, %v1170
        %v1179 = vpack.c.b16 %v1173, %v1172
        %v1180 = vpack.c.b16 %v1175, %v1174
        %v1181 = vpack.c.b16 %v1177, %v1176
        %vm1186 = vcmask 523264
        %v1188 = vsel %vm1186, %v1149, 0
        %1190 = vmatpush.bf16.msra.mxu0 0
        %1191 = vmatpush.bf16.msra.mxu0 0
        %1192 = vmatpush.bf16.msra.mxu0 0
        %1193 = vmatpush.bf16.msra.mxu0 0
        %1194 = vmatpush.bf16.msra.mxu0 %v1181
        %1195 = vmatpush.bf16.msra.mxu0 %v1180
        %1196 = vmatpush.bf16.msra.mxu0 %v1179
        %1197 = vmatpush.bf16.msra.mxu0 %v1178
        %1198 = vmatmul.bf16.gmra.mxu0 %v1188
        %v1199 = vpop.f32.mrf.mxu0
        %v1200 = vadd.f32 %v1160, %v1199
        %v1201 = vpop.f32.mrf.mxu0
        %1202 = vdwg.mxu0
        %v1203 = vadd.f32 %v1200, %v1028
        %1204 = vst.msk [vmem:[%s566] sm:$0xff] %vm723, %v1203
        %s1205 = sand.u32 %s374, 1
        %s1206 = scalar_lea.sflag [#allocation6], %s1205
        %s1207 = sand.u32 %s374, 1
        %s1208 = smul.addr %s1207, 8
        %s1209 = scalar_lea.vmem [#allocation12], %s1208
        // Predicated region
        $region101: #{tpu_custom_call.1} parent=79 // pred_check
          %p1210 = pneg %p384
        $region102: #{tpu_custom_call.1} parent=79 // pred_check_branch
          %1212 = sbr.rel (%p1210) target = $region104
        $region103: #{tpu_custom_call.1} parent=79 // pred_region
          %1214 = vsyncadd %s1206, 0
          %s1215 = smul.addr %s36, 2
          %s1216 = sadd.s32 %s37, %s1215
          %s1217 = smul.addr %s1216, 8
          %s1218 = scalar_lea.hbm %s15, %s1217
          %s1220 = sshll.u32 %s1209, 4
          %s1221 = int_to_ptr.vmem [resolvable:$true] %s1220
          %s1222 = sshll.u32 %s1218, 4
          %s1223 = int_to_ptr.hbm [resolvable:$true] %s1222
          %1225 = dma.vmem_to_hbm [thread:$0]  %s1221, 128, %s1223, %s1206
        $region104: #{tpu_custom_call.1} parent=79 // pred_fallthru
          _
      $region80: #{tpu_custom_call.1} parent=5 // pred_fallthru
        _
      %p1226 = scmp.le.s32.totalorder 2, %s27
      // Predicated region
      $region105: #{tpu_custom_call.1} parent=5 // pred_check
        %p1227 = pneg %p1226
      $region106: #{tpu_custom_call.1} parent=5 // pred_check_branch
        %1229 = sbr.rel (%p1227) target = $region108
      $region107: #{tpu_custom_call.1} parent=5 // pred_region
        %s1230 = ssub.s32 %s27, 2
        // Predicated region
        $region109: #{tpu_custom_call.1} parent=107 // pred_check
          %p1231 = pneg %p390
        $region110: #{tpu_custom_call.1} parent=107 // pred_check_branch
          %1233 = sbr.rel (%p1231) target = $region112
        $region111: #{tpu_custom_call.1} parent=107 // pred_region
          %s1234 = sand.u32 %s375, 1
          %s1235 = scalar_lea.sflag [#allocation6], %s1234
          %s1236 = sand.u32 %s375, 1
          %s1237 = smul.addr %s1236, 8
          %s1238 = scalar_lea.vmem [#allocation12], %s1237
          %1240 = dma.done %s1235, 128
        $region112: #{tpu_custom_call.1} parent=107 // pred_fallthru
          _
      $region108: #{tpu_custom_call.1} parent=5 // pred_fallthru
        _
    $region6: #{tpu_custom_call.1} parent=1 // loop_footer
      %s31 = sadd.s32 1, %s27
    $region7: #{tpu_custom_call.1} parent=1 // loop_footer_branch
      %26 = sbr.rel target = $region3
    $region8: #{tpu_custom_call.1} parent=1 // loop_exit
      _
    %1241 = vsyncpa [#allocation5], 1
    %s1242 = scalar_lea.sflag [#allocation5], 1
    %1243 = vsyncpa %s1242, 1
    %1244 = vsyncpa [#allocation8], 1
    %1245 = vsyncpa [#allocation11], 1
    %1246 = vsyncpa [#allocation6], 1
    %s1247 = scalar_lea.sflag [#allocation6], 1
    %1248 = vsyncpa %s1247, 1

</llo_original>
